<compile_context>
chip_gen: v6e
topology: v6e:2x2x1
jax: 0.10.0
libtpu: 0.0.40
codegen_flags: <defaults>
</compile_context>

<pallas_src>
import math

import jax
import jax.numpy as jnp
from jax import lax
from jax.experimental import pallas as pl
from jax.experimental.pallas import tpu as pltpu

D_H1 = 1024   # fc1 out
D_H2 = 2048   # fc2 out
TN   = 1024   # tile along fc2's output (= fc3's reduction) dimension

_INV_SQRT2 = 0.7071067811865476


def _gelu_exact(x):
    # torch.nn.GELU() default is the exact erf formulation.
    return 0.5 * x * (1.0 + lax.erf(x * _INV_SQRT2))


def critic_kernel(x_ref, w1_ref, b1_ref, w2_ref, w3_ref, b3_ref,
                  out_ref, h1_ref, acc_ref):
    t = pl.program_id(0)

    # First grid step: h1 = gelu(x @ W1 + b1) computed once, kept resident in
    # VMEM as bf16; zero the fc3 accumulator.
    @pl.when(t == 0)
    def _():
        h = jnp.dot(x_ref[...].astype(jnp.bfloat16), w1_ref[...],
                    preferred_element_type=jnp.float32)
        h = h + b1_ref[...]
        h1_ref[...] = _gelu_exact(h).astype(jnp.bfloat16)
        acc_ref[...] = jnp.zeros_like(acc_ref)

    # Every step: one TN-wide slab of fc2 (bf16 MXU, f32 accumulate), reduced
    # immediately against the matching lane-contiguous slab of W3 on the XLU.
    h2_tile = jnp.dot(h1_ref[...], w2_ref[...],
                      preferred_element_type=jnp.float32)
    acc_ref[...] += jnp.sum(h2_tile * w3_ref[...], axis=-1, keepdims=True)

    # Last grid step: add the folded bias (b3 + b2 @ W3) and emit the value.
    @pl.when(t == pl.num_programs(0) - 1)
    def _():
        out_ref[...] = (acc_ref[...] + b3_ref[...]).astype(out_ref.dtype)


def _critic_pallas(x, w1_bf, b1, w2_bf, w3_row, b3_eff):
    B, D_in = x.shape
    n_tiles = D_H2 // TN
    return pl.pallas_call(
        critic_kernel,
        out_shape=jax.ShapeDtypeStruct((B, 1), x.dtype),
        grid_spec=pltpu.PrefetchScalarGridSpec(
            num_scalar_prefetch=0,
            grid=(n_tiles,),
            in_specs=[
                pl.BlockSpec((B, D_in),    lambda t: (0, 0)),  # x
                pl.BlockSpec((D_in, D_H1), lambda t: (0, 0)),  # W1 (bf16)
                pl.BlockSpec((1, D_H1),    lambda t: (0, 0)),  # b1
                pl.BlockSpec((D_H1, TN),   lambda t: (0, t)),  # W2 slab (bf16)
                pl.BlockSpec((1, TN),      lambda t: (0, t)),  # W3 row slab
                pl.BlockSpec((1, 1),       lambda t: (0, 0)),  # folded fc3 bias
            ],
            out_specs=pl.BlockSpec((B, 1), lambda t: (0, 0)),  # value
            scratch_shapes=[
                pltpu.VMEM((B, D_H1), jnp.bfloat16),  # resident gelu(fc1)
                pltpu.VMEM((B, 1), jnp.float32),      # fc3 accumulator
            ],
        ),
        compiler_params=pltpu.CompilerParams(
            dimension_semantics=("arbitrary",),
        ),
    )(x, w1_bf, b1, w2_bf, w3_row, b3_eff)


@jax.jit
def critic_forward(x, w1, b1, w2, b2, w3, b3):
    B, _ = x.shape

    # Weight preprocessing (fused into the surrounding jit, negligible cost).
    w1_bf = w1.astype(jnp.bfloat16)
    w2_bf = w2.astype(jnp.bfloat16)
    w3_row = w3.reshape(1, D_H2)                 # lane-contiguous row for XLU
    b3_eff = (b3 + b2 @ w3).reshape(1, 1)        # fold fc2 bias through fc3

    # Pad batch to a sublane multiple so any B works cleanly.
    B_pad = max(8, ((B + 7) // 8) * 8)
    x_in = x if B_pad == B else jnp.pad(x, ((0, B_pad - B), (0, 0)))

    out = _critic_pallas(x_in, w1_bf, b1, w2_bf, w3_row, b3_eff)
    return out[:B]


def init_critic_params(key, input_size, dtype=jnp.float32):
    """Deterministic synthetic init mimicking nn.Linear's U(-1/sqrt(fan_in), .).

    Weights are stored transposed vs. torch.nn.Linear: W has shape
    (in_features, out_features) so the forward computes x @ W + b.
    """
    ks = jax.random.split(key, 6)

    def linear(kw, kb, fan_in, fan_out):
        bound = 1.0 / math.sqrt(fan_in)
        w = jax.random.uniform(kw, (fan_in, fan_out), dtype, -bound, bound)
        b = jax.random.uniform(kb, (1, fan_out), dtype, -bound, bound)
        return w, b

    w1, b1 = linear(ks[0], ks[1], input_size, D_H1)
    w2, b2 = linear(ks[2], ks[3], D_H1, D_H2)
    w3, b3 = linear(ks[4], ks[5], D_H2, 1)
    return w1, b1, w2, b2, w3, b3


def critic_reference(x, w1, b1, w2, b2, w3, b3):
    # Full-f32 reference (the kernel uses bf16 weights, so compare with a
    # relaxed tolerance).
    h = jax.nn.gelu(x @ w1 + b1, approximate=False)
    h = h @ w2 + b2
    return h @ w3 + b3


if __name__ == "__main__":
    key = jax.random.PRNGKey(0)
    k_x, k_p = jax.random.split(key)

    # NOTE: at B=8 the kernel is purely HBM-bound on the weight read; callers
    # that evaluate many states should batch B up per call to amortize the W2
    # traffic (the kernel handles any B via wrapper-side padding).
    B, input_size = 8, 32
    x = jax.random.normal(k_x, (B, input_size), jnp.float32)
    params = init_critic_params(k_p, input_size)

    value = critic_forward(x, *params)
    value = jax.block_until_ready(value)

    ref = critic_reference(x, *params)
    assert value.shape == (B, 1), value.shape
    # bf16 weight storage changes numerics slightly -> relaxed tolerance.
    assert jnp.allclose(value, ref, atol=2e-2, rtol=2e-2), (
        f"max err {jnp.max(jnp.abs(value - ref))}")

    print("KERNEL_OK")
</pallas_src>

<mosaic_0001>
module attributes {stable_mosaic.version = 11 : i64} {
  func.func @critic_kernel(%arg0: i32, %arg1: memref<8x32xf32, #tpu.memory_space<vmem>>, %arg2: memref<32x1024xbf16, #tpu.memory_space<vmem>>, %arg3: memref<1x1024xf32, #tpu.memory_space<vmem>>, %arg4: memref<1024x1024xbf16, #tpu.memory_space<vmem>>, %arg5: memref<1x1024xf32, #tpu.memory_space<vmem>>, %arg6: memref<1x1xf32, #tpu.memory_space<vmem>>, %arg7: memref<8x1xf32, #tpu.memory_space<vmem>>, %arg8: memref<8x1024xbf16, #tpu.memory_space<vmem>>, %arg9: memref<8x1xf32, #tpu.memory_space<vmem>>) attributes {dimension_semantics = [#tpu.dimension_semantics<arbitrary>], iteration_bounds = array<i64: 2>, scalar_prefetch = 0 : i64, scratch_operands = 2 : i64, tpu.core_type = #tpu.core_type<tc>, window_params = [{pipeline_mode = #tpu.pipeline_mode<synchronous>, transform_indices = @transform_0, window_bounds = array<i64: 8, 32>}, {pipeline_mode = #tpu.pipeline_mode<synchronous>, transform_indices = @transform_1, window_bounds = array<i64: 32, 1024>}, {pipeline_mode = #tpu.pipeline_mode<synchronous>, transform_indices = @transform_2, window_bounds = array<i64: 1, 1024>}, {transform_indices = @transform_3, window_bounds = array<i64: 1024, 1024>}, {transform_indices = @transform_4, window_bounds = array<i64: 1, 1024>}, {pipeline_mode = #tpu.pipeline_mode<synchronous>, transform_indices = @transform_5, window_bounds = array<i64: 1, 1>}, {pipeline_mode = #tpu.pipeline_mode<synchronous>, transform_indices = @transform_6, window_bounds = array<i64: 8, 1>}]} {
    %c0_i32 = arith.constant 0 : i32
    %0 = arith.cmpi eq, %arg0, %c0_i32 : i32
    %1 = arith.extui %0 : i1 to i32
    %c0_i32_0 = arith.constant 0 : i32
    %2 = arith.cmpi ne, %1, %c0_i32_0 : i32
    scf.if %2 {
      %c0_12 = arith.constant 0 : index
      %c0_13 = arith.constant 0 : index
      %17 = vector.load %arg1[%c0_12, %c0_13] : memref<8x32xf32, #tpu.memory_space<vmem>>, vector<8x32xf32>
      %18 = arith.truncf %17 : vector<8x32xf32> to vector<8x32xbf16>
      %c0_14 = arith.constant 0 : index
      %c0_15 = arith.constant 0 : index
      %19 = vector.load %arg2[%c0_14, %c0_15] : memref<32x1024xbf16, #tpu.memory_space<vmem>>, vector<32x1024xbf16>
      %cst_16 = arith.constant dense<0.000000e+00> : vector<8x1024xf32>
      %20 = tpu.matmul %18, %19, %cst_16 {dimension_numbers = #tpu.dot_dimension_numbers<[1], [0], [0], [1], [0, 0, 1, 1], [], []>} : vector<8x32xbf16>, vector<32x1024xbf16>, vector<8x1024xf32> -> vector<8x1024xf32>
      %c0_17 = arith.constant 0 : index
      %c0_18 = arith.constant 0 : index
      %21 = vector.load %arg3[%c0_17, %c0_18] : memref<1x1024xf32, #tpu.memory_space<vmem>>, vector<1x1024xf32>
      %22 = vector.broadcast %21 : vector<1x1024xf32> to vector<8x1024xf32>
      %23 = arith.addf %20, %22 : vector<8x1024xf32>
      %cst_19 = arith.constant 5.000000e-01 : f32
      %24 = vector.broadcast %cst_19 : f32 to vector<8x1024xf32>
      %25 = arith.mulf %24, %23 : vector<8x1024xf32>
      %cst_20 = arith.constant 0.707106769 : f32
      %26 = vector.broadcast %cst_20 : f32 to vector<8x1024xf32>
      %27 = arith.mulf %23, %26 : vector<8x1024xf32>
      %28 = math.erf %27 : vector<8x1024xf32>
      %cst_21 = arith.constant 1.000000e+00 : f32
      %29 = vector.broadcast %cst_21 : f32 to vector<8x1024xf32>
      %30 = arith.addf %29, %28 : vector<8x1024xf32>
      %31 = arith.mulf %25, %30 : vector<8x1024xf32>
      %32 = arith.truncf %31 : vector<8x1024xf32> to vector<8x1024xbf16>
      %c0_22 = arith.constant 0 : index
      %c0_23 = arith.constant 0 : index
      %33 = vector.load %arg8[%c0_22, %c0_23] : memref<8x1024xbf16, #tpu.memory_space<vmem>>, vector<8x1024xbf16>
      tpu.vector_store %arg8[%c0_22, %c0_23], %32 {strides = array<i32>} : memref<8x1024xbf16, #tpu.memory_space<vmem>>, vector<8x1024xbf16>,
      %cst_24 = arith.constant 0.000000e+00 : f32
      %34 = vector.broadcast %cst_24 : f32 to vector<8x1xf32>
      %c0_25 = arith.constant 0 : index
      %c0_26 = arith.constant 0 : index
      %35 = vector.load %arg9[%c0_25, %c0_26] : memref<8x1xf32, #tpu.memory_space<vmem>>, vector<8x1xf32>
      tpu.vector_store %arg9[%c0_25, %c0_26], %34 {strides = array<i32>} : memref<8x1xf32, #tpu.memory_space<vmem>>, vector<8x1xf32>,
    } else {
    }
    %c0 = arith.constant 0 : index
    %c0_1 = arith.constant 0 : index
    %3 = vector.load %arg8[%c0, %c0_1] : memref<8x1024xbf16, #tpu.memory_space<vmem>>, vector<8x1024xbf16>
    %c0_2 = arith.constant 0 : index
    %c0_3 = arith.constant 0 : index
    %4 = vector.load %arg4[%c0_2, %c0_3] : memref<1024x1024xbf16, #tpu.memory_space<vmem>>, vector<1024x1024xbf16>
    %cst = arith.constant dense<0.000000e+00> : vector<8x1024xf32>
    %5 = tpu.matmul %3, %4, %cst {dimension_numbers = #tpu.dot_dimension_numbers<[1], [0], [0], [1], [0, 0, 1, 1], [], []>} : vector<8x1024xbf16>, vector<1024x1024xbf16>, vector<8x1024xf32> -> vector<8x1024xf32>
    %c0_4 = arith.constant 0 : index
    %c0_5 = arith.constant 0 : index
    %6 = vector.load %arg9[%c0_4, %c0_5] : memref<8x1xf32, #tpu.memory_space<vmem>>, vector<8x1xf32>
    %c0_6 = arith.constant 0 : index
    %c0_7 = arith.constant 0 : index
    %7 = vector.load %arg5[%c0_6, %c0_7] : memref<1x1024xf32, #tpu.memory_space<vmem>>, vector<1x1024xf32>
    %8 = vector.broadcast %7 : vector<1x1024xf32> to vector<8x1024xf32>
    %9 = arith.mulf %5, %8 : vector<8x1024xf32>
    %cst_8 = arith.constant dense<0.000000e+00> : vector<8xf32>
    %10 = vector.multi_reduction <add>, %9, %cst_8 [1] : vector<8x1024xf32> to vector<8xf32>
    %11 = vector.shape_cast %10 : vector<8xf32> to vector<8x1xf32>
    %12 = arith.addf %6, %11 : vector<8x1xf32>
    %c0_9 = arith.constant 0 : index
    %c0_10 = arith.constant 0 : index
    %13 = vector.load %arg9[%c0_9, %c0_10] : memref<8x1xf32, #tpu.memory_space<vmem>>, vector<8x1xf32>
    tpu.vector_store %arg9[%c0_9, %c0_10], %12 {strides = array<i32>} : memref<8x1xf32, #tpu.memory_space<vmem>>, vector<8x1xf32>,
    %c1_i32 = arith.constant 1 : i32
    %14 = arith.cmpi eq, %arg0, %c1_i32 : i32
    %15 = arith.extui %14 : i1 to i32
    %c0_i32_11 = arith.constant 0 : i32
    %16 = arith.cmpi ne, %15, %c0_i32_11 : i32
    scf.if %16 {
      %c0_12 = arith.constant 0 : index
      %c0_13 = arith.constant 0 : index
      %17 = vector.load %arg9[%c0_12, %c0_13] : memref<8x1xf32, #tpu.memory_space<vmem>>, vector<8x1xf32>
      %c0_14 = arith.constant 0 : index
      %c0_15 = arith.constant 0 : index
      %18 = vector.load %arg6[%c0_14, %c0_15] : memref<1x1xf32, #tpu.memory_space<vmem>>, vector<1x1xf32>
      %19 = vector.broadcast %18 : vector<1x1xf32> to vector<8x1xf32>
      %20 = arith.addf %17, %19 : vector<8x1xf32>
      %c0_16 = arith.constant 0 : index
      %c0_17 = arith.constant 0 : index
      %21 = vector.load %arg7[%c0_16, %c0_17] : memref<8x1xf32, #tpu.memory_space<vmem>>, vector<8x1xf32>
      tpu.vector_store %arg7[%c0_16, %c0_17], %20 {strides = array<i32>} : memref<8x1xf32, #tpu.memory_space<vmem>>, vector<8x1xf32>,
    } else {
    }
    return
  }
  func.func @transform_0(%arg0: i32) -> (i32, i32) {
    %c0_i32 = arith.constant 0 : i32
    %c0_i32_0 = arith.constant 0 : i32
    %c0_i32_1 = arith.constant 0 : i32
    return %c0_i32, %c0_i32_0 : i32, i32
  }
  func.func @transform_1(%arg0: i32) -> (i32, i32) {
    %c0_i32 = arith.constant 0 : i32
    %c0_i32_0 = arith.constant 0 : i32
    %c0_i32_1 = arith.constant 0 : i32
    return %c0_i32, %c0_i32_0 : i32, i32
  }
  func.func @transform_2(%arg0: i32) -> (i32, i32) {
    %c0_i32 = arith.constant 0 : i32
    %c0_i32_0 = arith.constant 0 : i32
    %c0_i32_1 = arith.constant 0 : i32
    return %c0_i32, %c0_i32_0 : i32, i32
  }
  func.func @transform_3(%arg0: i32) -> (i32, i32) {
    %c0_i32 = arith.constant 0 : i32
    %c0_i32_0 = arith.constant 0 : i32
    return %c0_i32, %arg0 : i32, i32
  }
  func.func @transform_4(%arg0: i32) -> (i32, i32) {
    %c0_i32 = arith.constant 0 : i32
    %c0_i32_0 = arith.constant 0 : i32
    return %c0_i32, %arg0 : i32, i32
  }
  func.func @transform_5(%arg0: i32) -> (i32, i32) {
    %c0_i32 = arith.constant 0 : i32
    %c0_i32_0 = arith.constant 0 : i32
    %c0_i32_1 = arith.constant 0 : i32
    return %c0_i32, %c0_i32_0 : i32, i32
  }
  func.func @transform_6(%arg0: i32) -> (i32, i32) {
    %c0_i32 = arith.constant 0 : i32
    %c0_i32_0 = arith.constant 0 : i32
    %c0_i32_1 = arith.constant 0 : i32
    return %c0_i32, %c0_i32_0 : i32, i32
  }
}

</mosaic_0001>

<llo_original>
// kernel: critic_forward.1
$region0: #{critic_forward.1}
  #allocation0 [shape = 'u32[]', space=smem, size = 0x4, offset = 0x4, fixed_abs, tag = 'smem constant byte address 0x4 - core index']
  #allocation1 [shape = 'u32[144,128]{1,0:T(1,128)}', space=vmem, size = 0x12000, scoped, tag = 'internal scratch']
  #allocation2 [shape = 'bf16[8,1024]{1,0:T(8,128)(2,1)}', space=vmem, size = 0x4000, scoped, tag = 'scratch operand']
  #allocation3 [shape = 'f32[8,1]{1,0:T(8,128)}', space=vmem, size = 0x1000, scoped, tag = 'scratch operand']
  #allocation4 [shape = 'f32[1,1]{1,0:T(1,128)S(1)}', space=vmem, size = 0x200, scoped, tag = 'scoped memory for critic_forward.1']
  %s0 = inlined_call_operand.vmem [shape: f32[8,32], index: 0, kind: input, shape index: {}]
  %s1 = inlined_call_operand.vmem [shape: bf16[32,1024], index: 1, kind: input, shape index: {}]
  %s2 = inlined_call_operand.vmem [shape: f32[1,1024], index: 2, kind: input, shape index: {}]
  %s3 = inlined_call_operand.vmem [shape: bf16[1024,2048], index: 3, kind: input, shape index: {}]
  %s4 = inlined_call_operand.vmem [shape: f32[1,2048], index: 4, kind: input, shape index: {}]
  %s5 = inlined_call_operand.<no memory space> [shape: f32[1,1], index: 5, kind: input, shape index: {}]
  %s6 = inlined_call_operand.vmem [shape: f32[8,1], index: 6, kind: output, shape index: {}]
  %s7 = sld [smem:[#allocation0]]
  $region88: #{critic_forward.1} parent=0
    _
  %s9 = ssub.s32 1, %s7
  %s10 = scalar_select 0, %s9, %s7
  %v11 = vstv %s5
  %12 = vst [vmem:[#allocation4] sm:$0x1] %v11
  $region1: #{critic_forward.1} parent=0
    #allocation5 [shape = 'u8[4194304]{0}', space=vmem, size = 0x400000, scoped, tag = 'input window, operand 3']
    loop: start=0, step=1, limit=4
    $region2: #{critic_forward.1} parent=1 // loop_pre_header
      _
    $region3: #{critic_forward.1} parent=1 // loop_header
      %s14 = sphi 0, %s18
      %p15 = scmp.ge.s32.totalorder %s14, 4
      %s22 = sphi 0, %s22
      %s24 = sphi 0, %s22
      %s25 = sphi 0, %s24
      %s39 = sphi 0, %s25
      %s43 = sphi 0, %s43
      %s45 = sphi 0, %s43
      %s46 = sphi 0, %s45
      %s60 = sphi 0, %s46
      %s64 = sphi 0, %s64
      %s66 = sphi 0, %s64
      %s67 = sphi 0, %s66
      %s81 = sphi 0, %s67
      %s87 = sphi 0, %s89
      %s90 = sphi 0, %s87
      %s91 = sphi 0, %s90
      %s107 = sphi 0, %s91
      %s113 = sphi 0, %s115
      %s116 = sphi 0, %s113
      %s117 = sphi 0, %s116
      %s133 = sphi 0, %s117
      %s137 = sphi 0, %s137
      %s139 = sphi 0, %s137
      %s140 = sphi 0, %s139
      %s154 = sphi 0, %s140
      %s158 = sphi 0, %s158
      %s160 = sphi 0, %s158
      %s161 = sphi 0, %s160
      %s175 = sphi 0, %s161
    $region4: #{critic_forward.1} parent=1 // loop_header_branch
      %17 = sbr.rel (%p15) target = $region8
    $region5: #{critic_forward.1} parent=1 // loop_body
      %s19 = ssub.s32 %s14, 1
      %s20 = ssub.s32 %s14, 2
      %s21 = sadd.s32 %s14, 1
      %s23 = sadd.s32 %s22, 1
      %p26 = scmp.eq.s32.totalorder %s14, 1
      %p27 = scmp.ne.s32.totalorder %s22, %s24
      %p28 = scmp.eq.s32.totalorder %s14, 0
      %p29 = por %p27, %p28
      %p30 = scmp.ne.s32.totalorder %s22, %s24
      %p31 = scmp.eq.s32.totalorder %s19, 1
      %p32 = por %p30, %p31
      %p33 = scmp.ne.s32.totalorder %s24, %s25
      %p34 = scmp.eq.s32.totalorder %s19, 0
      %p35 = por %p33, %p34
      %p36 = scmp.ne.s32.totalorder %s24, %s25
      %p37 = scmp.eq.s32.totalorder %s20, 1
      %p38 = por %p36, %p37
      %p40 = scmp.ne.s32.totalorder %s25, %s39
      %p41 = scmp.eq.s32.totalorder %s20, 0
      %p42 = por %p40, %p41
      %s44 = sadd.s32 %s43, 1
      %p47 = scmp.eq.s32.totalorder %s14, 1
      %p48 = scmp.ne.s32.totalorder %s43, %s45
      %p49 = scmp.eq.s32.totalorder %s14, 0
      %p50 = por %p48, %p49
      %p51 = scmp.ne.s32.totalorder %s43, %s45
      %p52 = scmp.eq.s32.totalorder %s19, 1
      %p53 = por %p51, %p52
      %p54 = scmp.ne.s32.totalorder %s45, %s46
      %p55 = scmp.eq.s32.totalorder %s19, 0
      %p56 = por %p54, %p55
      %p57 = scmp.ne.s32.totalorder %s45, %s46
      %p58 = scmp.eq.s32.totalorder %s20, 1
      %p59 = por %p57, %p58
      %p61 = scmp.ne.s32.totalorder %s46, %s60
      %p62 = scmp.eq.s32.totalorder %s20, 0
      %p63 = por %p61, %p62
      %s65 = sadd.s32 %s64, 1
      %p68 = scmp.eq.s32.totalorder %s14, 1
      %p69 = scmp.ne.s32.totalorder %s64, %s66
      %p70 = scmp.eq.s32.totalorder %s14, 0
      %p71 = por %p69, %p70
      %p72 = scmp.ne.s32.totalorder %s64, %s66
      %p73 = scmp.eq.s32.totalorder %s19, 1
      %p74 = por %p72, %p73
      %p75 = scmp.ne.s32.totalorder %s66, %s67
      %p76 = scmp.eq.s32.totalorder %s19, 0
      %p77 = por %p75, %p76
      %p78 = scmp.ne.s32.totalorder %s66, %s67
      %p79 = scmp.eq.s32.totalorder %s20, 1
      %p80 = por %p78, %p79
      %p82 = scmp.ne.s32.totalorder %s67, %s81
      %p83 = scmp.eq.s32.totalorder %s20, 0
      %p84 = por %p82, %p83
      %s85 = ssub.s32 %s14, %s21
      %p86 = scmp.eq.s32.totalorder %s85, 0
      %s88 = sadd.s32 %s87, 1
      %s89 = scalar_select %p86, %s87, %s88
      %p92 = pneg %p86
      %p93 = scmp.eq.s32.totalorder %s14, 1
      %p94 = por %p92, %p93
      %p95 = scmp.ne.s32.totalorder %s87, %s90
      %p96 = scmp.eq.s32.totalorder %s14, 0
      %p97 = por %p95, %p96
      %p98 = scmp.ne.s32.totalorder %s87, %s90
      %p99 = scmp.eq.s32.totalorder %s19, 1
      %p100 = por %p98, %p99
      %p101 = scmp.ne.s32.totalorder %s90, %s91
      %p102 = scmp.eq.s32.totalorder %s19, 0
      %p103 = por %p101, %p102
      %p104 = scmp.ne.s32.totalorder %s90, %s91
      %p105 = scmp.eq.s32.totalorder %s20, 1
      %p106 = por %p104, %p105
      %p108 = scmp.ne.s32.totalorder %s91, %s107
      %p109 = scmp.eq.s32.totalorder %s20, 0
      %p110 = por %p108, %p109
      %s111 = ssub.s32 %s14, %s21
      %p112 = scmp.eq.s32.totalorder %s111, 0
      %s114 = sadd.s32 %s113, 1
      %s115 = scalar_select %p112, %s113, %s114
      %p118 = pneg %p112
      %p119 = scmp.eq.s32.totalorder %s14, 1
      %p120 = por %p118, %p119
      %p121 = scmp.ne.s32.totalorder %s113, %s116
      %p122 = scmp.eq.s32.totalorder %s14, 0
      %p123 = por %p121, %p122
      %p124 = scmp.ne.s32.totalorder %s113, %s116
      %p125 = scmp.eq.s32.totalorder %s19, 1
      %p126 = por %p124, %p125
      %p127 = scmp.ne.s32.totalorder %s116, %s117
      %p128 = scmp.eq.s32.totalorder %s19, 0
      %p129 = por %p127, %p128
      %p130 = scmp.ne.s32.totalorder %s116, %s117
      %p131 = scmp.eq.s32.totalorder %s20, 1
      %p132 = por %p130, %p131
      %p134 = scmp.ne.s32.totalorder %s117, %s133
      %p135 = scmp.eq.s32.totalorder %s20, 0
      %p136 = por %p134, %p135
      %s138 = sadd.s32 %s137, 1
      %p141 = scmp.eq.s32.totalorder %s14, 1
      %p142 = scmp.ne.s32.totalorder %s137, %s139
      %p143 = scmp.eq.s32.totalorder %s14, 0
      %p144 = por %p142, %p143
      %p145 = scmp.ne.s32.totalorder %s137, %s139
      %p146 = scmp.eq.s32.totalorder %s19, 1
      %p147 = por %p145, %p146
      %p148 = scmp.ne.s32.totalorder %s139, %s140
      %p149 = scmp.eq.s32.totalorder %s19, 0
      %p150 = por %p148, %p149
      %p151 = scmp.ne.s32.totalorder %s139, %s140
      %p152 = scmp.eq.s32.totalorder %s20, 1
      %p153 = por %p151, %p152
      %p155 = scmp.ne.s32.totalorder %s140, %s154
      %p156 = scmp.eq.s32.totalorder %s20, 0
      %p157 = por %p155, %p156
      %s159 = sadd.s32 %s158, 1
      %p162 = scmp.eq.s32.totalorder %s14, 1
      %p163 = scmp.ne.s32.totalorder %s158, %s160
      %p164 = scmp.eq.s32.totalorder %s14, 0
      %p165 = por %p163, %p164
      %p166 = scmp.ne.s32.totalorder %s158, %s160
      %p167 = scmp.eq.s32.totalorder %s19, 1
      %p168 = por %p166, %p167
      %p169 = scmp.ne.s32.totalorder %s160, %s161
      %p170 = scmp.eq.s32.totalorder %s19, 0
      %p171 = por %p169, %p170
      %p172 = scmp.ne.s32.totalorder %s160, %s161
      %p173 = scmp.eq.s32.totalorder %s20, 1
      %p174 = por %p172, %p173
      %p176 = scmp.ne.s32.totalorder %s161, %s175
      %p177 = scmp.eq.s32.totalorder %s20, 0
      %p178 = por %p176, %p177
      %p179 = scmp.le.s32.totalorder 1, %s14
      %p180 = scmp.lt.s32.totalorder %s14, 3
      %p181 = pnand %p179, %p180
      %p182 = pneg %p181
      // Predicated region
      $region9: #{critic_forward.1} parent=5 // pred_check
        _
      $region10: #{critic_forward.1} parent=5 // pred_check_branch
        %184 = sbr.rel (%p181) target = $region12
      $region11: #{critic_forward.1} parent=5 // pred_region
        %s185 = ssub.s32 %s14, 1
        // Predicated region
        $region13: #{critic_forward.1} parent=11 // pred_check
          %p186 = pneg %p35
        $region14: #{critic_forward.1} parent=11 // pred_check_branch
          %188 = sbr.rel (%p186) target = $region16
        $region15: #{critic_forward.1} parent=11 // pred_region
          _
        $region16: #{critic_forward.1} parent=11 // pred_fallthru
          _
        // Predicated region
        $region17: #{critic_forward.1} parent=11 // pred_check
          %p189 = pneg %p56
        $region18: #{critic_forward.1} parent=11 // pred_check_branch
          %191 = sbr.rel (%p189) target = $region20
        $region19: #{critic_forward.1} parent=11 // pred_region
          _
        $region20: #{critic_forward.1} parent=11 // pred_fallthru
          _
        // Predicated region
        $region21: #{critic_forward.1} parent=11 // pred_check
          %p192 = pneg %p77
        $region22: #{critic_forward.1} parent=11 // pred_check_branch
          %194 = sbr.rel (%p192) target = $region24
        $region23: #{critic_forward.1} parent=11 // pred_region
          _
        $region24: #{critic_forward.1} parent=11 // pred_fallthru
          _
        // Predicated region
        $region25: #{critic_forward.1} parent=11 // pred_check
          %p195 = pneg %p150
        $region26: #{critic_forward.1} parent=11 // pred_check_branch
          %197 = sbr.rel (%p195) target = $region28
        $region27: #{critic_forward.1} parent=11 // pred_region
          _
        $region28: #{critic_forward.1} parent=11 // pred_fallthru
          _
      $region12: #{critic_forward.1} parent=5 // pred_fallthru
        _
      %p198 = scmp.lt.s32.totalorder %s14, 2
      // Predicated region
      $region29: #{critic_forward.1} parent=5 // pred_check
        %p199 = pneg %p198
      $region30: #{critic_forward.1} parent=5 // pred_check_branch
        %201 = sbr.rel (%p199) target = $region32
      $region31: #{critic_forward.1} parent=5 // pred_region
        // Predicated region
        $region33: #{critic_forward.1} parent=31 // pred_check
          %p202 = pneg %p97
        $region34: #{critic_forward.1} parent=31 // pred_check_branch
          %204 = sbr.rel (%p202) target = $region36
        $region35: #{critic_forward.1} parent=31 // pred_region
          %s205 = sand.u32 %s87, 1
          %s206 = sand.u32 %s87, 1
          %s207 = smul.addr %s206, 4096
          %s208 = scalar_lea.vmem [#allocation5], %s207
          %s209 = smul.u32 8, %s14
          %s210 = smul.addr %s209, 4
          %s211 = scalar_lea.vmem %s3, %s210
          // Predicated region
          $region37: #{critic_forward.1} parent=35 // pred_check
            _
          $region38: #{critic_forward.1} parent=35 // pred_check_branch
            %213 = sbr.rel (0) target = $region40
          $region39: #{critic_forward.1} parent=35 // pred_region
            // Predicated region
            $region41: #{critic_forward.1} parent=39 // pred_check
              _
            $region42: #{critic_forward.1} parent=39 // pred_check_branch
              %215 = sbr.rel (0) target = $region44
            $region43: #{critic_forward.1} parent=39 // pred_region
              loop: start=0, step=1, limit=1
              $region45: #{critic_forward.1} parent=43 // loop_pre_header
                _
              $region46: #{critic_forward.1} parent=43 // loop_header
                %s217 = sphi 0, %s221
                %p218 = scmp.ge.s32.totalorder %s217, 1
                %s222 = sphi %s211, %s211
                %s223 = sphi %s208, %s208
              $region47: #{critic_forward.1} parent=43 // loop_header_branch
                %220 = sbr.rel (%p218) target = $region51
              $region48: #{critic_forward.1} parent=43 // loop_body
                %v224 = vld [vmem:[%s222] sm:$0xff]
                %225 = vst [vmem:[%s223] sm:$0xff] %v224
                %v226 = vld [vmem:[%s222 + $0x8] sm:$0xff]
                %227 = vst [vmem:[%s223 + $0x8] sm:$0xff] %v226
                %v228 = vld [vmem:[%s222 + $0x10] sm:$0xff]
                %229 = vst [vmem:[%s223 + $0x10] sm:$0xff] %v228
                %v230 = vld [vmem:[%s222 + $0x18] sm:$0xff]
                %231 = vst [vmem:[%s223 + $0x18] sm:$0xff] %v230
                %v232 = vld [vmem:[%s222 + $0x40] sm:$0xff]
                %233 = vst [vmem:[%s223 + $0x20] sm:$0xff] %v232
                %v234 = vld [vmem:[%s222 + $0x48] sm:$0xff]
                %235 = vst [vmem:[%s223 + $0x28] sm:$0xff] %v234
                %v236 = vld [vmem:[%s222 + $0x50] sm:$0xff]
                %237 = vst [vmem:[%s223 + $0x30] sm:$0xff] %v236
                %v238 = vld [vmem:[%s222 + $0x58] sm:$0xff]
                %239 = vst [vmem:[%s223 + $0x38] sm:$0xff] %v238
                %v240 = vld [vmem:[%s222 + $0x80] sm:$0xff]
                %241 = vst [vmem:[%s223 + $0x40] sm:$0xff] %v240
                %v242 = vld [vmem:[%s222 + $0x88] sm:$0xff]
                %243 = vst [vmem:[%s223 + $0x48] sm:$0xff] %v242
                %v244 = vld [vmem:[%s222 + $0x90] sm:$0xff]
                %245 = vst [vmem:[%s223 + $0x50] sm:$0xff] %v244
                %v246 = vld [vmem:[%s222 + $0x98] sm:$0xff]
                %247 = vst [vmem:[%s223 + $0x58] sm:$0xff] %v246
                %v248 = vld [vmem:[%s222 + $0xc0] sm:$0xff]
                %249 = vst [vmem:[%s223 + $0x60] sm:$0xff] %v248
                %v250 = vld [vmem:[%s222 + $0xc8] sm:$0xff]
                %251 = vst [vmem:[%s223 + $0x68] sm:$0xff] %v250
                %v252 = vld [vmem:[%s222 + $0xd0] sm:$0xff]
                %253 = vst [vmem:[%s223 + $0x70] sm:$0xff] %v252
                %v254 = vld [vmem:[%s222 + $0xd8] sm:$0xff]
                %255 = vst [vmem:[%s223 + $0x78] sm:$0xff] %v254
                %v256 = vld [vmem:[%s222 + $0x100] sm:$0xff]
                %257 = vst [vmem:[%s223 + $0x80] sm:$0xff] %v256
                %v258 = vld [vmem:[%s222 + $0x108] sm:$0xff]
                %259 = vst [vmem:[%s223 + $0x88] sm:$0xff] %v258
                %v260 = vld [vmem:[%s222 + $0x110] sm:$0xff]
                %261 = vst [vmem:[%s223 + $0x90] sm:$0xff] %v260
                %v262 = vld [vmem:[%s222 + $0x118] sm:$0xff]
                %263 = vst [vmem:[%s223 + $0x98] sm:$0xff] %v262
                %v264 = vld [vmem:[%s222 + $0x140] sm:$0xff]
                %265 = vst [vmem:[%s223 + $0xa0] sm:$0xff] %v264
                %v266 = vld [vmem:[%s222 + $0x148] sm:$0xff]
                %267 = vst [vmem:[%s223 + $0xa8] sm:$0xff] %v266
                %v268 = vld [vmem:[%s222 + $0x150] sm:$0xff]
                %269 = vst [vmem:[%s223 + $0xb0] sm:$0xff] %v268
                %v270 = vld [vmem:[%s222 + $0x158] sm:$0xff]
                %271 = vst [vmem:[%s223 + $0xb8] sm:$0xff] %v270
                %v272 = vld [vmem:[%s222 + $0x180] sm:$0xff]
                %273 = vst [vmem:[%s223 + $0xc0] sm:$0xff] %v272
                %v274 = vld [vmem:[%s222 + $0x188] sm:$0xff]
                %275 = vst [vmem:[%s223 + $0xc8] sm:$0xff] %v274
                %v276 = vld [vmem:[%s222 + $0x190] sm:$0xff]
                %277 = vst [vmem:[%s223 + $0xd0] sm:$0xff] %v276
                %v278 = vld [vmem:[%s222 + $0x198] sm:$0xff]
                %279 = vst [vmem:[%s223 + $0xd8] sm:$0xff] %v278
                %v280 = vld [vmem:[%s222 + $0x1c0] sm:$0xff]
                %281 = vst [vmem:[%s223 + $0xe0] sm:$0xff] %v280
                %v282 = vld [vmem:[%s222 + $0x1c8] sm:$0xff]
                %283 = vst [vmem:[%s223 + $0xe8] sm:$0xff] %v282
                %v284 = vld [vmem:[%s222 + $0x1d0] sm:$0xff]
                %285 = vst [vmem:[%s223 + $0xf0] sm:$0xff] %v284
                %v286 = vld [vmem:[%s222 + $0x1d8] sm:$0xff]
                %287 = vst [vmem:[%s223 + $0xf8] sm:$0xff] %v286
                %v288 = vld [vmem:[%s222 + $0x200] sm:$0xff]
                %289 = vst [vmem:[%s223 + $0x100] sm:$0xff] %v288
                %v290 = vld [vmem:[%s222 + $0x208] sm:$0xff]
                %291 = vst [vmem:[%s223 + $0x108] sm:$0xff] %v290
                %v292 = vld [vmem:[%s222 + $0x210] sm:$0xff]
                %293 = vst [vmem:[%s223 + $0x110] sm:$0xff] %v292
                %v294 = vld [vmem:[%s222 + $0x218] sm:$0xff]
                %295 = vst [vmem:[%s223 + $0x118] sm:$0xff] %v294
                %v296 = vld [vmem:[%s222 + $0x240] sm:$0xff]
                %297 = vst [vmem:[%s223 + $0x120] sm:$0xff] %v296
                %v298 = vld [vmem:[%s222 + $0x248] sm:$0xff]
                %299 = vst [vmem:[%s223 + $0x128] sm:$0xff] %v298
                %v300 = vld [vmem:[%s222 + $0x250] sm:$0xff]
                %301 = vst [vmem:[%s223 + $0x130] sm:$0xff] %v300
                %v302 = vld [vmem:[%s222 + $0x258] sm:$0xff]
                %303 = vst [vmem:[%s223 + $0x138] sm:$0xff] %v302
                %v304 = vld [vmem:[%s222 + $0x280] sm:$0xff]
                %305 = vst [vmem:[%s223 + $0x140] sm:$0xff] %v304
                %v306 = vld [vmem:[%s222 + $0x288] sm:$0xff]
                %307 = vst [vmem:[%s223 + $0x148] sm:$0xff] %v306
                %v308 = vld [vmem:[%s222 + $0x290] sm:$0xff]
                %309 = vst [vmem:[%s223 + $0x150] sm:$0xff] %v308
                %v310 = vld [vmem:[%s222 + $0x298] sm:$0xff]
                %311 = vst [vmem:[%s223 + $0x158] sm:$0xff] %v310
                %v312 = vld [vmem:[%s222 + $0x2c0] sm:$0xff]
                %313 = vst [vmem:[%s223 + $0x160] sm:$0xff] %v312
                %v314 = vld [vmem:[%s222 + $0x2c8] sm:$0xff]
                %315 = vst [vmem:[%s223 + $0x168] sm:$0xff] %v314
                %v316 = vld [vmem:[%s222 + $0x2d0] sm:$0xff]
                %317 = vst [vmem:[%s223 + $0x170] sm:$0xff] %v316
                %v318 = vld [vmem:[%s222 + $0x2d8] sm:$0xff]
                %319 = vst [vmem:[%s223 + $0x178] sm:$0xff] %v318
                %v320 = vld [vmem:[%s222 + $0x300] sm:$0xff]
                %321 = vst [vmem:[%s223 + $0x180] sm:$0xff] %v320
                %v322 = vld [vmem:[%s222 + $0x308] sm:$0xff]
                %323 = vst [vmem:[%s223 + $0x188] sm:$0xff] %v322
                %v324 = vld [vmem:[%s222 + $0x310] sm:$0xff]
                %325 = vst [vmem:[%s223 + $0x190] sm:$0xff] %v324
                %v326 = vld [vmem:[%s222 + $0x318] sm:$0xff]
                %327 = vst [vmem:[%s223 + $0x198] sm:$0xff] %v326
                %v328 = vld [vmem:[%s222 + $0x340] sm:$0xff]
                %329 = vst [vmem:[%s223 + $0x1a0] sm:$0xff] %v328
                %v330 = vld [vmem:[%s222 + $0x348] sm:$0xff]
                %331 = vst [vmem:[%s223 + $0x1a8] sm:$0xff] %v330
                %v332 = vld [vmem:[%s222 + $0x350] sm:$0xff]
                %333 = vst [vmem:[%s223 + $0x1b0] sm:$0xff] %v332
                %v334 = vld [vmem:[%s222 + $0x358] sm:$0xff]
                %335 = vst [vmem:[%s223 + $0x1b8] sm:$0xff] %v334
                %v336 = vld [vmem:[%s222 + $0x380] sm:$0xff]
                %337 = vst [vmem:[%s223 + $0x1c0] sm:$0xff] %v336
                %v338 = vld [vmem:[%s222 + $0x388] sm:$0xff]
                %339 = vst [vmem:[%s223 + $0x1c8] sm:$0xff] %v338
                %v340 = vld [vmem:[%s222 + $0x390] sm:$0xff]
                %341 = vst [vmem:[%s223 + $0x1d0] sm:$0xff] %v340
                %v342 = vld [vmem:[%s222 + $0x398] sm:$0xff]
                %343 = vst [vmem:[%s223 + $0x1d8] sm:$0xff] %v342
                %v344 = vld [vmem:[%s222 + $0x3c0] sm:$0xff]
                %345 = vst [vmem:[%s223 + $0x1e0] sm:$0xff] %v344
                %v346 = vld [vmem:[%s222 + $0x3c8] sm:$0xff]
                %347 = vst [vmem:[%s223 + $0x1e8] sm:$0xff] %v346
                %v348 = vld [vmem:[%s222 + $0x3d0] sm:$0xff]
                %349 = vst [vmem:[%s223 + $0x1f0] sm:$0xff] %v348
                %v350 = vld [vmem:[%s222 + $0x3d8] sm:$0xff]
                %351 = vst [vmem:[%s223 + $0x1f8] sm:$0xff] %v350
                %v352 = vld [vmem:[%s222 + $0x400] sm:$0xff]
                %353 = vst [vmem:[%s223 + $0x200] sm:$0xff] %v352
                %v354 = vld [vmem:[%s222 + $0x408] sm:$0xff]
                %355 = vst [vmem:[%s223 + $0x208] sm:$0xff] %v354
                %v356 = vld [vmem:[%s222 + $0x410] sm:$0xff]
                %357 = vst [vmem:[%s223 + $0x210] sm:$0xff] %v356
                %v358 = vld [vmem:[%s222 + $0x418] sm:$0xff]
                %359 = vst [vmem:[%s223 + $0x218] sm:$0xff] %v358
                %v360 = vld [vmem:[%s222 + $0x440] sm:$0xff]
                %361 = vst [vmem:[%s223 + $0x220] sm:$0xff] %v360
                %v362 = vld [vmem:[%s222 + $0x448] sm:$0xff]
                %363 = vst [vmem:[%s223 + $0x228] sm:$0xff] %v362
                %v364 = vld [vmem:[%s222 + $0x450] sm:$0xff]
                %365 = vst [vmem:[%s223 + $0x230] sm:$0xff] %v364
                %v366 = vld [vmem:[%s222 + $0x458] sm:$0xff]
                %367 = vst [vmem:[%s223 + $0x238] sm:$0xff] %v366
                %v368 = vld [vmem:[%s222 + $0x480] sm:$0xff]
                %369 = vst [vmem:[%s223 + $0x240] sm:$0xff] %v368
                %v370 = vld [vmem:[%s222 + $0x488] sm:$0xff]
                %371 = vst [vmem:[%s223 + $0x248] sm:$0xff] %v370
                %v372 = vld [vmem:[%s222 + $0x490] sm:$0xff]
                %373 = vst [vmem:[%s223 + $0x250] sm:$0xff] %v372
                %v374 = vld [vmem:[%s222 + $0x498] sm:$0xff]
                %375 = vst [vmem:[%s223 + $0x258] sm:$0xff] %v374
                %v376 = vld [vmem:[%s222 + $0x4c0] sm:$0xff]
                %377 = vst [vmem:[%s223 + $0x260] sm:$0xff] %v376
                %v378 = vld [vmem:[%s222 + $0x4c8] sm:$0xff]
                %379 = vst [vmem:[%s223 + $0x268] sm:$0xff] %v378
                %v380 = vld [vmem:[%s222 + $0x4d0] sm:$0xff]
                %381 = vst [vmem:[%s223 + $0x270] sm:$0xff] %v380
                %v382 = vld [vmem:[%s222 + $0x4d8] sm:$0xff]
                %383 = vst [vmem:[%s223 + $0x278] sm:$0xff] %v382
                %v384 = vld [vmem:[%s222 + $0x500] sm:$0xff]
                %385 = vst [vmem:[%s223 + $0x280] sm:$0xff] %v384
                %v386 = vld [vmem:[%s222 + $0x508] sm:$0xff]
                %387 = vst [vmem:[%s223 + $0x288] sm:$0xff] %v386
                %v388 = vld [vmem:[%s222 + $0x510] sm:$0xff]
                %389 = vst [vmem:[%s223 + $0x290] sm:$0xff] %v388
                %v390 = vld [vmem:[%s222 + $0x518] sm:$0xff]
                %391 = vst [vmem:[%s223 + $0x298] sm:$0xff] %v390
                %v392 = vld [vmem:[%s222 + $0x540] sm:$0xff]
                %393 = vst [vmem:[%s223 + $0x2a0] sm:$0xff] %v392
                %v394 = vld [vmem:[%s222 + $0x548] sm:$0xff]
                %395 = vst [vmem:[%s223 + $0x2a8] sm:$0xff] %v394
                %v396 = vld [vmem:[%s222 + $0x550] sm:$0xff]
                %397 = vst [vmem:[%s223 + $0x2b0] sm:$0xff] %v396
                %v398 = vld [vmem:[%s222 + $0x558] sm:$0xff]
                %399 = vst [vmem:[%s223 + $0x2b8] sm:$0xff] %v398
                %v400 = vld [vmem:[%s222 + $0x580] sm:$0xff]
                %401 = vst [vmem:[%s223 + $0x2c0] sm:$0xff] %v400
                %v402 = vld [vmem:[%s222 + $0x588] sm:$0xff]
                %403 = vst [vmem:[%s223 + $0x2c8] sm:$0xff] %v402
                %v404 = vld [vmem:[%s222 + $0x590] sm:$0xff]
                %405 = vst [vmem:[%s223 + $0x2d0] sm:$0xff] %v404
                %v406 = vld [vmem:[%s222 + $0x598] sm:$0xff]
                %407 = vst [vmem:[%s223 + $0x2d8] sm:$0xff] %v406
                %v408 = vld [vmem:[%s222 + $0x5c0] sm:$0xff]
                %409 = vst [vmem:[%s223 + $0x2e0] sm:$0xff] %v408
                %v410 = vld [vmem:[%s222 + $0x5c8] sm:$0xff]
                %411 = vst [vmem:[%s223 + $0x2e8] sm:$0xff] %v410
                %v412 = vld [vmem:[%s222 + $0x5d0] sm:$0xff]
                %413 = vst [vmem:[%s223 + $0x2f0] sm:$0xff] %v412
                %v414 = vld [vmem:[%s222 + $0x5d8] sm:$0xff]
                %415 = vst [vmem:[%s223 + $0x2f8] sm:$0xff] %v414
                %v416 = vld [vmem:[%s222 + $0x600] sm:$0xff]
                %417 = vst [vmem:[%s223 + $0x300] sm:$0xff] %v416
                %v418 = vld [vmem:[%s222 + $0x608] sm:$0xff]
                %419 = vst [vmem:[%s223 + $0x308] sm:$0xff] %v418
                %v420 = vld [vmem:[%s222 + $0x610] sm:$0xff]
                %421 = vst [vmem:[%s223 + $0x310] sm:$0xff] %v420
                %v422 = vld [vmem:[%s222 + $0x618] sm:$0xff]
                %423 = vst [vmem:[%s223 + $0x318] sm:$0xff] %v422
                %v424 = vld [vmem:[%s222 + $0x640] sm:$0xff]
                %425 = vst [vmem:[%s223 + $0x320] sm:$0xff] %v424
                %v426 = vld [vmem:[%s222 + $0x648] sm:$0xff]
                %427 = vst [vmem:[%s223 + $0x328] sm:$0xff] %v426
                %v428 = vld [vmem:[%s222 + $0x650] sm:$0xff]
                %429 = vst [vmem:[%s223 + $0x330] sm:$0xff] %v428
                %v430 = vld [vmem:[%s222 + $0x658] sm:$0xff]
                %431 = vst [vmem:[%s223 + $0x338] sm:$0xff] %v430
                %v432 = vld [vmem:[%s222 + $0x680] sm:$0xff]
                %433 = vst [vmem:[%s223 + $0x340] sm:$0xff] %v432
                %v434 = vld [vmem:[%s222 + $0x688] sm:$0xff]
                %435 = vst [vmem:[%s223 + $0x348] sm:$0xff] %v434
                %v436 = vld [vmem:[%s222 + $0x690] sm:$0xff]
                %437 = vst [vmem:[%s223 + $0x350] sm:$0xff] %v436
                %v438 = vld [vmem:[%s222 + $0x698] sm:$0xff]
                %439 = vst [vmem:[%s223 + $0x358] sm:$0xff] %v438
                %v440 = vld [vmem:[%s222 + $0x6c0] sm:$0xff]
                %441 = vst [vmem:[%s223 + $0x360] sm:$0xff] %v440
                %v442 = vld [vmem:[%s222 + $0x6c8] sm:$0xff]
                %443 = vst [vmem:[%s223 + $0x368] sm:$0xff] %v442
                %v444 = vld [vmem:[%s222 + $0x6d0] sm:$0xff]
                %445 = vst [vmem:[%s223 + $0x370] sm:$0xff] %v444
                %v446 = vld [vmem:[%s222 + $0x6d8] sm:$0xff]
                %447 = vst [vmem:[%s223 + $0x378] sm:$0xff] %v446
                %v448 = vld [vmem:[%s222 + $0x700] sm:$0xff]
                %449 = vst [vmem:[%s223 + $0x380] sm:$0xff] %v448
                %v450 = vld [vmem:[%s222 + $0x708] sm:$0xff]
                %451 = vst [vmem:[%s223 + $0x388] sm:$0xff] %v450
                %v452 = vld [vmem:[%s222 + $0x710] sm:$0xff]
                %453 = vst [vmem:[%s223 + $0x390] sm:$0xff] %v452
                %v454 = vld [vmem:[%s222 + $0x718] sm:$0xff]
                %455 = vst [vmem:[%s223 + $0x398] sm:$0xff] %v454
                %v456 = vld [vmem:[%s222 + $0x740] sm:$0xff]
                %457 = vst [vmem:[%s223 + $0x3a0] sm:$0xff] %v456
                %v458 = vld [vmem:[%s222 + $0x748] sm:$0xff]
                %459 = vst [vmem:[%s223 + $0x3a8] sm:$0xff] %v458
                %v460 = vld [vmem:[%s222 + $0x750] sm:$0xff]
                %461 = vst [vmem:[%s223 + $0x3b0] sm:$0xff] %v460
                %v462 = vld [vmem:[%s222 + $0x758] sm:$0xff]
                %463 = vst [vmem:[%s223 + $0x3b8] sm:$0xff] %v462
                %v464 = vld [vmem:[%s222 + $0x780] sm:$0xff]
                %465 = vst [vmem:[%s223 + $0x3c0] sm:$0xff] %v464
                %v466 = vld [vmem:[%s222 + $0x788] sm:$0xff]
                %467 = vst [vmem:[%s223 + $0x3c8] sm:$0xff] %v466
                %v468 = vld [vmem:[%s222 + $0x790] sm:$0xff]
                %469 = vst [vmem:[%s223 + $0x3d0] sm:$0xff] %v468
                %v470 = vld [vmem:[%s222 + $0x798] sm:$0xff]
                %471 = vst [vmem:[%s223 + $0x3d8] sm:$0xff] %v470
                %v472 = vld [vmem:[%s222 + $0x7c0] sm:$0xff]
                %473 = vst [vmem:[%s223 + $0x3e0] sm:$0xff] %v472
                %v474 = vld [vmem:[%s222 + $0x7c8] sm:$0xff]
                %475 = vst [vmem:[%s223 + $0x3e8] sm:$0xff] %v474
                %v476 = vld [vmem:[%s222 + $0x7d0] sm:$0xff]
                %477 = vst [vmem:[%s223 + $0x3f0] sm:$0xff] %v476
                %v478 = vld [vmem:[%s222 + $0x7d8] sm:$0xff]
                %479 = vst [vmem:[%s223 + $0x3f8] sm:$0xff] %v478
                %v480 = vld [vmem:[%s222 + $0x800] sm:$0xff]
                %481 = vst [vmem:[%s223 + $0x400] sm:$0xff] %v480
                %v482 = vld [vmem:[%s222 + $0x808] sm:$0xff]
                %483 = vst [vmem:[%s223 + $0x408] sm:$0xff] %v482
                %v484 = vld [vmem:[%s222 + $0x810] sm:$0xff]
                %485 = vst [vmem:[%s223 + $0x410] sm:$0xff] %v484
                %v486 = vld [vmem:[%s222 + $0x818] sm:$0xff]
                %487 = vst [vmem:[%s223 + $0x418] sm:$0xff] %v486
                %v488 = vld [vmem:[%s222 + $0x840] sm:$0xff]
                %489 = vst [vmem:[%s223 + $0x420] sm:$0xff] %v488
                %v490 = vld [vmem:[%s222 + $0x848] sm:$0xff]
                %491 = vst [vmem:[%s223 + $0x428] sm:$0xff] %v490
                %v492 = vld [vmem:[%s222 + $0x850] sm:$0xff]
                %493 = vst [vmem:[%s223 + $0x430] sm:$0xff] %v492
                %v494 = vld [vmem:[%s222 + $0x858] sm:$0xff]
                %495 = vst [vmem:[%s223 + $0x438] sm:$0xff] %v494
                %v496 = vld [vmem:[%s222 + $0x880] sm:$0xff]
                %497 = vst [vmem:[%s223 + $0x440] sm:$0xff] %v496
                %v498 = vld [vmem:[%s222 + $0x888] sm:$0xff]
                %499 = vst [vmem:[%s223 + $0x448] sm:$0xff] %v498
                %v500 = vld [vmem:[%s222 + $0x890] sm:$0xff]
                %501 = vst [vmem:[%s223 + $0x450] sm:$0xff] %v500
                %v502 = vld [vmem:[%s222 + $0x898] sm:$0xff]
                %503 = vst [vmem:[%s223 + $0x458] sm:$0xff] %v502
                %v504 = vld [vmem:[%s222 + $0x8c0] sm:$0xff]
                %505 = vst [vmem:[%s223 + $0x460] sm:$0xff] %v504
                %v506 = vld [vmem:[%s222 + $0x8c8] sm:$0xff]
                %507 = vst [vmem:[%s223 + $0x468] sm:$0xff] %v506
                %v508 = vld [vmem:[%s222 + $0x8d0] sm:$0xff]
                %509 = vst [vmem:[%s223 + $0x470] sm:$0xff] %v508
                %v510 = vld [vmem:[%s222 + $0x8d8] sm:$0xff]
                %511 = vst [vmem:[%s223 + $0x478] sm:$0xff] %v510
                %v512 = vld [vmem:[%s222 + $0x900] sm:$0xff]
                %513 = vst [vmem:[%s223 + $0x480] sm:$0xff] %v512
                %v514 = vld [vmem:[%s222 + $0x908] sm:$0xff]
                %515 = vst [vmem:[%s223 + $0x488] sm:$0xff] %v514
                %v516 = vld [vmem:[%s222 + $0x910] sm:$0xff]
                %517 = vst [vmem:[%s223 + $0x490] sm:$0xff] %v516
                %v518 = vld [vmem:[%s222 + $0x918] sm:$0xff]
                %519 = vst [vmem:[%s223 + $0x498] sm:$0xff] %v518
                %v520 = vld [vmem:[%s222 + $0x940] sm:$0xff]
                %521 = vst [vmem:[%s223 + $0x4a0] sm:$0xff] %v520
                %v522 = vld [vmem:[%s222 + $0x948] sm:$0xff]
                %523 = vst [vmem:[%s223 + $0x4a8] sm:$0xff] %v522
                %v524 = vld [vmem:[%s222 + $0x950] sm:$0xff]
                %525 = vst [vmem:[%s223 + $0x4b0] sm:$0xff] %v524
                %v526 = vld [vmem:[%s222 + $0x958] sm:$0xff]
                %527 = vst [vmem:[%s223 + $0x4b8] sm:$0xff] %v526
                %v528 = vld [vmem:[%s222 + $0x980] sm:$0xff]
                %529 = vst [vmem:[%s223 + $0x4c0] sm:$0xff] %v528
                %v530 = vld [vmem:[%s222 + $0x988] sm:$0xff]
                %531 = vst [vmem:[%s223 + $0x4c8] sm:$0xff] %v530
                %v532 = vld [vmem:[%s222 + $0x990] sm:$0xff]
                %533 = vst [vmem:[%s223 + $0x4d0] sm:$0xff] %v532
                %v534 = vld [vmem:[%s222 + $0x998] sm:$0xff]
                %535 = vst [vmem:[%s223 + $0x4d8] sm:$0xff] %v534
                %v536 = vld [vmem:[%s222 + $0x9c0] sm:$0xff]
                %537 = vst [vmem:[%s223 + $0x4e0] sm:$0xff] %v536
                %v538 = vld [vmem:[%s222 + $0x9c8] sm:$0xff]
                %539 = vst [vmem:[%s223 + $0x4e8] sm:$0xff] %v538
                %v540 = vld [vmem:[%s222 + $0x9d0] sm:$0xff]
                %541 = vst [vmem:[%s223 + $0x4f0] sm:$0xff] %v540
                %v542 = vld [vmem:[%s222 + $0x9d8] sm:$0xff]
                %543 = vst [vmem:[%s223 + $0x4f8] sm:$0xff] %v542
                %v544 = vld [vmem:[%s222 + $0xa00] sm:$0xff]
                %545 = vst [vmem:[%s223 + $0x500] sm:$0xff] %v544
                %v546 = vld [vmem:[%s222 + $0xa08] sm:$0xff]
                %547 = vst [vmem:[%s223 + $0x508] sm:$0xff] %v546
                %v548 = vld [vmem:[%s222 + $0xa10] sm:$0xff]
                %549 = vst [vmem:[%s223 + $0x510] sm:$0xff] %v548
                %v550 = vld [vmem:[%s222 + $0xa18] sm:$0xff]
                %551 = vst [vmem:[%s223 + $0x518] sm:$0xff] %v550
                %v552 = vld [vmem:[%s222 + $0xa40] sm:$0xff]
                %553 = vst [vmem:[%s223 + $0x520] sm:$0xff] %v552
                %v554 = vld [vmem:[%s222 + $0xa48] sm:$0xff]
                %555 = vst [vmem:[%s223 + $0x528] sm:$0xff] %v554
                %v556 = vld [vmem:[%s222 + $0xa50] sm:$0xff]
                %557 = vst [vmem:[%s223 + $0x530] sm:$0xff] %v556
                %v558 = vld [vmem:[%s222 + $0xa58] sm:$0xff]
                %559 = vst [vmem:[%s223 + $0x538] sm:$0xff] %v558
                %v560 = vld [vmem:[%s222 + $0xa80] sm:$0xff]
                %561 = vst [vmem:[%s223 + $0x540] sm:$0xff] %v560
                %v562 = vld [vmem:[%s222 + $0xa88] sm:$0xff]
                %563 = vst [vmem:[%s223 + $0x548] sm:$0xff] %v562
                %v564 = vld [vmem:[%s222 + $0xa90] sm:$0xff]
                %565 = vst [vmem:[%s223 + $0x550] sm:$0xff] %v564
                %v566 = vld [vmem:[%s222 + $0xa98] sm:$0xff]
                %567 = vst [vmem:[%s223 + $0x558] sm:$0xff] %v566
                %v568 = vld [vmem:[%s222 + $0xac0] sm:$0xff]
                %569 = vst [vmem:[%s223 + $0x560] sm:$0xff] %v568
                %v570 = vld [vmem:[%s222 + $0xac8] sm:$0xff]
                %571 = vst [vmem:[%s223 + $0x568] sm:$0xff] %v570
                %v572 = vld [vmem:[%s222 + $0xad0] sm:$0xff]
                %573 = vst [vmem:[%s223 + $0x570] sm:$0xff] %v572
                %v574 = vld [vmem:[%s222 + $0xad8] sm:$0xff]
                %575 = vst [vmem:[%s223 + $0x578] sm:$0xff] %v574
                %v576 = vld [vmem:[%s222 + $0xb00] sm:$0xff]
                %577 = vst [vmem:[%s223 + $0x580] sm:$0xff] %v576
                %v578 = vld [vmem:[%s222 + $0xb08] sm:$0xff]
                %579 = vst [vmem:[%s223 + $0x588] sm:$0xff] %v578
                %v580 = vld [vmem:[%s222 + $0xb10] sm:$0xff]
                %581 = vst [vmem:[%s223 + $0x590] sm:$0xff] %v580
                %v582 = vld [vmem:[%s222 + $0xb18] sm:$0xff]
                %583 = vst [vmem:[%s223 + $0x598] sm:$0xff] %v582
                %v584 = vld [vmem:[%s222 + $0xb40] sm:$0xff]
                %585 = vst [vmem:[%s223 + $0x5a0] sm:$0xff] %v584
                %v586 = vld [vmem:[%s222 + $0xb48] sm:$0xff]
                %587 = vst [vmem:[%s223 + $0x5a8] sm:$0xff] %v586
                %v588 = vld [vmem:[%s222 + $0xb50] sm:$0xff]
                %589 = vst [vmem:[%s223 + $0x5b0] sm:$0xff] %v588
                %v590 = vld [vmem:[%s222 + $0xb58] sm:$0xff]
                %591 = vst [vmem:[%s223 + $0x5b8] sm:$0xff] %v590
                %v592 = vld [vmem:[%s222 + $0xb80] sm:$0xff]
                %593 = vst [vmem:[%s223 + $0x5c0] sm:$0xff] %v592
                %v594 = vld [vmem:[%s222 + $0xb88] sm:$0xff]
                %595 = vst [vmem:[%s223 + $0x5c8] sm:$0xff] %v594
                %v596 = vld [vmem:[%s222 + $0xb90] sm:$0xff]
                %597 = vst [vmem:[%s223 + $0x5d0] sm:$0xff] %v596
                %v598 = vld [vmem:[%s222 + $0xb98] sm:$0xff]
                %599 = vst [vmem:[%s223 + $0x5d8] sm:$0xff] %v598
                %v600 = vld [vmem:[%s222 + $0xbc0] sm:$0xff]
                %601 = vst [vmem:[%s223 + $0x5e0] sm:$0xff] %v600
                %v602 = vld [vmem:[%s222 + $0xbc8] sm:$0xff]
                %603 = vst [vmem:[%s223 + $0x5e8] sm:$0xff] %v602
                %v604 = vld [vmem:[%s222 + $0xbd0] sm:$0xff]
                %605 = vst [vmem:[%s223 + $0x5f0] sm:$0xff] %v604
                %v606 = vld [vmem:[%s222 + $0xbd8] sm:$0xff]
                %607 = vst [vmem:[%s223 + $0x5f8] sm:$0xff] %v606
                %v608 = vld [vmem:[%s222 + $0xc00] sm:$0xff]
                %609 = vst [vmem:[%s223 + $0x600] sm:$0xff] %v608
                %v610 = vld [vmem:[%s222 + $0xc08] sm:$0xff]
                %611 = vst [vmem:[%s223 + $0x608] sm:$0xff] %v610
                %v612 = vld [vmem:[%s222 + $0xc10] sm:$0xff]
                %613 = vst [vmem:[%s223 + $0x610] sm:$0xff] %v612
                %v614 = vld [vmem:[%s222 + $0xc18] sm:$0xff]
                %615 = vst [vmem:[%s223 + $0x618] sm:$0xff] %v614
                %v616 = vld [vmem:[%s222 + $0xc40] sm:$0xff]
                %617 = vst [vmem:[%s223 + $0x620] sm:$0xff] %v616
                %v618 = vld [vmem:[%s222 + $0xc48] sm:$0xff]
                %619 = vst [vmem:[%s223 + $0x628] sm:$0xff] %v618
                %v620 = vld [vmem:[%s222 + $0xc50] sm:$0xff]
                %621 = vst [vmem:[%s223 + $0x630] sm:$0xff] %v620
                %v622 = vld [vmem:[%s222 + $0xc58] sm:$0xff]
                %623 = vst [vmem:[%s223 + $0x638] sm:$0xff] %v622
                %v624 = vld [vmem:[%s222 + $0xc80] sm:$0xff]
                %625 = vst [vmem:[%s223 + $0x640] sm:$0xff] %v624
                %v626 = vld [vmem:[%s222 + $0xc88] sm:$0xff]
                %627 = vst [vmem:[%s223 + $0x648] sm:$0xff] %v626
                %v628 = vld [vmem:[%s222 + $0xc90] sm:$0xff]
                %629 = vst [vmem:[%s223 + $0x650] sm:$0xff] %v628
                %v630 = vld [vmem:[%s222 + $0xc98] sm:$0xff]
                %631 = vst [vmem:[%s223 + $0x658] sm:$0xff] %v630
                %v632 = vld [vmem:[%s222 + $0xcc0] sm:$0xff]
                %633 = vst [vmem:[%s223 + $0x660] sm:$0xff] %v632
                %v634 = vld [vmem:[%s222 + $0xcc8] sm:$0xff]
                %635 = vst [vmem:[%s223 + $0x668] sm:$0xff] %v634
                %v636 = vld [vmem:[%s222 + $0xcd0] sm:$0xff]
                %637 = vst [vmem:[%s223 + $0x670] sm:$0xff] %v636
                %v638 = vld [vmem:[%s222 + $0xcd8] sm:$0xff]
                %639 = vst [vmem:[%s223 + $0x678] sm:$0xff] %v638
                %v640 = vld [vmem:[%s222 + $0xd00] sm:$0xff]
                %641 = vst [vmem:[%s223 + $0x680] sm:$0xff] %v640
                %v642 = vld [vmem:[%s222 + $0xd08] sm:$0xff]
                %643 = vst [vmem:[%s223 + $0x688] sm:$0xff] %v642
                %v644 = vld [vmem:[%s222 + $0xd10] sm:$0xff]
                %645 = vst [vmem:[%s223 + $0x690] sm:$0xff] %v644
                %v646 = vld [vmem:[%s222 + $0xd18] sm:$0xff]
                %647 = vst [vmem:[%s223 + $0x698] sm:$0xff] %v646
                %v648 = vld [vmem:[%s222 + $0xd40] sm:$0xff]
                %649 = vst [vmem:[%s223 + $0x6a0] sm:$0xff] %v648
                %v650 = vld [vmem:[%s222 + $0xd48] sm:$0xff]
                %651 = vst [vmem:[%s223 + $0x6a8] sm:$0xff] %v650
                %v652 = vld [vmem:[%s222 + $0xd50] sm:$0xff]
                %653 = vst [vmem:[%s223 + $0x6b0] sm:$0xff] %v652
                %v654 = vld [vmem:[%s222 + $0xd58] sm:$0xff]
                %655 = vst [vmem:[%s223 + $0x6b8] sm:$0xff] %v654
                %v656 = vld [vmem:[%s222 + $0xd80] sm:$0xff]
                %657 = vst [vmem:[%s223 + $0x6c0] sm:$0xff] %v656
                %v658 = vld [vmem:[%s222 + $0xd88] sm:$0xff]
                %659 = vst [vmem:[%s223 + $0x6c8] sm:$0xff] %v658
                %v660 = vld [vmem:[%s222 + $0xd90] sm:$0xff]
                %661 = vst [vmem:[%s223 + $0x6d0] sm:$0xff] %v660
                %v662 = vld [vmem:[%s222 + $0xd98] sm:$0xff]
                %663 = vst [vmem:[%s223 + $0x6d8] sm:$0xff] %v662
                %v664 = vld [vmem:[%s222 + $0xdc0] sm:$0xff]
                %665 = vst [vmem:[%s223 + $0x6e0] sm:$0xff] %v664
                %v666 = vld [vmem:[%s222 + $0xdc8] sm:$0xff]
                %667 = vst [vmem:[%s223 + $0x6e8] sm:$0xff] %v666
                %v668 = vld [vmem:[%s222 + $0xdd0] sm:$0xff]
                %669 = vst [vmem:[%s223 + $0x6f0] sm:$0xff] %v668
                %v670 = vld [vmem:[%s222 + $0xdd8] sm:$0xff]
                %671 = vst [vmem:[%s223 + $0x6f8] sm:$0xff] %v670
                %v672 = vld [vmem:[%s222 + $0xe00] sm:$0xff]
                %673 = vst [vmem:[%s223 + $0x700] sm:$0xff] %v672
                %v674 = vld [vmem:[%s222 + $0xe08] sm:$0xff]
                %675 = vst [vmem:[%s223 + $0x708] sm:$0xff] %v674
                %v676 = vld [vmem:[%s222 + $0xe10] sm:$0xff]
                %677 = vst [vmem:[%s223 + $0x710] sm:$0xff] %v676
                %v678 = vld [vmem:[%s222 + $0xe18] sm:$0xff]
                %679 = vst [vmem:[%s223 + $0x718] sm:$0xff] %v678
                %v680 = vld [vmem:[%s222 + $0xe40] sm:$0xff]
                %681 = vst [vmem:[%s223 + $0x720] sm:$0xff] %v680
                %v682 = vld [vmem:[%s222 + $0xe48] sm:$0xff]
                %683 = vst [vmem:[%s223 + $0x728] sm:$0xff] %v682
                %v684 = vld [vmem:[%s222 + $0xe50] sm:$0xff]
                %685 = vst [vmem:[%s223 + $0x730] sm:$0xff] %v684
                %v686 = vld [vmem:[%s222 + $0xe58] sm:$0xff]
                %687 = vst [vmem:[%s223 + $0x738] sm:$0xff] %v686
                %v688 = vld [vmem:[%s222 + $0xe80] sm:$0xff]
                %689 = vst [vmem:[%s223 + $0x740] sm:$0xff] %v688
                %v690 = vld [vmem:[%s222 + $0xe88] sm:$0xff]
                %691 = vst [vmem:[%s223 + $0x748] sm:$0xff] %v690
                %v692 = vld [vmem:[%s222 + $0xe90] sm:$0xff]
                %693 = vst [vmem:[%s223 + $0x750] sm:$0xff] %v692
                %v694 = vld [vmem:[%s222 + $0xe98] sm:$0xff]
                %695 = vst [vmem:[%s223 + $0x758] sm:$0xff] %v694
                %v696 = vld [vmem:[%s222 + $0xec0] sm:$0xff]
                %697 = vst [vmem:[%s223 + $0x760] sm:$0xff] %v696
                %v698 = vld [vmem:[%s222 + $0xec8] sm:$0xff]
                %699 = vst [vmem:[%s223 + $0x768] sm:$0xff] %v698
                %v700 = vld [vmem:[%s222 + $0xed0] sm:$0xff]
                %701 = vst [vmem:[%s223 + $0x770] sm:$0xff] %v700
                %v702 = vld [vmem:[%s222 + $0xed8] sm:$0xff]
                %703 = vst [vmem:[%s223 + $0x778] sm:$0xff] %v702
                %v704 = vld [vmem:[%s222 + $0xf00] sm:$0xff]
                %705 = vst [vmem:[%s223 + $0x780] sm:$0xff] %v704
                %v706 = vld [vmem:[%s222 + $0xf08] sm:$0xff]
                %707 = vst [vmem:[%s223 + $0x788] sm:$0xff] %v706
                %v708 = vld [vmem:[%s222 + $0xf10] sm:$0xff]
                %709 = vst [vmem:[%s223 + $0x790] sm:$0xff] %v708
                %v710 = vld [vmem:[%s222 + $0xf18] sm:$0xff]
                %711 = vst [vmem:[%s223 + $0x798] sm:$0xff] %v710
                %v712 = vld [vmem:[%s222 + $0xf40] sm:$0xff]
                %713 = vst [vmem:[%s223 + $0x7a0] sm:$0xff] %v712
                %v714 = vld [vmem:[%s222 + $0xf48] sm:$0xff]
                %715 = vst [vmem:[%s223 + $0x7a8] sm:$0xff] %v714
                %v716 = vld [vmem:[%s222 + $0xf50] sm:$0xff]
                %717 = vst [vmem:[%s223 + $0x7b0] sm:$0xff] %v716
                %v718 = vld [vmem:[%s222 + $0xf58] sm:$0xff]
                %719 = vst [vmem:[%s223 + $0x7b8] sm:$0xff] %v718
                %v720 = vld [vmem:[%s222 + $0xf80] sm:$0xff]
                %721 = vst [vmem:[%s223 + $0x7c0] sm:$0xff] %v720
                %v722 = vld [vmem:[%s222 + $0xf88] sm:$0xff]
                %723 = vst [vmem:[%s223 + $0x7c8] sm:$0xff] %v722
                %v724 = vld [vmem:[%s222 + $0xf90] sm:$0xff]
                %725 = vst [vmem:[%s223 + $0x7d0] sm:$0xff] %v724
                %v726 = vld [vmem:[%s222 + $0xf98] sm:$0xff]
                %727 = vst [vmem:[%s223 + $0x7d8] sm:$0xff] %v726
                %v728 = vld [vmem:[%s222 + $0xfc0] sm:$0xff]
                %729 = vst [vmem:[%s223 + $0x7e0] sm:$0xff] %v728
                %v730 = vld [vmem:[%s222 + $0xfc8] sm:$0xff]
                %731 = vst [vmem:[%s223 + $0x7e8] sm:$0xff] %v730
                %v732 = vld [vmem:[%s222 + $0xfd0] sm:$0xff]
                %733 = vst [vmem:[%s223 + $0x7f0] sm:$0xff] %v732
                %v734 = vld [vmem:[%s222 + $0xfd8] sm:$0xff]
                %735 = vst [vmem:[%s223 + $0x7f8] sm:$0xff] %v734
                %v736 = vld [vmem:[%s222 + $0x1000] sm:$0xff]
                %737 = vst [vmem:[%s223 + $0x800] sm:$0xff] %v736
                %v738 = vld [vmem:[%s222 + $0x1008] sm:$0xff]
                %739 = vst [vmem:[%s223 + $0x808] sm:$0xff] %v738
                %v740 = vld [vmem:[%s222 + $0x1010] sm:$0xff]
                %741 = vst [vmem:[%s223 + $0x810] sm:$0xff] %v740
                %v742 = vld [vmem:[%s222 + $0x1018] sm:$0xff]
                %743 = vst [vmem:[%s223 + $0x818] sm:$0xff] %v742
                %v744 = vld [vmem:[%s222 + $0x1040] sm:$0xff]
                %745 = vst [vmem:[%s223 + $0x820] sm:$0xff] %v744
                %v746 = vld [vmem:[%s222 + $0x1048] sm:$0xff]
                %747 = vst [vmem:[%s223 + $0x828] sm:$0xff] %v746
                %v748 = vld [vmem:[%s222 + $0x1050] sm:$0xff]
                %749 = vst [vmem:[%s223 + $0x830] sm:$0xff] %v748
                %v750 = vld [vmem:[%s222 + $0x1058] sm:$0xff]
                %751 = vst [vmem:[%s223 + $0x838] sm:$0xff] %v750
                %v752 = vld [vmem:[%s222 + $0x1080] sm:$0xff]
                %753 = vst [vmem:[%s223 + $0x840] sm:$0xff] %v752
                %v754 = vld [vmem:[%s222 + $0x1088] sm:$0xff]
                %755 = vst [vmem:[%s223 + $0x848] sm:$0xff] %v754
                %v756 = vld [vmem:[%s222 + $0x1090] sm:$0xff]
                %757 = vst [vmem:[%s223 + $0x850] sm:$0xff] %v756
                %v758 = vld [vmem:[%s222 + $0x1098] sm:$0xff]
                %759 = vst [vmem:[%s223 + $0x858] sm:$0xff] %v758
                %v760 = vld [vmem:[%s222 + $0x10c0] sm:$0xff]
                %761 = vst [vmem:[%s223 + $0x860] sm:$0xff] %v760
                %v762 = vld [vmem:[%s222 + $0x10c8] sm:$0xff]
                %763 = vst [vmem:[%s223 + $0x868] sm:$0xff] %v762
                %v764 = vld [vmem:[%s222 + $0x10d0] sm:$0xff]
                %765 = vst [vmem:[%s223 + $0x870] sm:$0xff] %v764
                %v766 = vld [vmem:[%s222 + $0x10d8] sm:$0xff]
                %767 = vst [vmem:[%s223 + $0x878] sm:$0xff] %v766
                %v768 = vld [vmem:[%s222 + $0x1100] sm:$0xff]
                %769 = vst [vmem:[%s223 + $0x880] sm:$0xff] %v768
                %v770 = vld [vmem:[%s222 + $0x1108] sm:$0xff]
                %771 = vst [vmem:[%s223 + $0x888] sm:$0xff] %v770
                %v772 = vld [vmem:[%s222 + $0x1110] sm:$0xff]
                %773 = vst [vmem:[%s223 + $0x890] sm:$0xff] %v772
                %v774 = vld [vmem:[%s222 + $0x1118] sm:$0xff]
                %775 = vst [vmem:[%s223 + $0x898] sm:$0xff] %v774
                %v776 = vld [vmem:[%s222 + $0x1140] sm:$0xff]
                %777 = vst [vmem:[%s223 + $0x8a0] sm:$0xff] %v776
                %v778 = vld [vmem:[%s222 + $0x1148] sm:$0xff]
                %779 = vst [vmem:[%s223 + $0x8a8] sm:$0xff] %v778
                %v780 = vld [vmem:[%s222 + $0x1150] sm:$0xff]
                %781 = vst [vmem:[%s223 + $0x8b0] sm:$0xff] %v780
                %v782 = vld [vmem:[%s222 + $0x1158] sm:$0xff]
                %783 = vst [vmem:[%s223 + $0x8b8] sm:$0xff] %v782
                %v784 = vld [vmem:[%s222 + $0x1180] sm:$0xff]
                %785 = vst [vmem:[%s223 + $0x8c0] sm:$0xff] %v784
                %v786 = vld [vmem:[%s222 + $0x1188] sm:$0xff]
                %787 = vst [vmem:[%s223 + $0x8c8] sm:$0xff] %v786
                %v788 = vld [vmem:[%s222 + $0x1190] sm:$0xff]
                %789 = vst [vmem:[%s223 + $0x8d0] sm:$0xff] %v788
                %v790 = vld [vmem:[%s222 + $0x1198] sm:$0xff]
                %791 = vst [vmem:[%s223 + $0x8d8] sm:$0xff] %v790
                %v792 = vld [vmem:[%s222 + $0x11c0] sm:$0xff]
                %793 = vst [vmem:[%s223 + $0x8e0] sm:$0xff] %v792
                %v794 = vld [vmem:[%s222 + $0x11c8] sm:$0xff]
                %795 = vst [vmem:[%s223 + $0x8e8] sm:$0xff] %v794
                %v796 = vld [vmem:[%s222 + $0x11d0] sm:$0xff]
                %797 = vst [vmem:[%s223 + $0x8f0] sm:$0xff] %v796
                %v798 = vld [vmem:[%s222 + $0x11d8] sm:$0xff]
                %799 = vst [vmem:[%s223 + $0x8f8] sm:$0xff] %v798
                %v800 = vld [vmem:[%s222 + $0x1200] sm:$0xff]
                %801 = vst [vmem:[%s223 + $0x900] sm:$0xff] %v800
                %v802 = vld [vmem:[%s222 + $0x1208] sm:$0xff]
                %803 = vst [vmem:[%s223 + $0x908] sm:$0xff] %v802
                %v804 = vld [vmem:[%s222 + $0x1210] sm:$0xff]
                %805 = vst [vmem:[%s223 + $0x910] sm:$0xff] %v804
                %v806 = vld [vmem:[%s222 + $0x1218] sm:$0xff]
                %807 = vst [vmem:[%s223 + $0x918] sm:$0xff] %v806
                %v808 = vld [vmem:[%s222 + $0x1240] sm:$0xff]
                %809 = vst [vmem:[%s223 + $0x920] sm:$0xff] %v808
                %v810 = vld [vmem:[%s222 + $0x1248] sm:$0xff]
                %811 = vst [vmem:[%s223 + $0x928] sm:$0xff] %v810
                %v812 = vld [vmem:[%s222 + $0x1250] sm:$0xff]
                %813 = vst [vmem:[%s223 + $0x930] sm:$0xff] %v812
                %v814 = vld [vmem:[%s222 + $0x1258] sm:$0xff]
                %815 = vst [vmem:[%s223 + $0x938] sm:$0xff] %v814
                %v816 = vld [vmem:[%s222 + $0x1280] sm:$0xff]
                %817 = vst [vmem:[%s223 + $0x940] sm:$0xff] %v816
                %v818 = vld [vmem:[%s222 + $0x1288] sm:$0xff]
                %819 = vst [vmem:[%s223 + $0x948] sm:$0xff] %v818
                %v820 = vld [vmem:[%s222 + $0x1290] sm:$0xff]
                %821 = vst [vmem:[%s223 + $0x950] sm:$0xff] %v820
                %v822 = vld [vmem:[%s222 + $0x1298] sm:$0xff]
                %823 = vst [vmem:[%s223 + $0x958] sm:$0xff] %v822
                %v824 = vld [vmem:[%s222 + $0x12c0] sm:$0xff]
                %825 = vst [vmem:[%s223 + $0x960] sm:$0xff] %v824
                %v826 = vld [vmem:[%s222 + $0x12c8] sm:$0xff]
                %827 = vst [vmem:[%s223 + $0x968] sm:$0xff] %v826
                %v828 = vld [vmem:[%s222 + $0x12d0] sm:$0xff]
                %829 = vst [vmem:[%s223 + $0x970] sm:$0xff] %v828
                %v830 = vld [vmem:[%s222 + $0x12d8] sm:$0xff]
                %831 = vst [vmem:[%s223 + $0x978] sm:$0xff] %v830
                %v832 = vld [vmem:[%s222 + $0x1300] sm:$0xff]
                %833 = vst [vmem:[%s223 + $0x980] sm:$0xff] %v832
                %v834 = vld [vmem:[%s222 + $0x1308] sm:$0xff]
                %835 = vst [vmem:[%s223 + $0x988] sm:$0xff] %v834
                %v836 = vld [vmem:[%s222 + $0x1310] sm:$0xff]
                %837 = vst [vmem:[%s223 + $0x990] sm:$0xff] %v836
                %v838 = vld [vmem:[%s222 + $0x1318] sm:$0xff]
                %839 = vst [vmem:[%s223 + $0x998] sm:$0xff] %v838
                %v840 = vld [vmem:[%s222 + $0x1340] sm:$0xff]
                %841 = vst [vmem:[%s223 + $0x9a0] sm:$0xff] %v840
                %v842 = vld [vmem:[%s222 + $0x1348] sm:$0xff]
                %843 = vst [vmem:[%s223 + $0x9a8] sm:$0xff] %v842
                %v844 = vld [vmem:[%s222 + $0x1350] sm:$0xff]
                %845 = vst [vmem:[%s223 + $0x9b0] sm:$0xff] %v844
                %v846 = vld [vmem:[%s222 + $0x1358] sm:$0xff]
                %847 = vst [vmem:[%s223 + $0x9b8] sm:$0xff] %v846
                %v848 = vld [vmem:[%s222 + $0x1380] sm:$0xff]
                %849 = vst [vmem:[%s223 + $0x9c0] sm:$0xff] %v848
                %v850 = vld [vmem:[%s222 + $0x1388] sm:$0xff]
                %851 = vst [vmem:[%s223 + $0x9c8] sm:$0xff] %v850
                %v852 = vld [vmem:[%s222 + $0x1390] sm:$0xff]
                %853 = vst [vmem:[%s223 + $0x9d0] sm:$0xff] %v852
                %v854 = vld [vmem:[%s222 + $0x1398] sm:$0xff]
                %855 = vst [vmem:[%s223 + $0x9d8] sm:$0xff] %v854
                %v856 = vld [vmem:[%s222 + $0x13c0] sm:$0xff]
                %857 = vst [vmem:[%s223 + $0x9e0] sm:$0xff] %v856
                %v858 = vld [vmem:[%s222 + $0x13c8] sm:$0xff]
                %859 = vst [vmem:[%s223 + $0x9e8] sm:$0xff] %v858
                %v860 = vld [vmem:[%s222 + $0x13d0] sm:$0xff]
                %861 = vst [vmem:[%s223 + $0x9f0] sm:$0xff] %v860
                %v862 = vld [vmem:[%s222 + $0x13d8] sm:$0xff]
                %863 = vst [vmem:[%s223 + $0x9f8] sm:$0xff] %v862
                %v864 = vld [vmem:[%s222 + $0x1400] sm:$0xff]
                %865 = vst [vmem:[%s223 + $0xa00] sm:$0xff] %v864
                %v866 = vld [vmem:[%s222 + $0x1408] sm:$0xff]
                %867 = vst [vmem:[%s223 + $0xa08] sm:$0xff] %v866
                %v868 = vld [vmem:[%s222 + $0x1410] sm:$0xff]
                %869 = vst [vmem:[%s223 + $0xa10] sm:$0xff] %v868
                %v870 = vld [vmem:[%s222 + $0x1418] sm:$0xff]
                %871 = vst [vmem:[%s223 + $0xa18] sm:$0xff] %v870
                %v872 = vld [vmem:[%s222 + $0x1440] sm:$0xff]
                %873 = vst [vmem:[%s223 + $0xa20] sm:$0xff] %v872
                %v874 = vld [vmem:[%s222 + $0x1448] sm:$0xff]
                %875 = vst [vmem:[%s223 + $0xa28] sm:$0xff] %v874
                %v876 = vld [vmem:[%s222 + $0x1450] sm:$0xff]
                %877 = vst [vmem:[%s223 + $0xa30] sm:$0xff] %v876
                %v878 = vld [vmem:[%s222 + $0x1458] sm:$0xff]
                %879 = vst [vmem:[%s223 + $0xa38] sm:$0xff] %v878
                %v880 = vld [vmem:[%s222 + $0x1480] sm:$0xff]
                %881 = vst [vmem:[%s223 + $0xa40] sm:$0xff] %v880
                %v882 = vld [vmem:[%s222 + $0x1488] sm:$0xff]
                %883 = vst [vmem:[%s223 + $0xa48] sm:$0xff] %v882
                %v884 = vld [vmem:[%s222 + $0x1490] sm:$0xff]
                %885 = vst [vmem:[%s223 + $0xa50] sm:$0xff] %v884
                %v886 = vld [vmem:[%s222 + $0x1498] sm:$0xff]
                %887 = vst [vmem:[%s223 + $0xa58] sm:$0xff] %v886
                %v888 = vld [vmem:[%s222 + $0x14c0] sm:$0xff]
                %889 = vst [vmem:[%s223 + $0xa60] sm:$0xff] %v888
                %v890 = vld [vmem:[%s222 + $0x14c8] sm:$0xff]
                %891 = vst [vmem:[%s223 + $0xa68] sm:$0xff] %v890
                %v892 = vld [vmem:[%s222 + $0x14d0] sm:$0xff]
                %893 = vst [vmem:[%s223 + $0xa70] sm:$0xff] %v892
                %v894 = vld [vmem:[%s222 + $0x14d8] sm:$0xff]
                %895 = vst [vmem:[%s223 + $0xa78] sm:$0xff] %v894
                %v896 = vld [vmem:[%s222 + $0x1500] sm:$0xff]
                %897 = vst [vmem:[%s223 + $0xa80] sm:$0xff] %v896
                %v898 = vld [vmem:[%s222 + $0x1508] sm:$0xff]
                %899 = vst [vmem:[%s223 + $0xa88] sm:$0xff] %v898
                %v900 = vld [vmem:[%s222 + $0x1510] sm:$0xff]
                %901 = vst [vmem:[%s223 + $0xa90] sm:$0xff] %v900
                %v902 = vld [vmem:[%s222 + $0x1518] sm:$0xff]
                %903 = vst [vmem:[%s223 + $0xa98] sm:$0xff] %v902
                %v904 = vld [vmem:[%s222 + $0x1540] sm:$0xff]
                %905 = vst [vmem:[%s223 + $0xaa0] sm:$0xff] %v904
                %v906 = vld [vmem:[%s222 + $0x1548] sm:$0xff]
                %907 = vst [vmem:[%s223 + $0xaa8] sm:$0xff] %v906
                %v908 = vld [vmem:[%s222 + $0x1550] sm:$0xff]
                %909 = vst [vmem:[%s223 + $0xab0] sm:$0xff] %v908
                %v910 = vld [vmem:[%s222 + $0x1558] sm:$0xff]
                %911 = vst [vmem:[%s223 + $0xab8] sm:$0xff] %v910
                %v912 = vld [vmem:[%s222 + $0x1580] sm:$0xff]
                %913 = vst [vmem:[%s223 + $0xac0] sm:$0xff] %v912
                %v914 = vld [vmem:[%s222 + $0x1588] sm:$0xff]
                %915 = vst [vmem:[%s223 + $0xac8] sm:$0xff] %v914
                %v916 = vld [vmem:[%s222 + $0x1590] sm:$0xff]
                %917 = vst [vmem:[%s223 + $0xad0] sm:$0xff] %v916
                %v918 = vld [vmem:[%s222 + $0x1598] sm:$0xff]
                %919 = vst [vmem:[%s223 + $0xad8] sm:$0xff] %v918
                %v920 = vld [vmem:[%s222 + $0x15c0] sm:$0xff]
                %921 = vst [vmem:[%s223 + $0xae0] sm:$0xff] %v920
                %v922 = vld [vmem:[%s222 + $0x15c8] sm:$0xff]
                %923 = vst [vmem:[%s223 + $0xae8] sm:$0xff] %v922
                %v924 = vld [vmem:[%s222 + $0x15d0] sm:$0xff]
                %925 = vst [vmem:[%s223 + $0xaf0] sm:$0xff] %v924
                %v926 = vld [vmem:[%s222 + $0x15d8] sm:$0xff]
                %927 = vst [vmem:[%s223 + $0xaf8] sm:$0xff] %v926
                %v928 = vld [vmem:[%s222 + $0x1600] sm:$0xff]
                %929 = vst [vmem:[%s223 + $0xb00] sm:$0xff] %v928
                %v930 = vld [vmem:[%s222 + $0x1608] sm:$0xff]
                %931 = vst [vmem:[%s223 + $0xb08] sm:$0xff] %v930
                %v932 = vld [vmem:[%s222 + $0x1610] sm:$0xff]
                %933 = vst [vmem:[%s223 + $0xb10] sm:$0xff] %v932
                %v934 = vld [vmem:[%s222 + $0x1618] sm:$0xff]
                %935 = vst [vmem:[%s223 + $0xb18] sm:$0xff] %v934
                %v936 = vld [vmem:[%s222 + $0x1640] sm:$0xff]
                %937 = vst [vmem:[%s223 + $0xb20] sm:$0xff] %v936
                %v938 = vld [vmem:[%s222 + $0x1648] sm:$0xff]
                %939 = vst [vmem:[%s223 + $0xb28] sm:$0xff] %v938
                %v940 = vld [vmem:[%s222 + $0x1650] sm:$0xff]
                %941 = vst [vmem:[%s223 + $0xb30] sm:$0xff] %v940
                %v942 = vld [vmem:[%s222 + $0x1658] sm:$0xff]
                %943 = vst [vmem:[%s223 + $0xb38] sm:$0xff] %v942
                %v944 = vld [vmem:[%s222 + $0x1680] sm:$0xff]
                %945 = vst [vmem:[%s223 + $0xb40] sm:$0xff] %v944
                %v946 = vld [vmem:[%s222 + $0x1688] sm:$0xff]
                %947 = vst [vmem:[%s223 + $0xb48] sm:$0xff] %v946
                %v948 = vld [vmem:[%s222 + $0x1690] sm:$0xff]
                %949 = vst [vmem:[%s223 + $0xb50] sm:$0xff] %v948
                %v950 = vld [vmem:[%s222 + $0x1698] sm:$0xff]
                %951 = vst [vmem:[%s223 + $0xb58] sm:$0xff] %v950
                %v952 = vld [vmem:[%s222 + $0x16c0] sm:$0xff]
                %953 = vst [vmem:[%s223 + $0xb60] sm:$0xff] %v952
                %v954 = vld [vmem:[%s222 + $0x16c8] sm:$0xff]
                %955 = vst [vmem:[%s223 + $0xb68] sm:$0xff] %v954
                %v956 = vld [vmem:[%s222 + $0x16d0] sm:$0xff]
                %957 = vst [vmem:[%s223 + $0xb70] sm:$0xff] %v956
                %v958 = vld [vmem:[%s222 + $0x16d8] sm:$0xff]
                %959 = vst [vmem:[%s223 + $0xb78] sm:$0xff] %v958
                %v960 = vld [vmem:[%s222 + $0x1700] sm:$0xff]
                %961 = vst [vmem:[%s223 + $0xb80] sm:$0xff] %v960
                %v962 = vld [vmem:[%s222 + $0x1708] sm:$0xff]
                %963 = vst [vmem:[%s223 + $0xb88] sm:$0xff] %v962
                %v964 = vld [vmem:[%s222 + $0x1710] sm:$0xff]
                %965 = vst [vmem:[%s223 + $0xb90] sm:$0xff] %v964
                %v966 = vld [vmem:[%s222 + $0x1718] sm:$0xff]
                %967 = vst [vmem:[%s223 + $0xb98] sm:$0xff] %v966
                %v968 = vld [vmem:[%s222 + $0x1740] sm:$0xff]
                %969 = vst [vmem:[%s223 + $0xba0] sm:$0xff] %v968
                %v970 = vld [vmem:[%s222 + $0x1748] sm:$0xff]
                %971 = vst [vmem:[%s223 + $0xba8] sm:$0xff] %v970
                %v972 = vld [vmem:[%s222 + $0x1750] sm:$0xff]
                %973 = vst [vmem:[%s223 + $0xbb0] sm:$0xff] %v972
                %v974 = vld [vmem:[%s222 + $0x1758] sm:$0xff]
                %975 = vst [vmem:[%s223 + $0xbb8] sm:$0xff] %v974
                %v976 = vld [vmem:[%s222 + $0x1780] sm:$0xff]
                %977 = vst [vmem:[%s223 + $0xbc0] sm:$0xff] %v976
                %v978 = vld [vmem:[%s222 + $0x1788] sm:$0xff]
                %979 = vst [vmem:[%s223 + $0xbc8] sm:$0xff] %v978
                %v980 = vld [vmem:[%s222 + $0x1790] sm:$0xff]
                %981 = vst [vmem:[%s223 + $0xbd0] sm:$0xff] %v980
                %v982 = vld [vmem:[%s222 + $0x1798] sm:$0xff]
                %983 = vst [vmem:[%s223 + $0xbd8] sm:$0xff] %v982
                %v984 = vld [vmem:[%s222 + $0x17c0] sm:$0xff]
                %985 = vst [vmem:[%s223 + $0xbe0] sm:$0xff] %v984
                %v986 = vld [vmem:[%s222 + $0x17c8] sm:$0xff]
                %987 = vst [vmem:[%s223 + $0xbe8] sm:$0xff] %v986
                %v988 = vld [vmem:[%s222 + $0x17d0] sm:$0xff]
                %989 = vst [vmem:[%s223 + $0xbf0] sm:$0xff] %v988
                %v990 = vld [vmem:[%s222 + $0x17d8] sm:$0xff]
                %991 = vst [vmem:[%s223 + $0xbf8] sm:$0xff] %v990
                %v992 = vld [vmem:[%s222 + $0x1800] sm:$0xff]
                %993 = vst [vmem:[%s223 + $0xc00] sm:$0xff] %v992
                %v994 = vld [vmem:[%s222 + $0x1808] sm:$0xff]
                %995 = vst [vmem:[%s223 + $0xc08] sm:$0xff] %v994
                %v996 = vld [vmem:[%s222 + $0x1810] sm:$0xff]
                %997 = vst [vmem:[%s223 + $0xc10] sm:$0xff] %v996
                %v998 = vld [vmem:[%s222 + $0x1818] sm:$0xff]
                %999 = vst [vmem:[%s223 + $0xc18] sm:$0xff] %v998
                %v1000 = vld [vmem:[%s222 + $0x1840] sm:$0xff]
                %1001 = vst [vmem:[%s223 + $0xc20] sm:$0xff] %v1000
                %v1002 = vld [vmem:[%s222 + $0x1848] sm:$0xff]
                %1003 = vst [vmem:[%s223 + $0xc28] sm:$0xff] %v1002
                %v1004 = vld [vmem:[%s222 + $0x1850] sm:$0xff]
                %1005 = vst [vmem:[%s223 + $0xc30] sm:$0xff] %v1004
                %v1006 = vld [vmem:[%s222 + $0x1858] sm:$0xff]
                %1007 = vst [vmem:[%s223 + $0xc38] sm:$0xff] %v1006
                %v1008 = vld [vmem:[%s222 + $0x1880] sm:$0xff]
                %1009 = vst [vmem:[%s223 + $0xc40] sm:$0xff] %v1008
                %v1010 = vld [vmem:[%s222 + $0x1888] sm:$0xff]
                %1011 = vst [vmem:[%s223 + $0xc48] sm:$0xff] %v1010
                %v1012 = vld [vmem:[%s222 + $0x1890] sm:$0xff]
                %1013 = vst [vmem:[%s223 + $0xc50] sm:$0xff] %v1012
                %v1014 = vld [vmem:[%s222 + $0x1898] sm:$0xff]
                %1015 = vst [vmem:[%s223 + $0xc58] sm:$0xff] %v1014
                %v1016 = vld [vmem:[%s222 + $0x18c0] sm:$0xff]
                %1017 = vst [vmem:[%s223 + $0xc60] sm:$0xff] %v1016
                %v1018 = vld [vmem:[%s222 + $0x18c8] sm:$0xff]
                %1019 = vst [vmem:[%s223 + $0xc68] sm:$0xff] %v1018
                %v1020 = vld [vmem:[%s222 + $0x18d0] sm:$0xff]
                %1021 = vst [vmem:[%s223 + $0xc70] sm:$0xff] %v1020
                %v1022 = vld [vmem:[%s222 + $0x18d8] sm:$0xff]
                %1023 = vst [vmem:[%s223 + $0xc78] sm:$0xff] %v1022
                %v1024 = vld [vmem:[%s222 + $0x1900] sm:$0xff]
                %1025 = vst [vmem:[%s223 + $0xc80] sm:$0xff] %v1024
                %v1026 = vld [vmem:[%s222 + $0x1908] sm:$0xff]
                %1027 = vst [vmem:[%s223 + $0xc88] sm:$0xff] %v1026
                %v1028 = vld [vmem:[%s222 + $0x1910] sm:$0xff]
                %1029 = vst [vmem:[%s223 + $0xc90] sm:$0xff] %v1028
                %v1030 = vld [vmem:[%s222 + $0x1918] sm:$0xff]
                %1031 = vst [vmem:[%s223 + $0xc98] sm:$0xff] %v1030
                %v1032 = vld [vmem:[%s222 + $0x1940] sm:$0xff]
                %1033 = vst [vmem:[%s223 + $0xca0] sm:$0xff] %v1032
                %v1034 = vld [vmem:[%s222 + $0x1948] sm:$0xff]
                %1035 = vst [vmem:[%s223 + $0xca8] sm:$0xff] %v1034
                %v1036 = vld [vmem:[%s222 + $0x1950] sm:$0xff]
                %1037 = vst [vmem:[%s223 + $0xcb0] sm:$0xff] %v1036
                %v1038 = vld [vmem:[%s222 + $0x1958] sm:$0xff]
                %1039 = vst [vmem:[%s223 + $0xcb8] sm:$0xff] %v1038
                %v1040 = vld [vmem:[%s222 + $0x1980] sm:$0xff]
                %1041 = vst [vmem:[%s223 + $0xcc0] sm:$0xff] %v1040
                %v1042 = vld [vmem:[%s222 + $0x1988] sm:$0xff]
                %1043 = vst [vmem:[%s223 + $0xcc8] sm:$0xff] %v1042
                %v1044 = vld [vmem:[%s222 + $0x1990] sm:$0xff]
                %1045 = vst [vmem:[%s223 + $0xcd0] sm:$0xff] %v1044
                %v1046 = vld [vmem:[%s222 + $0x1998] sm:$0xff]
                %1047 = vst [vmem:[%s223 + $0xcd8] sm:$0xff] %v1046
                %v1048 = vld [vmem:[%s222 + $0x19c0] sm:$0xff]
                %1049 = vst [vmem:[%s223 + $0xce0] sm:$0xff] %v1048
                %v1050 = vld [vmem:[%s222 + $0x19c8] sm:$0xff]
                %1051 = vst [vmem:[%s223 + $0xce8] sm:$0xff] %v1050
                %v1052 = vld [vmem:[%s222 + $0x19d0] sm:$0xff]
                %1053 = vst [vmem:[%s223 + $0xcf0] sm:$0xff] %v1052
                %v1054 = vld [vmem:[%s222 + $0x19d8] sm:$0xff]
                %1055 = vst [vmem:[%s223 + $0xcf8] sm:$0xff] %v1054
                %v1056 = vld [vmem:[%s222 + $0x1a00] sm:$0xff]
                %1057 = vst [vmem:[%s223 + $0xd00] sm:$0xff] %v1056
                %v1058 = vld [vmem:[%s222 + $0x1a08] sm:$0xff]
                %1059 = vst [vmem:[%s223 + $0xd08] sm:$0xff] %v1058
                %v1060 = vld [vmem:[%s222 + $0x1a10] sm:$0xff]
                %1061 = vst [vmem:[%s223 + $0xd10] sm:$0xff] %v1060
                %v1062 = vld [vmem:[%s222 + $0x1a18] sm:$0xff]
                %1063 = vst [vmem:[%s223 + $0xd18] sm:$0xff] %v1062
                %v1064 = vld [vmem:[%s222 + $0x1a40] sm:$0xff]
                %1065 = vst [vmem:[%s223 + $0xd20] sm:$0xff] %v1064
                %v1066 = vld [vmem:[%s222 + $0x1a48] sm:$0xff]
                %1067 = vst [vmem:[%s223 + $0xd28] sm:$0xff] %v1066
                %v1068 = vld [vmem:[%s222 + $0x1a50] sm:$0xff]
                %1069 = vst [vmem:[%s223 + $0xd30] sm:$0xff] %v1068
                %v1070 = vld [vmem:[%s222 + $0x1a58] sm:$0xff]
                %1071 = vst [vmem:[%s223 + $0xd38] sm:$0xff] %v1070
                %v1072 = vld [vmem:[%s222 + $0x1a80] sm:$0xff]
                %1073 = vst [vmem:[%s223 + $0xd40] sm:$0xff] %v1072
                %v1074 = vld [vmem:[%s222 + $0x1a88] sm:$0xff]
                %1075 = vst [vmem:[%s223 + $0xd48] sm:$0xff] %v1074
                %v1076 = vld [vmem:[%s222 + $0x1a90] sm:$0xff]
                %1077 = vst [vmem:[%s223 + $0xd50] sm:$0xff] %v1076
                %v1078 = vld [vmem:[%s222 + $0x1a98] sm:$0xff]
                %1079 = vst [vmem:[%s223 + $0xd58] sm:$0xff] %v1078
                %v1080 = vld [vmem:[%s222 + $0x1ac0] sm:$0xff]
                %1081 = vst [vmem:[%s223 + $0xd60] sm:$0xff] %v1080
                %v1082 = vld [vmem:[%s222 + $0x1ac8] sm:$0xff]
                %1083 = vst [vmem:[%s223 + $0xd68] sm:$0xff] %v1082
                %v1084 = vld [vmem:[%s222 + $0x1ad0] sm:$0xff]
                %1085 = vst [vmem:[%s223 + $0xd70] sm:$0xff] %v1084
                %v1086 = vld [vmem:[%s222 + $0x1ad8] sm:$0xff]
                %1087 = vst [vmem:[%s223 + $0xd78] sm:$0xff] %v1086
                %v1088 = vld [vmem:[%s222 + $0x1b00] sm:$0xff]
                %1089 = vst [vmem:[%s223 + $0xd80] sm:$0xff] %v1088
                %v1090 = vld [vmem:[%s222 + $0x1b08] sm:$0xff]
                %1091 = vst [vmem:[%s223 + $0xd88] sm:$0xff] %v1090
                %v1092 = vld [vmem:[%s222 + $0x1b10] sm:$0xff]
                %1093 = vst [vmem:[%s223 + $0xd90] sm:$0xff] %v1092
                %v1094 = vld [vmem:[%s222 + $0x1b18] sm:$0xff]
                %1095 = vst [vmem:[%s223 + $0xd98] sm:$0xff] %v1094
                %v1096 = vld [vmem:[%s222 + $0x1b40] sm:$0xff]
                %1097 = vst [vmem:[%s223 + $0xda0] sm:$0xff] %v1096
                %v1098 = vld [vmem:[%s222 + $0x1b48] sm:$0xff]
                %1099 = vst [vmem:[%s223 + $0xda8] sm:$0xff] %v1098
                %v1100 = vld [vmem:[%s222 + $0x1b50] sm:$0xff]
                %1101 = vst [vmem:[%s223 + $0xdb0] sm:$0xff] %v1100
                %v1102 = vld [vmem:[%s222 + $0x1b58] sm:$0xff]
                %1103 = vst [vmem:[%s223 + $0xdb8] sm:$0xff] %v1102
                %v1104 = vld [vmem:[%s222 + $0x1b80] sm:$0xff]
                %1105 = vst [vmem:[%s223 + $0xdc0] sm:$0xff] %v1104
                %v1106 = vld [vmem:[%s222 + $0x1b88] sm:$0xff]
                %1107 = vst [vmem:[%s223 + $0xdc8] sm:$0xff] %v1106
                %v1108 = vld [vmem:[%s222 + $0x1b90] sm:$0xff]
                %1109 = vst [vmem:[%s223 + $0xdd0] sm:$0xff] %v1108
                %v1110 = vld [vmem:[%s222 + $0x1b98] sm:$0xff]
                %1111 = vst [vmem:[%s223 + $0xdd8] sm:$0xff] %v1110
                %v1112 = vld [vmem:[%s222 + $0x1bc0] sm:$0xff]
                %1113 = vst [vmem:[%s223 + $0xde0] sm:$0xff] %v1112
                %v1114 = vld [vmem:[%s222 + $0x1bc8] sm:$0xff]
                %1115 = vst [vmem:[%s223 + $0xde8] sm:$0xff] %v1114
                %v1116 = vld [vmem:[%s222 + $0x1bd0] sm:$0xff]
                %1117 = vst [vmem:[%s223 + $0xdf0] sm:$0xff] %v1116
                %v1118 = vld [vmem:[%s222 + $0x1bd8] sm:$0xff]
                %1119 = vst [vmem:[%s223 + $0xdf8] sm:$0xff] %v1118
                %v1120 = vld [vmem:[%s222 + $0x1c00] sm:$0xff]
                %1121 = vst [vmem:[%s223 + $0xe00] sm:$0xff] %v1120
                %v1122 = vld [vmem:[%s222 + $0x1c08] sm:$0xff]
                %1123 = vst [vmem:[%s223 + $0xe08] sm:$0xff] %v1122
                %v1124 = vld [vmem:[%s222 + $0x1c10] sm:$0xff]
                %1125 = vst [vmem:[%s223 + $0xe10] sm:$0xff] %v1124
                %v1126 = vld [vmem:[%s222 + $0x1c18] sm:$0xff]
                %1127 = vst [vmem:[%s223 + $0xe18] sm:$0xff] %v1126
                %v1128 = vld [vmem:[%s222 + $0x1c40] sm:$0xff]
                %1129 = vst [vmem:[%s223 + $0xe20] sm:$0xff] %v1128
                %v1130 = vld [vmem:[%s222 + $0x1c48] sm:$0xff]
                %1131 = vst [vmem:[%s223 + $0xe28] sm:$0xff] %v1130
                %v1132 = vld [vmem:[%s222 + $0x1c50] sm:$0xff]
                %1133 = vst [vmem:[%s223 + $0xe30] sm:$0xff] %v1132
                %v1134 = vld [vmem:[%s222 + $0x1c58] sm:$0xff]
                %1135 = vst [vmem:[%s223 + $0xe38] sm:$0xff] %v1134
                %v1136 = vld [vmem:[%s222 + $0x1c80] sm:$0xff]
                %1137 = vst [vmem:[%s223 + $0xe40] sm:$0xff] %v1136
                %v1138 = vld [vmem:[%s222 + $0x1c88] sm:$0xff]
                %1139 = vst [vmem:[%s223 + $0xe48] sm:$0xff] %v1138
                %v1140 = vld [vmem:[%s222 + $0x1c90] sm:$0xff]
                %1141 = vst [vmem:[%s223 + $0xe50] sm:$0xff] %v1140
                %v1142 = vld [vmem:[%s222 + $0x1c98] sm:$0xff]
                %1143 = vst [vmem:[%s223 + $0xe58] sm:$0xff] %v1142
                %v1144 = vld [vmem:[%s222 + $0x1cc0] sm:$0xff]
                %1145 = vst [vmem:[%s223 + $0xe60] sm:$0xff] %v1144
                %v1146 = vld [vmem:[%s222 + $0x1cc8] sm:$0xff]
                %1147 = vst [vmem:[%s223 + $0xe68] sm:$0xff] %v1146
                %v1148 = vld [vmem:[%s222 + $0x1cd0] sm:$0xff]
                %1149 = vst [vmem:[%s223 + $0xe70] sm:$0xff] %v1148
                %v1150 = vld [vmem:[%s222 + $0x1cd8] sm:$0xff]
                %1151 = vst [vmem:[%s223 + $0xe78] sm:$0xff] %v1150
                %v1152 = vld [vmem:[%s222 + $0x1d00] sm:$0xff]
                %1153 = vst [vmem:[%s223 + $0xe80] sm:$0xff] %v1152
                %v1154 = vld [vmem:[%s222 + $0x1d08] sm:$0xff]
                %1155 = vst [vmem:[%s223 + $0xe88] sm:$0xff] %v1154
                %v1156 = vld [vmem:[%s222 + $0x1d10] sm:$0xff]
                %1157 = vst [vmem:[%s223 + $0xe90] sm:$0xff] %v1156
                %v1158 = vld [vmem:[%s222 + $0x1d18] sm:$0xff]
                %1159 = vst [vmem:[%s223 + $0xe98] sm:$0xff] %v1158
                %v1160 = vld [vmem:[%s222 + $0x1d40] sm:$0xff]
                %1161 = vst [vmem:[%s223 + $0xea0] sm:$0xff] %v1160
                %v1162 = vld [vmem:[%s222 + $0x1d48] sm:$0xff]
                %1163 = vst [vmem:[%s223 + $0xea8] sm:$0xff] %v1162
                %v1164 = vld [vmem:[%s222 + $0x1d50] sm:$0xff]
                %1165 = vst [vmem:[%s223 + $0xeb0] sm:$0xff] %v1164
                %v1166 = vld [vmem:[%s222 + $0x1d58] sm:$0xff]
                %1167 = vst [vmem:[%s223 + $0xeb8] sm:$0xff] %v1166
                %v1168 = vld [vmem:[%s222 + $0x1d80] sm:$0xff]
                %1169 = vst [vmem:[%s223 + $0xec0] sm:$0xff] %v1168
                %v1170 = vld [vmem:[%s222 + $0x1d88] sm:$0xff]
                %1171 = vst [vmem:[%s223 + $0xec8] sm:$0xff] %v1170
                %v1172 = vld [vmem:[%s222 + $0x1d90] sm:$0xff]
                %1173 = vst [vmem:[%s223 + $0xed0] sm:$0xff] %v1172
                %v1174 = vld [vmem:[%s222 + $0x1d98] sm:$0xff]
                %1175 = vst [vmem:[%s223 + $0xed8] sm:$0xff] %v1174
                %v1176 = vld [vmem:[%s222 + $0x1dc0] sm:$0xff]
                %1177 = vst [vmem:[%s223 + $0xee0] sm:$0xff] %v1176
                %v1178 = vld [vmem:[%s222 + $0x1dc8] sm:$0xff]
                %1179 = vst [vmem:[%s223 + $0xee8] sm:$0xff] %v1178
                %v1180 = vld [vmem:[%s222 + $0x1dd0] sm:$0xff]
                %1181 = vst [vmem:[%s223 + $0xef0] sm:$0xff] %v1180
                %v1182 = vld [vmem:[%s222 + $0x1dd8] sm:$0xff]
                %1183 = vst [vmem:[%s223 + $0xef8] sm:$0xff] %v1182
                %v1184 = vld [vmem:[%s222 + $0x1e00] sm:$0xff]
                %1185 = vst [vmem:[%s223 + $0xf00] sm:$0xff] %v1184
                %v1186 = vld [vmem:[%s222 + $0x1e08] sm:$0xff]
                %1187 = vst [vmem:[%s223 + $0xf08] sm:$0xff] %v1186
                %v1188 = vld [vmem:[%s222 + $0x1e10] sm:$0xff]
                %1189 = vst [vmem:[%s223 + $0xf10] sm:$0xff] %v1188
                %v1190 = vld [vmem:[%s222 + $0x1e18] sm:$0xff]
                %1191 = vst [vmem:[%s223 + $0xf18] sm:$0xff] %v1190
                %v1192 = vld [vmem:[%s222 + $0x1e40] sm:$0xff]
                %1193 = vst [vmem:[%s223 + $0xf20] sm:$0xff] %v1192
                %v1194 = vld [vmem:[%s222 + $0x1e48] sm:$0xff]
                %1195 = vst [vmem:[%s223 + $0xf28] sm:$0xff] %v1194
                %v1196 = vld [vmem:[%s222 + $0x1e50] sm:$0xff]
                %1197 = vst [vmem:[%s223 + $0xf30] sm:$0xff] %v1196
                %v1198 = vld [vmem:[%s222 + $0x1e58] sm:$0xff]
                %1199 = vst [vmem:[%s223 + $0xf38] sm:$0xff] %v1198
                %v1200 = vld [vmem:[%s222 + $0x1e80] sm:$0xff]
                %1201 = vst [vmem:[%s223 + $0xf40] sm:$0xff] %v1200
                %v1202 = vld [vmem:[%s222 + $0x1e88] sm:$0xff]
                %1203 = vst [vmem:[%s223 + $0xf48] sm:$0xff] %v1202
                %v1204 = vld [vmem:[%s222 + $0x1e90] sm:$0xff]
                %1205 = vst [vmem:[%s223 + $0xf50] sm:$0xff] %v1204
                %v1206 = vld [vmem:[%s222 + $0x1e98] sm:$0xff]
                %1207 = vst [vmem:[%s223 + $0xf58] sm:$0xff] %v1206
                %v1208 = vld [vmem:[%s222 + $0x1ec0] sm:$0xff]
                %1209 = vst [vmem:[%s223 + $0xf60] sm:$0xff] %v1208
                %v1210 = vld [vmem:[%s222 + $0x1ec8] sm:$0xff]
                %1211 = vst [vmem:[%s223 + $0xf68] sm:$0xff] %v1210
                %v1212 = vld [vmem:[%s222 + $0x1ed0] sm:$0xff]
                %1213 = vst [vmem:[%s223 + $0xf70] sm:$0xff] %v1212
                %v1214 = vld [vmem:[%s222 + $0x1ed8] sm:$0xff]
                %1215 = vst [vmem:[%s223 + $0xf78] sm:$0xff] %v1214
                %v1216 = vld [vmem:[%s222 + $0x1f00] sm:$0xff]
                %1217 = vst [vmem:[%s223 + $0xf80] sm:$0xff] %v1216
                %v1218 = vld [vmem:[%s222 + $0x1f08] sm:$0xff]
                %1219 = vst [vmem:[%s223 + $0xf88] sm:$0xff] %v1218
                %v1220 = vld [vmem:[%s222 + $0x1f10] sm:$0xff]
                %1221 = vst [vmem:[%s223 + $0xf90] sm:$0xff] %v1220
                %v1222 = vld [vmem:[%s222 + $0x1f18] sm:$0xff]
                %1223 = vst [vmem:[%s223 + $0xf98] sm:$0xff] %v1222
                %v1224 = vld [vmem:[%s222 + $0x1f40] sm:$0xff]
                %1225 = vst [vmem:[%s223 + $0xfa0] sm:$0xff] %v1224
                %v1226 = vld [vmem:[%s222 + $0x1f48] sm:$0xff]
                %1227 = vst [vmem:[%s223 + $0xfa8] sm:$0xff] %v1226
                %v1228 = vld [vmem:[%s222 + $0x1f50] sm:$0xff]
                %1229 = vst [vmem:[%s223 + $0xfb0] sm:$0xff] %v1228
                %v1230 = vld [vmem:[%s222 + $0x1f58] sm:$0xff]
                %1231 = vst [vmem:[%s223 + $0xfb8] sm:$0xff] %v1230
                %v1232 = vld [vmem:[%s222 + $0x1f80] sm:$0xff]
                %1233 = vst [vmem:[%s223 + $0xfc0] sm:$0xff] %v1232
                %v1234 = vld [vmem:[%s222 + $0x1f88] sm:$0xff]
                %1235 = vst [vmem:[%s223 + $0xfc8] sm:$0xff] %v1234
                %v1236 = vld [vmem:[%s222 + $0x1f90] sm:$0xff]
                %1237 = vst [vmem:[%s223 + $0xfd0] sm:$0xff] %v1236
                %v1238 = vld [vmem:[%s222 + $0x1f98] sm:$0xff]
                %1239 = vst [vmem:[%s223 + $0xfd8] sm:$0xff] %v1238
                %v1240 = vld [vmem:[%s222 + $0x1fc0] sm:$0xff]
                %1241 = vst [vmem:[%s223 + $0xfe0] sm:$0xff] %v1240
                %v1242 = vld [vmem:[%s222 + $0x1fc8] sm:$0xff]
                %1243 = vst [vmem:[%s223 + $0xfe8] sm:$0xff] %v1242
                %v1244 = vld [vmem:[%s222 + $0x1fd0] sm:$0xff]
                %1245 = vst [vmem:[%s223 + $0xff0] sm:$0xff] %v1244
                %v1246 = vld [vmem:[%s222 + $0x1fd8] sm:$0xff]
                %1247 = vst [vmem:[%s223 + $0xff8] sm:$0xff] %v1246
              $region49: #{critic_forward.1} parent=43 // loop_footer
                %s221 = sadd.s32 1, %s217
              $region50: #{critic_forward.1} parent=43 // loop_footer_branch
                %216 = sbr.rel target = $region46
              $region51: #{critic_forward.1} parent=43 // loop_exit
                _
            $region44: #{critic_forward.1} parent=39 // pred_fallthru
              _
            // Predicated region
            $region52: #{critic_forward.1} parent=39 // pred_check
              _
            $region53: #{critic_forward.1} parent=39 // pred_check_branch
              %1249 = sbr.rel target = $region55
            $region54: #{critic_forward.1} parent=39 // pred_region
              _
            $region55: #{critic_forward.1} parent=39 // pred_fallthru
              _
          $region40: #{critic_forward.1} parent=35 // pred_fallthru
            _
          %1250 = vnop
        $region36: #{critic_forward.1} parent=31 // pred_fallthru
          _
        // Predicated region
        $region56: #{critic_forward.1} parent=31 // pred_check
          %p1251 = pneg %p123
        $region57: #{critic_forward.1} parent=31 // pred_check_branch
          %1253 = sbr.rel (%p1251) target = $region59
        $region58: #{critic_forward.1} parent=31 // pred_region
          %s1254 = smul.u32 8, %s14
          %p1255 = scmp.lt.s32.totalorder %s1254, 15
          %s1256 = scalar_select %p1255, %s1254, 15
          %s1257 = scalar_lea.vmem %s4, %s1256
          %s1258 = smul.u32 8, %s14
        $region59: #{critic_forward.1} parent=31 // pred_fallthru
          _
      $region32: #{critic_forward.1} parent=5 // pred_fallthru
        _
      %p1259 = scmp.le.s32.totalorder 1, %s14
      %p1260 = scmp.lt.s32.totalorder %s14, 3
      %p1261 = pnand %p1259, %p1260
      %p1262 = pneg %p1261
      // Predicated region
      $region60: #{critic_forward.1} parent=5 // pred_check
        _
      $region61: #{critic_forward.1} parent=5 // pred_check_branch
        %1264 = sbr.rel (%p1261) target = $region63
      $region62: #{critic_forward.1} parent=5 // pred_region
        %s1265 = ssub.s32 %s14, 1
        %s1266 = sand.u32 %s90, 1
        %s1267 = sand.u32 %s90, 1
        %s1268 = smul.addr %s1267, 4096
        %s1269 = scalar_lea.vmem [#allocation5], %s1268
        // Predicated region
        $region64: #{critic_forward.1} parent=62 // pred_check
          %p1270 = pneg %p103
        $region65: #{critic_forward.1} parent=62 // pred_check_branch
          %1272 = sbr.rel (%p1270) target = $region67
        $region66: #{critic_forward.1} parent=62 // pred_region
          _
        $region67: #{critic_forward.1} parent=62 // pred_fallthru
          _
        %p1273 = pneg %p35
        %p1274 = pneg %p32
        %p1275 = pneg %p56
        %p1276 = pneg %p53
        %p1277 = pneg %p77
        %p1278 = pneg %p74
        %s1279 = sand.u32 %s90, 1
        %s1280 = sand.u32 %s90, 1
        %s1281 = smul.addr %s1280, 4096
        %s1282 = scalar_lea.vmem [#allocation5], %s1281
        %p1283 = pneg %p103
        %p1284 = pneg %p100
        %s1285 = smul.u32 8, %s19
        %p1286 = scmp.lt.s32.totalorder %s1285, 15
        %s1287 = scalar_select %p1286, %s1285, 15
        %s1288 = scalar_lea.vmem %s4, %s1287
        %p1289 = pneg %p129
        %p1290 = pneg %p126
        %p1291 = pneg %p150
        %p1292 = pneg %p147
        %p1293 = pneg %p171
        %p1294 = pneg %p168
        %s1295 = smul.u32 8, %s19
        %s1296 = smul.u32 8, %s19
        %p1297 = scmp.lt.s32.totalorder %s1296, 15
        %s1298 = scalar_select %p1297, %s1296, 15
        %s1299 = scalar_lea.vmem %s4, %s1298
        %s1300 = smul.u32 8, %s19
        %p1302 = scmp.eq.s32.totalorder %s19, 0
        // Predicated region
        $region68: #{critic_forward.1} parent=62 // pred_check
          %p1303 = pneg %p1302
        $region69: #{critic_forward.1} parent=62 // pred_check_branch
          %1305 = sbr.rel (%p1303) target = $region71
        $region70: #{critic_forward.1} parent=62 // pred_region
          %v1306 = vld [vmem:[%s0] sm:$0xff]
          %v1307 = vpack.c.bf16 %v1306, %v1306
          %v1308 = vld [vmem:[%s1] sm:$0xff]
          %v1309 = vld [vmem:[%s1 + $0x8] sm:$0xff]
          %v1310 = vld [vmem:[%s1 + $0x10] sm:$0xff]
          %v1311 = vld [vmem:[%s1 + $0x18] sm:$0xff]
          %v1312 = vld [vmem:[%s1 + $0x20] sm:$0xff]
          %v1313 = vld [vmem:[%s1 + $0x28] sm:$0xff]
          %v1314 = vld [vmem:[%s1 + $0x30] sm:$0xff]
          %v1315 = vld [vmem:[%s1 + $0x38] sm:$0xff]
          %v1316 = vld [vmem:[%s1 + $0x40] sm:$0xff]
          %v1317 = vld [vmem:[%s1 + $0x48] sm:$0xff]
          %v1318 = vld [vmem:[%s1 + $0x50] sm:$0xff]
          %v1319 = vld [vmem:[%s1 + $0x58] sm:$0xff]
          %v1320 = vld [vmem:[%s1 + $0x60] sm:$0xff]
          %v1321 = vld [vmem:[%s1 + $0x68] sm:$0xff]
          %v1322 = vld [vmem:[%s1 + $0x70] sm:$0xff]
          %v1323 = vld [vmem:[%s1 + $0x78] sm:$0xff]
          %v1324 = vld [vmem:[%s2] sm:$0xff]
          %v1326 = vlaneseq
          %v1327 = vshrl.u32 %v1326, 7
          %v1328 = vsub.s32 0, %v1327
          %v1329 = vrot.slane %v1324, %v1328
          %v1330 = vlaneseq
          %v1331 = vshrl.u32 %v1330, 7
          %v1332 = vsub.s32 1, %v1331
          %v1333 = vrot.slane %v1324, %v1332
          %v1334 = vlaneseq
          %v1335 = vshrl.u32 %v1334, 7
          %v1336 = vsub.s32 2, %v1335
          %v1337 = vrot.slane %v1324, %v1336
          %v1338 = vlaneseq
          %v1339 = vshrl.u32 %v1338, 7
          %v1340 = vsub.s32 3, %v1339
          %v1341 = vrot.slane %v1324, %v1340
          %v1342 = vlaneseq
          %v1343 = vshrl.u32 %v1342, 7
          %v1344 = vsub.s32 4, %v1343
          %v1345 = vrot.slane %v1324, %v1344
          %v1346 = vlaneseq
          %v1347 = vshrl.u32 %v1346, 7
          %v1348 = vsub.s32 5, %v1347
          %v1349 = vrot.slane %v1324, %v1348
          %v1350 = vlaneseq
          %v1351 = vshrl.u32 %v1350, 7
          %v1352 = vsub.s32 6, %v1351
          %v1353 = vrot.slane %v1324, %v1352
          %v1354 = vlaneseq
          %v1355 = vshrl.u32 %v1354, 7
          %v1356 = vsub.s32 7, %v1355
          %v1357 = vrot.slane %v1324, %v1356
          %v1382 = vunpack.c.l.b16 %v1308
          %v1383 = vunpack.c.h.b16 %v1308
          %v1384 = vunpack.c.l.b16 %v1309
          %v1385 = vunpack.c.h.b16 %v1309
          %v1386 = vunpack.c.l.b16 %v1310
          %v1387 = vunpack.c.h.b16 %v1310
          %v1388 = vunpack.c.l.b16 %v1311
          %v1389 = vunpack.c.h.b16 %v1311
          %v1390 = vunpack.c.l.b16 %v1312
          %v1391 = vunpack.c.h.b16 %v1312
          %v1392 = vunpack.c.l.b16 %v1313
          %v1393 = vunpack.c.h.b16 %v1313
          %v1394 = vunpack.c.l.b16 %v1314
          %v1395 = vunpack.c.h.b16 %v1314
          %v1396 = vunpack.c.l.b16 %v1315
          %v1397 = vunpack.c.h.b16 %v1315
          %v1398 = vunpack.c.l.b16 %v1316
          %v1399 = vunpack.c.h.b16 %v1316
          %v1400 = vunpack.c.l.b16 %v1317
          %v1401 = vunpack.c.h.b16 %v1317
          %v1402 = vunpack.c.l.b16 %v1318
          %v1403 = vunpack.c.h.b16 %v1318
          %v1404 = vunpack.c.l.b16 %v1319
          %v1405 = vunpack.c.h.b16 %v1319
          %v1406 = vunpack.c.l.b16 %v1320
          %v1407 = vunpack.c.h.b16 %v1320
          %v1408 = vunpack.c.l.b16 %v1321
          %v1409 = vunpack.c.h.b16 %v1321
          %v1410 = vunpack.c.l.b16 %v1322
          %v1411 = vunpack.c.h.b16 %v1322
          %v1412 = vunpack.c.l.b16 %v1323
          %v1413 = vunpack.c.h.b16 %v1323
          %v1414 = vpack.c.b16 %v1390, %v1382
          %v1415 = vpack.c.b16 %v1391, %v1383
          %v1416 = vpack.c.b16 %v1392, %v1384
          %v1417 = vpack.c.b16 %v1393, %v1385
          %v1418 = vpack.c.b16 %v1394, %v1386
          %v1419 = vpack.c.b16 %v1395, %v1387
          %v1420 = vpack.c.b16 %v1396, %v1388
          %v1421 = vpack.c.b16 %v1397, %v1389
          %v1422 = vpack.c.b16 %v1406, %v1398
          %v1423 = vpack.c.b16 %v1407, %v1399
          %v1424 = vpack.c.b16 %v1408, %v1400
          %v1425 = vpack.c.b16 %v1409, %v1401
          %v1426 = vpack.c.b16 %v1410, %v1402
          %v1427 = vpack.c.b16 %v1411, %v1403
          %v1428 = vpack.c.b16 %v1412, %v1404
          %v1429 = vpack.c.b16 %v1413, %v1405
          %vm1446 = vcmask 261120
          %v1448 = vsel %vm1446, %v1307, 0
          %1450 = vmatprep.subr.bf16.mxu0 0
          %1451 = vmatpush1.bf16.msra.mxu0 0
          %1452 = vmatprep.subr.bf16.mxu0 0
          %1453 = vmatpush1.bf16.msra.mxu0 0
          %1454 = vmatprep.subr.bf16.mxu0 0
          %1455 = vmatpush1.bf16.msra.mxu0 0
          %1456 = vmatprep.subr.bf16.mxu0 0
          %1457 = vmatpush1.bf16.msra.mxu0 0
          %1458 = vmatprep.subr.bf16.mxu0 0
          %1459 = vmatpush1.bf16.msra.mxu0 0
          %1460 = vmatprep.subr.bf16.mxu0 0
          %1461 = vmatpush1.bf16.msra.mxu0 0
          %1462 = vmatprep.subr.bf16.mxu0 %v1423
          %1463 = vmatpush1.bf16.msra.mxu0 %v1422
          %1464 = vmatprep.subr.bf16.mxu0 %v1415
          %1465 = vmatpush1.bf16.msra.mxu0 %v1414
          %1466 = vmatprep.subr.bf16.mxu0 0
          %1467 = vmatpush2.bf16.msra.mxu0 0
          %1468 = vmatprep.subr.bf16.mxu0 0
          %1469 = vmatpush2.bf16.msra.mxu0 0
          %1470 = vmatprep.subr.bf16.mxu0 0
          %1471 = vmatpush2.bf16.msra.mxu0 0
          %1472 = vmatprep.subr.bf16.mxu0 0
          %1473 = vmatpush2.bf16.msra.mxu0 0
          %1474 = vmatprep.subr.bf16.mxu0 0
          %1475 = vmatpush2.bf16.msra.mxu0 0
          %1476 = vmatprep.subr.bf16.mxu0 0
          %1477 = vmatpush2.bf16.msra.mxu0 0
          %1478 = vmatprep.subr.bf16.mxu0 0
          %1479 = vmatpush2.bf16.msra.mxu0 0
          %1480 = vmatprep.subr.bf16.mxu0 0
          %1481 = vmatpush2.bf16.msra.mxu0 0
          %1482 = vmatprep.mubr.bf16.mxu0 0
          %1483 = vmatmul.mubr.bf16.gmra.mxu0 %v1448
          %v1484 = vpop.f32.mrf.mxu0
          %v1485 = vadd.f32 %v1329, %v1484
          %v1486 = vpop.f32.mrf.mxu0
          %v1487 = vadd.f32 %v1333, %v1486
          %v1488 = vpop.f32.mrf.mxu0
          %v1489 = vpop.f32.mrf.mxu0
          %1490 = vdwg.mxu0
          %1491 = vmatprep.subr.bf16.mxu0 0
          %1492 = vmatpush1.bf16.msra.mxu0 0
          %1493 = vmatprep.subr.bf16.mxu0 0
          %1494 = vmatpush1.bf16.msra.mxu0 0
          %1495 = vmatprep.subr.bf16.mxu0 0
          %1496 = vmatpush1.bf16.msra.mxu0 0
          %1497 = vmatprep.subr.bf16.mxu0 0
          %1498 = vmatpush1.bf16.msra.mxu0 0
          %1499 = vmatprep.subr.bf16.mxu0 0
          %1500 = vmatpush1.bf16.msra.mxu0 0
          %1501 = vmatprep.subr.bf16.mxu0 0
          %1502 = vmatpush1.bf16.msra.mxu0 0
          %1503 = vmatprep.subr.bf16.mxu0 %v1425
          %1504 = vmatpush1.bf16.msra.mxu0 %v1424
          %1505 = vmatprep.subr.bf16.mxu0 %v1417
          %1506 = vmatpush1.bf16.msra.mxu0 %v1416
          %1507 = vmatprep.subr.bf16.mxu0 0
          %1508 = vmatpush2.bf16.msra.mxu0 0
          %1509 = vmatprep.subr.bf16.mxu0 0
          %1510 = vmatpush2.bf16.msra.mxu0 0
          %1511 = vmatprep.subr.bf16.mxu0 0
          %1512 = vmatpush2.bf16.msra.mxu0 0
          %1513 = vmatprep.subr.bf16.mxu0 0
          %1514 = vmatpush2.bf16.msra.mxu0 0
          %1515 = vmatprep.subr.bf16.mxu0 0
          %1516 = vmatpush2.bf16.msra.mxu0 0
          %1517 = vmatprep.subr.bf16.mxu0 0
          %1518 = vmatpush2.bf16.msra.mxu0 0
          %1519 = vmatprep.subr.bf16.mxu0 0
          %1520 = vmatpush2.bf16.msra.mxu0 0
          %1521 = vmatprep.subr.bf16.mxu0 0
          %1522 = vmatpush2.bf16.msra.mxu0 0
          %1523 = vmatprep.mubr.bf16.mxu0 0
          %1524 = vmatmul.mubr.bf16.gmra.mxu0 %v1448
          %v1525 = vpop.f32.mrf.mxu0
          %v1526 = vadd.f32 %v1337, %v1525
          %v1527 = vpop.f32.mrf.mxu0
          %v1528 = vadd.f32 %v1341, %v1527
          %v1529 = vpop.f32.mrf.mxu0
          %v1530 = vpop.f32.mrf.mxu0
          %1531 = vdwg.mxu0
          %1532 = vmatprep.subr.bf16.mxu0 0
          %1533 = vmatpush1.bf16.msra.mxu0 0
          %1534 = vmatprep.subr.bf16.mxu0 0
          %1535 = vmatpush1.bf16.msra.mxu0 0
          %1536 = vmatprep.subr.bf16.mxu0 0
          %1537 = vmatpush1.bf16.msra.mxu0 0
          %1538 = vmatprep.subr.bf16.mxu0 0
          %1539 = vmatpush1.bf16.msra.mxu0 0
          %1540 = vmatprep.subr.bf16.mxu0 0
          %1541 = vmatpush1.bf16.msra.mxu0 0
          %1542 = vmatprep.subr.bf16.mxu0 0
          %1543 = vmatpush1.bf16.msra.mxu0 0
          %1544 = vmatprep.subr.bf16.mxu0 %v1427
          %1545 = vmatpush1.bf16.msra.mxu0 %v1426
          %1546 = vmatprep.subr.bf16.mxu0 %v1419
          %1547 = vmatpush1.bf16.msra.mxu0 %v1418
          %1548 = vmatprep.subr.bf16.mxu0 0
          %1549 = vmatpush2.bf16.msra.mxu0 0
          %1550 = vmatprep.subr.bf16.mxu0 0
          %1551 = vmatpush2.bf16.msra.mxu0 0
          %1552 = vmatprep.subr.bf16.mxu0 0
          %1553 = vmatpush2.bf16.msra.mxu0 0
          %1554 = vmatprep.subr.bf16.mxu0 0
          %1555 = vmatpush2.bf16.msra.mxu0 0
          %1556 = vmatprep.subr.bf16.mxu0 0
          %1557 = vmatpush2.bf16.msra.mxu0 0
          %1558 = vmatprep.subr.bf16.mxu0 0
          %1559 = vmatpush2.bf16.msra.mxu0 0
          %1560 = vmatprep.subr.bf16.mxu0 0
          %1561 = vmatpush2.bf16.msra.mxu0 0
          %1562 = vmatprep.subr.bf16.mxu0 0
          %1563 = vmatpush2.bf16.msra.mxu0 0
          %1564 = vmatprep.mubr.bf16.mxu0 0
          %1565 = vmatmul.mubr.bf16.gmra.mxu0 %v1448
          %v1566 = vpop.f32.mrf.mxu0
          %v1567 = vadd.f32 %v1345, %v1566
          %v1568 = vpop.f32.mrf.mxu0
          %v1569 = vadd.f32 %v1349, %v1568
          %v1570 = vpop.f32.mrf.mxu0
          %v1571 = vpop.f32.mrf.mxu0
          %1572 = vdwg.mxu0
          %1573 = vmatprep.subr.bf16.mxu0 0
          %1574 = vmatpush1.bf16.msra.mxu0 0
          %1575 = vmatprep.subr.bf16.mxu0 0
          %1576 = vmatpush1.bf16.msra.mxu0 0
          %1577 = vmatprep.subr.bf16.mxu0 0
          %1578 = vmatpush1.bf16.msra.mxu0 0
          %1579 = vmatprep.subr.bf16.mxu0 0
          %1580 = vmatpush1.bf16.msra.mxu0 0
          %1581 = vmatprep.subr.bf16.mxu0 0
          %1582 = vmatpush1.bf16.msra.mxu0 0
          %1583 = vmatprep.subr.bf16.mxu0 0
          %1584 = vmatpush1.bf16.msra.mxu0 0
          %1585 = vmatprep.subr.bf16.mxu0 %v1429
          %1586 = vmatpush1.bf16.msra.mxu0 %v1428
          %1587 = vmatprep.subr.bf16.mxu0 %v1421
          %1588 = vmatpush1.bf16.msra.mxu0 %v1420
          %1589 = vmatprep.subr.bf16.mxu0 0
          %1590 = vmatpush2.bf16.msra.mxu0 0
          %1591 = vmatprep.subr.bf16.mxu0 0
          %1592 = vmatpush2.bf16.msra.mxu0 0
          %1593 = vmatprep.subr.bf16.mxu0 0
          %1594 = vmatpush2.bf16.msra.mxu0 0
          %1595 = vmatprep.subr.bf16.mxu0 0
          %1596 = vmatpush2.bf16.msra.mxu0 0
          %1597 = vmatprep.subr.bf16.mxu0 0
          %1598 = vmatpush2.bf16.msra.mxu0 0
          %1599 = vmatprep.subr.bf16.mxu0 0
          %1600 = vmatpush2.bf16.msra.mxu0 0
          %1601 = vmatprep.subr.bf16.mxu0 0
          %1602 = vmatpush2.bf16.msra.mxu0 0
          %1603 = vmatprep.subr.bf16.mxu0 0
          %1604 = vmatpush2.bf16.msra.mxu0 0
          %1605 = vmatprep.mubr.bf16.mxu0 0
          %1606 = vmatmul.mubr.bf16.gmra.mxu0 %v1448
          %v1607 = vpop.f32.mrf.mxu0
          %v1608 = vadd.f32 %v1353, %v1607
          %v1609 = vpop.f32.mrf.mxu0
          %v1610 = vadd.f32 %v1357, %v1609
          %v1611 = vpop.f32.mrf.mxu0
          %v1612 = vpop.f32.mrf.mxu0
          %1613 = vdwg.mxu0
          %v1614 = vmul.f32 %v1485, 0.5
          %v1615 = vmul.f32 %v1487, 0.5
          %v1616 = vmul.f32 %v1526, 0.5
          %v1617 = vmul.f32 %v1528, 0.5
          %v1618 = vmul.f32 %v1567, 0.5
          %v1619 = vmul.f32 %v1569, 0.5
          %v1620 = vmul.f32 %v1608, 0.5
          %v1621 = vmul.f32 %v1610, 0.5
          %v1622 = vmul.f32 %v1485, 0.70710677
          %v1623 = vmul.f32 %v1487, 0.70710677
          %v1624 = vmul.f32 %v1526, 0.70710677
          %v1625 = vmul.f32 %v1528, 0.70710677
          %v1626 = vmul.f32 %v1567, 0.70710677
          %v1627 = vmul.f32 %v1569, 0.70710677
          %v1628 = vmul.f32 %v1608, 0.70710677
          %v1629 = vmul.f32 %v1610, 0.70710677
          %v1630 = verf.f32.pop %v1622
          %v1631 = verf.f32.pop %v1623
          %v1632 = verf.f32.pop %v1624
          %v1633 = verf.f32.pop %v1625
          %v1634 = verf.f32.pop %v1626
          %v1635 = verf.f32.pop %v1627
          %v1636 = verf.f32.pop %v1628
          %v1637 = verf.f32.pop %v1629
          %v1638 = vadd.f32 %v1630, 1.0
          %v1639 = vadd.f32 %v1631, 1.0
          %v1640 = vadd.f32 %v1632, 1.0
          %v1641 = vadd.f32 %v1633, 1.0
          %v1642 = vadd.f32 %v1634, 1.0
          %v1643 = vadd.f32 %v1635, 1.0
          %v1644 = vadd.f32 %v1636, 1.0
          %v1645 = vadd.f32 %v1637, 1.0
          %v1646 = vmul.f32 %v1614, %v1638
          %v1647 = vmul.f32 %v1615, %v1639
          %v1648 = vmul.f32 %v1616, %v1640
          %v1649 = vmul.f32 %v1617, %v1641
          %v1650 = vmul.f32 %v1618, %v1642
          %v1651 = vmul.f32 %v1619, %v1643
          %v1652 = vmul.f32 %v1620, %v1644
          %v1653 = vmul.f32 %v1621, %v1645
          %v1654 = vpack.c.bf16 %v1646, %v1646
          %v1655 = vpack.c.bf16 %v1647, %v1647
          %v1656 = vpack.c.bf16 %v1648, %v1648
          %v1657 = vpack.c.bf16 %v1649, %v1649
          %v1658 = vpack.c.bf16 %v1650, %v1650
          %v1659 = vpack.c.bf16 %v1651, %v1651
          %v1660 = vpack.c.bf16 %v1652, %v1652
          %v1661 = vpack.c.bf16 %v1653, %v1653
          %v1670 = vunpack.c.l.b16 %v1654
          %v1671 = vunpack.c.l.b16 %v1655
          %v1672 = vunpack.c.l.b16 %v1656
          %v1673 = vunpack.c.l.b16 %v1657
          %v1674 = vunpack.c.l.b16 %v1658
          %v1675 = vunpack.c.l.b16 %v1659
          %v1676 = vunpack.c.l.b16 %v1660
          %v1677 = vunpack.c.l.b16 %v1661
          %v1678 = vpack.c.b16 %v1671, %v1670
          %v1679 = vpack.c.b16 %v1673, %v1672
          %v1680 = vpack.c.b16 %v1675, %v1674
          %v1681 = vpack.c.b16 %v1677, %v1676
          %1686 = vst [vmem:[#allocation2] sm:$0xff] %v1678
          %1687 = vst [vmem:[#allocation2 + $0x8] sm:$0xff] %v1679
          %1688 = vst [vmem:[#allocation2 + $0x10] sm:$0xff] %v1680
          %1689 = vst [vmem:[#allocation2 + $0x18] sm:$0xff] %v1681
          %vm1690 = vcmask 7168
          %1691 = vst.msk [vmem:[#allocation3] sm:$0xff] %vm1690, 0.0
        $region71: #{critic_forward.1} parent=62 // pred_fallthru
          _
        %v1692 = vld [vmem:[#allocation2] sm:$0xff]
        %v1693 = vld [vmem:[#allocation2 + $0x8] sm:$0xff]
        %v1694 = vld [vmem:[#allocation2 + $0x10] sm:$0xff]
        %v1695 = vld [vmem:[#allocation2 + $0x18] sm:$0xff]
        %v1696 = vld [vmem:[%s1269] sm:$0xff]
        %v1697 = vld [vmem:[%s1269 + $0x8] sm:$0xff]
        %v1698 = vld [vmem:[%s1269 + $0x10] sm:$0xff]
        %v1699 = vld [vmem:[%s1269 + $0x18] sm:$0xff]
        %v1700 = vld [vmem:[%s1269 + $0x20] sm:$0xff]
        %v1701 = vld [vmem:[%s1269 + $0x28] sm:$0xff]
        %v1702 = vld [vmem:[%s1269 + $0x30] sm:$0xff]
        %v1703 = vld [vmem:[%s1269 + $0x38] sm:$0xff]
        %v1704 = vld [vmem:[%s1269 + $0x40] sm:$0xff]
        %v1705 = vld [vmem:[%s1269 + $0x48] sm:$0xff]
        %v1706 = vld [vmem:[%s1269 + $0x50] sm:$0xff]
        %v1707 = vld [vmem:[%s1269 + $0x58] sm:$0xff]
        %v1708 = vld [vmem:[%s1269 + $0x60] sm:$0xff]
        %v1709 = vld [vmem:[%s1269 + $0x68] sm:$0xff]
        %v1710 = vld [vmem:[%s1269 + $0x70] sm:$0xff]
        %v1711 = vld [vmem:[%s1269 + $0x78] sm:$0xff]
        %v1712 = vld [vmem:[%s1269 + $0x80] sm:$0xff]
        %v1713 = vld [vmem:[%s1269 + $0x88] sm:$0xff]
        %v1714 = vld [vmem:[%s1269 + $0x90] sm:$0xff]
        %v1715 = vld [vmem:[%s1269 + $0x98] sm:$0xff]
        %v1716 = vld [vmem:[%s1269 + $0xa0] sm:$0xff]
        %v1717 = vld [vmem:[%s1269 + $0xa8] sm:$0xff]
        %v1718 = vld [vmem:[%s1269 + $0xb0] sm:$0xff]
        %v1719 = vld [vmem:[%s1269 + $0xb8] sm:$0xff]
        %v1720 = vld [vmem:[%s1269 + $0xc0] sm:$0xff]
        %v1721 = vld [vmem:[%s1269 + $0xc8] sm:$0xff]
        %v1722 = vld [vmem:[%s1269 + $0xd0] sm:$0xff]
        %v1723 = vld [vmem:[%s1269 + $0xd8] sm:$0xff]
        %v1724 = vld [vmem:[%s1269 + $0xe0] sm:$0xff]
        %v1725 = vld [vmem:[%s1269 + $0xe8] sm:$0xff]
        %v1726 = vld [vmem:[%s1269 + $0xf0] sm:$0xff]
        %v1727 = vld [vmem:[%s1269 + $0xf8] sm:$0xff]
        %v1728 = vld [vmem:[%s1269 + $0x100] sm:$0xff]
        %v1729 = vld [vmem:[%s1269 + $0x108] sm:$0xff]
        %v1730 = vld [vmem:[%s1269 + $0x110] sm:$0xff]
        %v1731 = vld [vmem:[%s1269 + $0x118] sm:$0xff]
        %v1732 = vld [vmem:[%s1269 + $0x120] sm:$0xff]
        %v1733 = vld [vmem:[%s1269 + $0x128] sm:$0xff]
        %v1734 = vld [vmem:[%s1269 + $0x130] sm:$0xff]
        %v1735 = vld [vmem:[%s1269 + $0x138] sm:$0xff]
        %v1736 = vld [vmem:[%s1269 + $0x140] sm:$0xff]
        %v1737 = vld [vmem:[%s1269 + $0x148] sm:$0xff]
        %v1738 = vld [vmem:[%s1269 + $0x150] sm:$0xff]
        %v1739 = vld [vmem:[%s1269 + $0x158] sm:$0xff]
        %v1740 = vld [vmem:[%s1269 + $0x160] sm:$0xff]
        %v1741 = vld [vmem:[%s1269 + $0x168] sm:$0xff]
        %v1742 = vld [vmem:[%s1269 + $0x170] sm:$0xff]
        %v1743 = vld [vmem:[%s1269 + $0x178] sm:$0xff]
        %v1744 = vld [vmem:[%s1269 + $0x180] sm:$0xff]
        %v1745 = vld [vmem:[%s1269 + $0x188] sm:$0xff]
        %v1746 = vld [vmem:[%s1269 + $0x190] sm:$0xff]
        %v1747 = vld [vmem:[%s1269 + $0x198] sm:$0xff]
        %v1748 = vld [vmem:[%s1269 + $0x1a0] sm:$0xff]
        %v1749 = vld [vmem:[%s1269 + $0x1a8] sm:$0xff]
        %v1750 = vld [vmem:[%s1269 + $0x1b0] sm:$0xff]
        %v1751 = vld [vmem:[%s1269 + $0x1b8] sm:$0xff]
        %v1752 = vld [vmem:[%s1269 + $0x1c0] sm:$0xff]
        %v1753 = vld [vmem:[%s1269 + $0x1c8] sm:$0xff]
        %v1754 = vld [vmem:[%s1269 + $0x1d0] sm:$0xff]
        %v1755 = vld [vmem:[%s1269 + $0x1d8] sm:$0xff]
        %v1756 = vld [vmem:[%s1269 + $0x1e0] sm:$0xff]
        %v1757 = vld [vmem:[%s1269 + $0x1e8] sm:$0xff]
        %v1758 = vld [vmem:[%s1269 + $0x1f0] sm:$0xff]
        %v1759 = vld [vmem:[%s1269 + $0x1f8] sm:$0xff]
        %v1760 = vld [vmem:[%s1269 + $0x200] sm:$0xff]
        %v1761 = vld [vmem:[%s1269 + $0x208] sm:$0xff]
        %v1762 = vld [vmem:[%s1269 + $0x210] sm:$0xff]
        %v1763 = vld [vmem:[%s1269 + $0x218] sm:$0xff]
        %v1764 = vld [vmem:[%s1269 + $0x220] sm:$0xff]
        %v1765 = vld [vmem:[%s1269 + $0x228] sm:$0xff]
        %v1766 = vld [vmem:[%s1269 + $0x230] sm:$0xff]
        %v1767 = vld [vmem:[%s1269 + $0x238] sm:$0xff]
        %v1768 = vld [vmem:[%s1269 + $0x240] sm:$0xff]
        %v1769 = vld [vmem:[%s1269 + $0x248] sm:$0xff]
        %v1770 = vld [vmem:[%s1269 + $0x250] sm:$0xff]
        %v1771 = vld [vmem:[%s1269 + $0x258] sm:$0xff]
        %v1772 = vld [vmem:[%s1269 + $0x260] sm:$0xff]
        %v1773 = vld [vmem:[%s1269 + $0x268] sm:$0xff]
        %v1774 = vld [vmem:[%s1269 + $0x270] sm:$0xff]
        %v1775 = vld [vmem:[%s1269 + $0x278] sm:$0xff]
        %v1776 = vld [vmem:[%s1269 + $0x280] sm:$0xff]
        %v1777 = vld [vmem:[%s1269 + $0x288] sm:$0xff]
        %v1778 = vld [vmem:[%s1269 + $0x290] sm:$0xff]
        %v1779 = vld [vmem:[%s1269 + $0x298] sm:$0xff]
        %v1780 = vld [vmem:[%s1269 + $0x2a0] sm:$0xff]
        %v1781 = vld [vmem:[%s1269 + $0x2a8] sm:$0xff]
        %v1782 = vld [vmem:[%s1269 + $0x2b0] sm:$0xff]
        %v1783 = vld [vmem:[%s1269 + $0x2b8] sm:$0xff]
        %v1784 = vld [vmem:[%s1269 + $0x2c0] sm:$0xff]
        %v1785 = vld [vmem:[%s1269 + $0x2c8] sm:$0xff]
        %v1786 = vld [vmem:[%s1269 + $0x2d0] sm:$0xff]
        %v1787 = vld [vmem:[%s1269 + $0x2d8] sm:$0xff]
        %v1788 = vld [vmem:[%s1269 + $0x2e0] sm:$0xff]
        %v1789 = vld [vmem:[%s1269 + $0x2e8] sm:$0xff]
        %v1790 = vld [vmem:[%s1269 + $0x2f0] sm:$0xff]
        %v1791 = vld [vmem:[%s1269 + $0x2f8] sm:$0xff]
        %v1792 = vld [vmem:[%s1269 + $0x300] sm:$0xff]
        %v1793 = vld [vmem:[%s1269 + $0x308] sm:$0xff]
        %v1794 = vld [vmem:[%s1269 + $0x310] sm:$0xff]
        %v1795 = vld [vmem:[%s1269 + $0x318] sm:$0xff]
        %v1796 = vld [vmem:[%s1269 + $0x320] sm:$0xff]
        %v1797 = vld [vmem:[%s1269 + $0x328] sm:$0xff]
        %v1798 = vld [vmem:[%s1269 + $0x330] sm:$0xff]
        %v1799 = vld [vmem:[%s1269 + $0x338] sm:$0xff]
        %v1800 = vld [vmem:[%s1269 + $0x340] sm:$0xff]
        %v1801 = vld [vmem:[%s1269 + $0x348] sm:$0xff]
        %v1802 = vld [vmem:[%s1269 + $0x350] sm:$0xff]
        %v1803 = vld [vmem:[%s1269 + $0x358] sm:$0xff]
        %v1804 = vld [vmem:[%s1269 + $0x360] sm:$0xff]
        %v1805 = vld [vmem:[%s1269 + $0x368] sm:$0xff]
        %v1806 = vld [vmem:[%s1269 + $0x370] sm:$0xff]
        %v1807 = vld [vmem:[%s1269 + $0x378] sm:$0xff]
        %v1808 = vld [vmem:[%s1269 + $0x380] sm:$0xff]
        %v1809 = vld [vmem:[%s1269 + $0x388] sm:$0xff]
        %v1810 = vld [vmem:[%s1269 + $0x390] sm:$0xff]
        %v1811 = vld [vmem:[%s1269 + $0x398] sm:$0xff]
        %v1812 = vld [vmem:[%s1269 + $0x3a0] sm:$0xff]
        %v1813 = vld [vmem:[%s1269 + $0x3a8] sm:$0xff]
        %v1814 = vld [vmem:[%s1269 + $0x3b0] sm:$0xff]
        %v1815 = vld [vmem:[%s1269 + $0x3b8] sm:$0xff]
        %v1816 = vld [vmem:[%s1269 + $0x3c0] sm:$0xff]
        %v1817 = vld [vmem:[%s1269 + $0x3c8] sm:$0xff]
        %v1818 = vld [vmem:[%s1269 + $0x3d0] sm:$0xff]
        %v1819 = vld [vmem:[%s1269 + $0x3d8] sm:$0xff]
        %v1820 = vld [vmem:[%s1269 + $0x3e0] sm:$0xff]
        %v1821 = vld [vmem:[%s1269 + $0x3e8] sm:$0xff]
        %v1822 = vld [vmem:[%s1269 + $0x3f0] sm:$0xff]
        %v1823 = vld [vmem:[%s1269 + $0x3f8] sm:$0xff]
        %v1824 = vld [vmem:[%s1269 + $0x400] sm:$0xff]
        %v1825 = vld [vmem:[%s1269 + $0x408] sm:$0xff]
        %v1826 = vld [vmem:[%s1269 + $0x410] sm:$0xff]
        %v1827 = vld [vmem:[%s1269 + $0x418] sm:$0xff]
        %v1828 = vld [vmem:[%s1269 + $0x420] sm:$0xff]
        %v1829 = vld [vmem:[%s1269 + $0x428] sm:$0xff]
        %v1830 = vld [vmem:[%s1269 + $0x430] sm:$0xff]
        %v1831 = vld [vmem:[%s1269 + $0x438] sm:$0xff]
        %v1832 = vld [vmem:[%s1269 + $0x440] sm:$0xff]
        %v1833 = vld [vmem:[%s1269 + $0x448] sm:$0xff]
        %v1834 = vld [vmem:[%s1269 + $0x450] sm:$0xff]
        %v1835 = vld [vmem:[%s1269 + $0x458] sm:$0xff]
        %v1836 = vld [vmem:[%s1269 + $0x460] sm:$0xff]
        %v1837 = vld [vmem:[%s1269 + $0x468] sm:$0xff]
        %v1838 = vld [vmem:[%s1269 + $0x470] sm:$0xff]
        %v1839 = vld [vmem:[%s1269 + $0x478] sm:$0xff]
        %v1840 = vld [vmem:[%s1269 + $0x480] sm:$0xff]
        %v1841 = vld [vmem:[%s1269 + $0x488] sm:$0xff]
        %v1842 = vld [vmem:[%s1269 + $0x490] sm:$0xff]
        %v1843 = vld [vmem:[%s1269 + $0x498] sm:$0xff]
        %v1844 = vld [vmem:[%s1269 + $0x4a0] sm:$0xff]
        %v1845 = vld [vmem:[%s1269 + $0x4a8] sm:$0xff]
        %v1846 = vld [vmem:[%s1269 + $0x4b0] sm:$0xff]
        %v1847 = vld [vmem:[%s1269 + $0x4b8] sm:$0xff]
        %v1848 = vld [vmem:[%s1269 + $0x4c0] sm:$0xff]
        %v1849 = vld [vmem:[%s1269 + $0x4c8] sm:$0xff]
        %v1850 = vld [vmem:[%s1269 + $0x4d0] sm:$0xff]
        %v1851 = vld [vmem:[%s1269 + $0x4d8] sm:$0xff]
        %v1852 = vld [vmem:[%s1269 + $0x4e0] sm:$0xff]
        %v1853 = vld [vmem:[%s1269 + $0x4e8] sm:$0xff]
        %v1854 = vld [vmem:[%s1269 + $0x4f0] sm:$0xff]
        %v1855 = vld [vmem:[%s1269 + $0x4f8] sm:$0xff]
        %v1856 = vld [vmem:[%s1269 + $0x500] sm:$0xff]
        %v1857 = vld [vmem:[%s1269 + $0x508] sm:$0xff]
        %v1858 = vld [vmem:[%s1269 + $0x510] sm:$0xff]
        %v1859 = vld [vmem:[%s1269 + $0x518] sm:$0xff]
        %v1860 = vld [vmem:[%s1269 + $0x520] sm:$0xff]
        %v1861 = vld [vmem:[%s1269 + $0x528] sm:$0xff]
        %v1862 = vld [vmem:[%s1269 + $0x530] sm:$0xff]
        %v1863 = vld [vmem:[%s1269 + $0x538] sm:$0xff]
        %v1864 = vld [vmem:[%s1269 + $0x540] sm:$0xff]
        %v1865 = vld [vmem:[%s1269 + $0x548] sm:$0xff]
        %v1866 = vld [vmem:[%s1269 + $0x550] sm:$0xff]
        %v1867 = vld [vmem:[%s1269 + $0x558] sm:$0xff]
        %v1868 = vld [vmem:[%s1269 + $0x560] sm:$0xff]
        %v1869 = vld [vmem:[%s1269 + $0x568] sm:$0xff]
        %v1870 = vld [vmem:[%s1269 + $0x570] sm:$0xff]
        %v1871 = vld [vmem:[%s1269 + $0x578] sm:$0xff]
        %v1872 = vld [vmem:[%s1269 + $0x580] sm:$0xff]
        %v1873 = vld [vmem:[%s1269 + $0x588] sm:$0xff]
        %v1874 = vld [vmem:[%s1269 + $0x590] sm:$0xff]
        %v1875 = vld [vmem:[%s1269 + $0x598] sm:$0xff]
        %v1876 = vld [vmem:[%s1269 + $0x5a0] sm:$0xff]
        %v1877 = vld [vmem:[%s1269 + $0x5a8] sm:$0xff]
        %v1878 = vld [vmem:[%s1269 + $0x5b0] sm:$0xff]
        %v1879 = vld [vmem:[%s1269 + $0x5b8] sm:$0xff]
        %v1880 = vld [vmem:[%s1269 + $0x5c0] sm:$0xff]
        %v1881 = vld [vmem:[%s1269 + $0x5c8] sm:$0xff]
        %v1882 = vld [vmem:[%s1269 + $0x5d0] sm:$0xff]
        %v1883 = vld [vmem:[%s1269 + $0x5d8] sm:$0xff]
        %v1884 = vld [vmem:[%s1269 + $0x5e0] sm:$0xff]
        %v1885 = vld [vmem:[%s1269 + $0x5e8] sm:$0xff]
        %v1886 = vld [vmem:[%s1269 + $0x5f0] sm:$0xff]
        %v1887 = vld [vmem:[%s1269 + $0x5f8] sm:$0xff]
        %v1888 = vld [vmem:[%s1269 + $0x600] sm:$0xff]
        %v1889 = vld [vmem:[%s1269 + $0x608] sm:$0xff]
        %v1890 = vld [vmem:[%s1269 + $0x610] sm:$0xff]
        %v1891 = vld [vmem:[%s1269 + $0x618] sm:$0xff]
        %v1892 = vld [vmem:[%s1269 + $0x620] sm:$0xff]
        %v1893 = vld [vmem:[%s1269 + $0x628] sm:$0xff]
        %v1894 = vld [vmem:[%s1269 + $0x630] sm:$0xff]
        %v1895 = vld [vmem:[%s1269 + $0x638] sm:$0xff]
        %v1896 = vld [vmem:[%s1269 + $0x640] sm:$0xff]
        %v1897 = vld [vmem:[%s1269 + $0x648] sm:$0xff]
        %v1898 = vld [vmem:[%s1269 + $0x650] sm:$0xff]
        %v1899 = vld [vmem:[%s1269 + $0x658] sm:$0xff]
        %v1900 = vld [vmem:[%s1269 + $0x660] sm:$0xff]
        %v1901 = vld [vmem:[%s1269 + $0x668] sm:$0xff]
        %v1902 = vld [vmem:[%s1269 + $0x670] sm:$0xff]
        %v1903 = vld [vmem:[%s1269 + $0x678] sm:$0xff]
        %v1904 = vld [vmem:[%s1269 + $0x680] sm:$0xff]
        %v1905 = vld [vmem:[%s1269 + $0x688] sm:$0xff]
        %v1906 = vld [vmem:[%s1269 + $0x690] sm:$0xff]
        %v1907 = vld [vmem:[%s1269 + $0x698] sm:$0xff]
        %v1908 = vld [vmem:[%s1269 + $0x6a0] sm:$0xff]
        %v1909 = vld [vmem:[%s1269 + $0x6a8] sm:$0xff]
        %v1910 = vld [vmem:[%s1269 + $0x6b0] sm:$0xff]
        %v1911 = vld [vmem:[%s1269 + $0x6b8] sm:$0xff]
        %v1912 = vld [vmem:[%s1269 + $0x6c0] sm:$0xff]
        %v1913 = vld [vmem:[%s1269 + $0x6c8] sm:$0xff]
        %v1914 = vld [vmem:[%s1269 + $0x6d0] sm:$0xff]
        %v1915 = vld [vmem:[%s1269 + $0x6d8] sm:$0xff]
        %v1916 = vld [vmem:[%s1269 + $0x6e0] sm:$0xff]
        %v1917 = vld [vmem:[%s1269 + $0x6e8] sm:$0xff]
        %v1918 = vld [vmem:[%s1269 + $0x6f0] sm:$0xff]
        %v1919 = vld [vmem:[%s1269 + $0x6f8] sm:$0xff]
        %v1920 = vld [vmem:[%s1269 + $0x700] sm:$0xff]
        %v1921 = vld [vmem:[%s1269 + $0x708] sm:$0xff]
        %v1922 = vld [vmem:[%s1269 + $0x710] sm:$0xff]
        %v1923 = vld [vmem:[%s1269 + $0x718] sm:$0xff]
        %v1924 = vld [vmem:[%s1269 + $0x720] sm:$0xff]
        %v1925 = vld [vmem:[%s1269 + $0x728] sm:$0xff]
        %v1926 = vld [vmem:[%s1269 + $0x730] sm:$0xff]
        %v1927 = vld [vmem:[%s1269 + $0x738] sm:$0xff]
        %v1928 = vld [vmem:[%s1269 + $0x740] sm:$0xff]
        %v1929 = vld [vmem:[%s1269 + $0x748] sm:$0xff]
        %v1930 = vld [vmem:[%s1269 + $0x750] sm:$0xff]
        %v1931 = vld [vmem:[%s1269 + $0x758] sm:$0xff]
        %v1932 = vld [vmem:[%s1269 + $0x760] sm:$0xff]
        %v1933 = vld [vmem:[%s1269 + $0x768] sm:$0xff]
        %v1934 = vld [vmem:[%s1269 + $0x770] sm:$0xff]
        %v1935 = vld [vmem:[%s1269 + $0x778] sm:$0xff]
        %v1936 = vld [vmem:[%s1269 + $0x780] sm:$0xff]
        %v1937 = vld [vmem:[%s1269 + $0x788] sm:$0xff]
        %v1938 = vld [vmem:[%s1269 + $0x790] sm:$0xff]
        %v1939 = vld [vmem:[%s1269 + $0x798] sm:$0xff]
        %v1940 = vld [vmem:[%s1269 + $0x7a0] sm:$0xff]
        %v1941 = vld [vmem:[%s1269 + $0x7a8] sm:$0xff]
        %v1942 = vld [vmem:[%s1269 + $0x7b0] sm:$0xff]
        %v1943 = vld [vmem:[%s1269 + $0x7b8] sm:$0xff]
        %v1944 = vld [vmem:[%s1269 + $0x7c0] sm:$0xff]
        %v1945 = vld [vmem:[%s1269 + $0x7c8] sm:$0xff]
        %v1946 = vld [vmem:[%s1269 + $0x7d0] sm:$0xff]
        %v1947 = vld [vmem:[%s1269 + $0x7d8] sm:$0xff]
        %v1948 = vld [vmem:[%s1269 + $0x7e0] sm:$0xff]
        %v1949 = vld [vmem:[%s1269 + $0x7e8] sm:$0xff]
        %v1950 = vld [vmem:[%s1269 + $0x7f0] sm:$0xff]
        %v1951 = vld [vmem:[%s1269 + $0x7f8] sm:$0xff]
        %v1952 = vld [vmem:[%s1269 + $0x800] sm:$0xff]
        %v1953 = vld [vmem:[%s1269 + $0x808] sm:$0xff]
        %v1954 = vld [vmem:[%s1269 + $0x810] sm:$0xff]
        %v1955 = vld [vmem:[%s1269 + $0x818] sm:$0xff]
        %v1956 = vld [vmem:[%s1269 + $0x820] sm:$0xff]
        %v1957 = vld [vmem:[%s1269 + $0x828] sm:$0xff]
        %v1958 = vld [vmem:[%s1269 + $0x830] sm:$0xff]
        %v1959 = vld [vmem:[%s1269 + $0x838] sm:$0xff]
        %v1960 = vld [vmem:[%s1269 + $0x840] sm:$0xff]
        %v1961 = vld [vmem:[%s1269 + $0x848] sm:$0xff]
        %v1962 = vld [vmem:[%s1269 + $0x850] sm:$0xff]
        %v1963 = vld [vmem:[%s1269 + $0x858] sm:$0xff]
        %v1964 = vld [vmem:[%s1269 + $0x860] sm:$0xff]
        %v1965 = vld [vmem:[%s1269 + $0x868] sm:$0xff]
        %v1966 = vld [vmem:[%s1269 + $0x870] sm:$0xff]
        %v1967 = vld [vmem:[%s1269 + $0x878] sm:$0xff]
        %v1968 = vld [vmem:[%s1269 + $0x880] sm:$0xff]
        %v1969 = vld [vmem:[%s1269 + $0x888] sm:$0xff]
        %v1970 = vld [vmem:[%s1269 + $0x890] sm:$0xff]
        %v1971 = vld [vmem:[%s1269 + $0x898] sm:$0xff]
        %v1972 = vld [vmem:[%s1269 + $0x8a0] sm:$0xff]
        %v1973 = vld [vmem:[%s1269 + $0x8a8] sm:$0xff]
        %v1974 = vld [vmem:[%s1269 + $0x8b0] sm:$0xff]
        %v1975 = vld [vmem:[%s1269 + $0x8b8] sm:$0xff]
        %v1976 = vld [vmem:[%s1269 + $0x8c0] sm:$0xff]
        %v1977 = vld [vmem:[%s1269 + $0x8c8] sm:$0xff]
        %v1978 = vld [vmem:[%s1269 + $0x8d0] sm:$0xff]
        %v1979 = vld [vmem:[%s1269 + $0x8d8] sm:$0xff]
        %v1980 = vld [vmem:[%s1269 + $0x8e0] sm:$0xff]
        %v1981 = vld [vmem:[%s1269 + $0x8e8] sm:$0xff]
        %v1982 = vld [vmem:[%s1269 + $0x8f0] sm:$0xff]
        %v1983 = vld [vmem:[%s1269 + $0x8f8] sm:$0xff]
        %v1984 = vld [vmem:[%s1269 + $0x900] sm:$0xff]
        %v1985 = vld [vmem:[%s1269 + $0x908] sm:$0xff]
        %v1986 = vld [vmem:[%s1269 + $0x910] sm:$0xff]
        %v1987 = vld [vmem:[%s1269 + $0x918] sm:$0xff]
        %v1988 = vld [vmem:[%s1269 + $0x920] sm:$0xff]
        %v1989 = vld [vmem:[%s1269 + $0x928] sm:$0xff]
        %v1990 = vld [vmem:[%s1269 + $0x930] sm:$0xff]
        %v1991 = vld [vmem:[%s1269 + $0x938] sm:$0xff]
        %v1992 = vld [vmem:[%s1269 + $0x940] sm:$0xff]
        %v1993 = vld [vmem:[%s1269 + $0x948] sm:$0xff]
        %v1994 = vld [vmem:[%s1269 + $0x950] sm:$0xff]
        %v1995 = vld [vmem:[%s1269 + $0x958] sm:$0xff]
        %v1996 = vld [vmem:[%s1269 + $0x960] sm:$0xff]
        %v1997 = vld [vmem:[%s1269 + $0x968] sm:$0xff]
        %v1998 = vld [vmem:[%s1269 + $0x970] sm:$0xff]
        %v1999 = vld [vmem:[%s1269 + $0x978] sm:$0xff]
        %v2000 = vld [vmem:[%s1269 + $0x980] sm:$0xff]
        %v2001 = vld [vmem:[%s1269 + $0x988] sm:$0xff]
        %v2002 = vld [vmem:[%s1269 + $0x990] sm:$0xff]
        %v2003 = vld [vmem:[%s1269 + $0x998] sm:$0xff]
        %v2004 = vld [vmem:[%s1269 + $0x9a0] sm:$0xff]
        %v2005 = vld [vmem:[%s1269 + $0x9a8] sm:$0xff]
        %v2006 = vld [vmem:[%s1269 + $0x9b0] sm:$0xff]
        %v2007 = vld [vmem:[%s1269 + $0x9b8] sm:$0xff]
        %v2008 = vld [vmem:[%s1269 + $0x9c0] sm:$0xff]
        %v2009 = vld [vmem:[%s1269 + $0x9c8] sm:$0xff]
        %v2010 = vld [vmem:[%s1269 + $0x9d0] sm:$0xff]
        %v2011 = vld [vmem:[%s1269 + $0x9d8] sm:$0xff]
        %v2012 = vld [vmem:[%s1269 + $0x9e0] sm:$0xff]
        %v2013 = vld [vmem:[%s1269 + $0x9e8] sm:$0xff]
        %v2014 = vld [vmem:[%s1269 + $0x9f0] sm:$0xff]
        %v2015 = vld [vmem:[%s1269 + $0x9f8] sm:$0xff]
        %v2016 = vld [vmem:[%s1269 + $0xa00] sm:$0xff]
        %v2017 = vld [vmem:[%s1269 + $0xa08] sm:$0xff]
        %v2018 = vld [vmem:[%s1269 + $0xa10] sm:$0xff]
        %v2019 = vld [vmem:[%s1269 + $0xa18] sm:$0xff]
        %v2020 = vld [vmem:[%s1269 + $0xa20] sm:$0xff]
        %v2021 = vld [vmem:[%s1269 + $0xa28] sm:$0xff]
        %v2022 = vld [vmem:[%s1269 + $0xa30] sm:$0xff]
        %v2023 = vld [vmem:[%s1269 + $0xa38] sm:$0xff]
        %v2024 = vld [vmem:[%s1269 + $0xa40] sm:$0xff]
        %v2025 = vld [vmem:[%s1269 + $0xa48] sm:$0xff]
        %v2026 = vld [vmem:[%s1269 + $0xa50] sm:$0xff]
        %v2027 = vld [vmem:[%s1269 + $0xa58] sm:$0xff]
        %v2028 = vld [vmem:[%s1269 + $0xa60] sm:$0xff]
        %v2029 = vld [vmem:[%s1269 + $0xa68] sm:$0xff]
        %v2030 = vld [vmem:[%s1269 + $0xa70] sm:$0xff]
        %v2031 = vld [vmem:[%s1269 + $0xa78] sm:$0xff]
        %v2032 = vld [vmem:[%s1269 + $0xa80] sm:$0xff]
        %v2033 = vld [vmem:[%s1269 + $0xa88] sm:$0xff]
        %v2034 = vld [vmem:[%s1269 + $0xa90] sm:$0xff]
        %v2035 = vld [vmem:[%s1269 + $0xa98] sm:$0xff]
        %v2036 = vld [vmem:[%s1269 + $0xaa0] sm:$0xff]
        %v2037 = vld [vmem:[%s1269 + $0xaa8] sm:$0xff]
        %v2038 = vld [vmem:[%s1269 + $0xab0] sm:$0xff]
        %v2039 = vld [vmem:[%s1269 + $0xab8] sm:$0xff]
        %v2040 = vld [vmem:[%s1269 + $0xac0] sm:$0xff]
        %v2041 = vld [vmem:[%s1269 + $0xac8] sm:$0xff]
        %v2042 = vld [vmem:[%s1269 + $0xad0] sm:$0xff]
        %v2043 = vld [vmem:[%s1269 + $0xad8] sm:$0xff]
        %v2044 = vld [vmem:[%s1269 + $0xae0] sm:$0xff]
        %v2045 = vld [vmem:[%s1269 + $0xae8] sm:$0xff]
        %v2046 = vld [vmem:[%s1269 + $0xaf0] sm:$0xff]
        %v2047 = vld [vmem:[%s1269 + $0xaf8] sm:$0xff]
        %v2048 = vld [vmem:[%s1269 + $0xb00] sm:$0xff]
        %v2049 = vld [vmem:[%s1269 + $0xb08] sm:$0xff]
        %v2050 = vld [vmem:[%s1269 + $0xb10] sm:$0xff]
        %v2051 = vld [vmem:[%s1269 + $0xb18] sm:$0xff]
        %v2052 = vld [vmem:[%s1269 + $0xb20] sm:$0xff]
        %v2053 = vld [vmem:[%s1269 + $0xb28] sm:$0xff]
        %v2054 = vld [vmem:[%s1269 + $0xb30] sm:$0xff]
        %v2055 = vld [vmem:[%s1269 + $0xb38] sm:$0xff]
        %v2056 = vld [vmem:[%s1269 + $0xb40] sm:$0xff]
        %v2057 = vld [vmem:[%s1269 + $0xb48] sm:$0xff]
        %v2058 = vld [vmem:[%s1269 + $0xb50] sm:$0xff]
        %v2059 = vld [vmem:[%s1269 + $0xb58] sm:$0xff]
        %v2060 = vld [vmem:[%s1269 + $0xb60] sm:$0xff]
        %v2061 = vld [vmem:[%s1269 + $0xb68] sm:$0xff]
        %v2062 = vld [vmem:[%s1269 + $0xb70] sm:$0xff]
        %v2063 = vld [vmem:[%s1269 + $0xb78] sm:$0xff]
        %v2064 = vld [vmem:[%s1269 + $0xb80] sm:$0xff]
        %v2065 = vld [vmem:[%s1269 + $0xb88] sm:$0xff]
        %v2066 = vld [vmem:[%s1269 + $0xb90] sm:$0xff]
        %v2067 = vld [vmem:[%s1269 + $0xb98] sm:$0xff]
        %v2068 = vld [vmem:[%s1269 + $0xba0] sm:$0xff]
        %v2069 = vld [vmem:[%s1269 + $0xba8] sm:$0xff]
        %v2070 = vld [vmem:[%s1269 + $0xbb0] sm:$0xff]
        %v2071 = vld [vmem:[%s1269 + $0xbb8] sm:$0xff]
        %v2072 = vld [vmem:[%s1269 + $0xbc0] sm:$0xff]
        %v2073 = vld [vmem:[%s1269 + $0xbc8] sm:$0xff]
        %v2074 = vld [vmem:[%s1269 + $0xbd0] sm:$0xff]
        %v2075 = vld [vmem:[%s1269 + $0xbd8] sm:$0xff]
        %v2076 = vld [vmem:[%s1269 + $0xbe0] sm:$0xff]
        %v2077 = vld [vmem:[%s1269 + $0xbe8] sm:$0xff]
        %v2078 = vld [vmem:[%s1269 + $0xbf0] sm:$0xff]
        %v2079 = vld [vmem:[%s1269 + $0xbf8] sm:$0xff]
        %v2080 = vld [vmem:[%s1269 + $0xc00] sm:$0xff]
        %v2081 = vld [vmem:[%s1269 + $0xc08] sm:$0xff]
        %v2082 = vld [vmem:[%s1269 + $0xc10] sm:$0xff]
        %v2083 = vld [vmem:[%s1269 + $0xc18] sm:$0xff]
        %v2084 = vld [vmem:[%s1269 + $0xc20] sm:$0xff]
        %v2085 = vld [vmem:[%s1269 + $0xc28] sm:$0xff]
        %v2086 = vld [vmem:[%s1269 + $0xc30] sm:$0xff]
        %v2087 = vld [vmem:[%s1269 + $0xc38] sm:$0xff]
        %v2088 = vld [vmem:[%s1269 + $0xc40] sm:$0xff]
        %v2089 = vld [vmem:[%s1269 + $0xc48] sm:$0xff]
        %v2090 = vld [vmem:[%s1269 + $0xc50] sm:$0xff]
        %v2091 = vld [vmem:[%s1269 + $0xc58] sm:$0xff]
        %v2092 = vld [vmem:[%s1269 + $0xc60] sm:$0xff]
        %v2093 = vld [vmem:[%s1269 + $0xc68] sm:$0xff]
        %v2094 = vld [vmem:[%s1269 + $0xc70] sm:$0xff]
        %v2095 = vld [vmem:[%s1269 + $0xc78] sm:$0xff]
        %v2096 = vld [vmem:[%s1269 + $0xc80] sm:$0xff]
        %v2097 = vld [vmem:[%s1269 + $0xc88] sm:$0xff]
        %v2098 = vld [vmem:[%s1269 + $0xc90] sm:$0xff]
        %v2099 = vld [vmem:[%s1269 + $0xc98] sm:$0xff]
        %v2100 = vld [vmem:[%s1269 + $0xca0] sm:$0xff]
        %v2101 = vld [vmem:[%s1269 + $0xca8] sm:$0xff]
        %v2102 = vld [vmem:[%s1269 + $0xcb0] sm:$0xff]
        %v2103 = vld [vmem:[%s1269 + $0xcb8] sm:$0xff]
        %v2104 = vld [vmem:[%s1269 + $0xcc0] sm:$0xff]
        %v2105 = vld [vmem:[%s1269 + $0xcc8] sm:$0xff]
        %v2106 = vld [vmem:[%s1269 + $0xcd0] sm:$0xff]
        %v2107 = vld [vmem:[%s1269 + $0xcd8] sm:$0xff]
        %v2108 = vld [vmem:[%s1269 + $0xce0] sm:$0xff]
        %v2109 = vld [vmem:[%s1269 + $0xce8] sm:$0xff]
        %v2110 = vld [vmem:[%s1269 + $0xcf0] sm:$0xff]
        %v2111 = vld [vmem:[%s1269 + $0xcf8] sm:$0xff]
        %v2112 = vld [vmem:[%s1269 + $0xd00] sm:$0xff]
        %v2113 = vld [vmem:[%s1269 + $0xd08] sm:$0xff]
        %v2114 = vld [vmem:[%s1269 + $0xd10] sm:$0xff]
        %v2115 = vld [vmem:[%s1269 + $0xd18] sm:$0xff]
        %v2116 = vld [vmem:[%s1269 + $0xd20] sm:$0xff]
        %v2117 = vld [vmem:[%s1269 + $0xd28] sm:$0xff]
        %v2118 = vld [vmem:[%s1269 + $0xd30] sm:$0xff]
        %v2119 = vld [vmem:[%s1269 + $0xd38] sm:$0xff]
        %v2120 = vld [vmem:[%s1269 + $0xd40] sm:$0xff]
        %v2121 = vld [vmem:[%s1269 + $0xd48] sm:$0xff]
        %v2122 = vld [vmem:[%s1269 + $0xd50] sm:$0xff]
        %v2123 = vld [vmem:[%s1269 + $0xd58] sm:$0xff]
        %v2124 = vld [vmem:[%s1269 + $0xd60] sm:$0xff]
        %v2125 = vld [vmem:[%s1269 + $0xd68] sm:$0xff]
        %v2126 = vld [vmem:[%s1269 + $0xd70] sm:$0xff]
        %v2127 = vld [vmem:[%s1269 + $0xd78] sm:$0xff]
        %v2128 = vld [vmem:[%s1269 + $0xd80] sm:$0xff]
        %v2129 = vld [vmem:[%s1269 + $0xd88] sm:$0xff]
        %v2130 = vld [vmem:[%s1269 + $0xd90] sm:$0xff]
        %v2131 = vld [vmem:[%s1269 + $0xd98] sm:$0xff]
        %v2132 = vld [vmem:[%s1269 + $0xda0] sm:$0xff]
        %v2133 = vld [vmem:[%s1269 + $0xda8] sm:$0xff]
        %v2134 = vld [vmem:[%s1269 + $0xdb0] sm:$0xff]
        %v2135 = vld [vmem:[%s1269 + $0xdb8] sm:$0xff]
        %v2136 = vld [vmem:[%s1269 + $0xdc0] sm:$0xff]
        %v2137 = vld [vmem:[%s1269 + $0xdc8] sm:$0xff]
        %v2138 = vld [vmem:[%s1269 + $0xdd0] sm:$0xff]
        %v2139 = vld [vmem:[%s1269 + $0xdd8] sm:$0xff]
        %v2140 = vld [vmem:[%s1269 + $0xde0] sm:$0xff]
        %v2141 = vld [vmem:[%s1269 + $0xde8] sm:$0xff]
        %v2142 = vld [vmem:[%s1269 + $0xdf0] sm:$0xff]
        %v2143 = vld [vmem:[%s1269 + $0xdf8] sm:$0xff]
        %v2144 = vld [vmem:[%s1269 + $0xe00] sm:$0xff]
        %v2145 = vld [vmem:[%s1269 + $0xe08] sm:$0xff]
        %v2146 = vld [vmem:[%s1269 + $0xe10] sm:$0xff]
        %v2147 = vld [vmem:[%s1269 + $0xe18] sm:$0xff]
        %v2148 = vld [vmem:[%s1269 + $0xe20] sm:$0xff]
        %v2149 = vld [vmem:[%s1269 + $0xe28] sm:$0xff]
        %v2150 = vld [vmem:[%s1269 + $0xe30] sm:$0xff]
        %v2151 = vld [vmem:[%s1269 + $0xe38] sm:$0xff]
        %v2152 = vld [vmem:[%s1269 + $0xe40] sm:$0xff]
        %v2153 = vld [vmem:[%s1269 + $0xe48] sm:$0xff]
        %v2154 = vld [vmem:[%s1269 + $0xe50] sm:$0xff]
        %v2155 = vld [vmem:[%s1269 + $0xe58] sm:$0xff]
        %v2156 = vld [vmem:[%s1269 + $0xe60] sm:$0xff]
        %v2157 = vld [vmem:[%s1269 + $0xe68] sm:$0xff]
        %v2158 = vld [vmem:[%s1269 + $0xe70] sm:$0xff]
        %v2159 = vld [vmem:[%s1269 + $0xe78] sm:$0xff]
        %v2160 = vld [vmem:[%s1269 + $0xe80] sm:$0xff]
        %v2161 = vld [vmem:[%s1269 + $0xe88] sm:$0xff]
        %v2162 = vld [vmem:[%s1269 + $0xe90] sm:$0xff]
        %v2163 = vld [vmem:[%s1269 + $0xe98] sm:$0xff]
        %v2164 = vld [vmem:[%s1269 + $0xea0] sm:$0xff]
        %v2165 = vld [vmem:[%s1269 + $0xea8] sm:$0xff]
        %v2166 = vld [vmem:[%s1269 + $0xeb0] sm:$0xff]
        %v2167 = vld [vmem:[%s1269 + $0xeb8] sm:$0xff]
        %v2168 = vld [vmem:[%s1269 + $0xec0] sm:$0xff]
        %v2169 = vld [vmem:[%s1269 + $0xec8] sm:$0xff]
        %v2170 = vld [vmem:[%s1269 + $0xed0] sm:$0xff]
        %v2171 = vld [vmem:[%s1269 + $0xed8] sm:$0xff]
        %v2172 = vld [vmem:[%s1269 + $0xee0] sm:$0xff]
        %v2173 = vld [vmem:[%s1269 + $0xee8] sm:$0xff]
        %v2174 = vld [vmem:[%s1269 + $0xef0] sm:$0xff]
        %v2175 = vld [vmem:[%s1269 + $0xef8] sm:$0xff]
        %v2176 = vld [vmem:[%s1269 + $0xf00] sm:$0xff]
        %v2177 = vld [vmem:[%s1269 + $0xf08] sm:$0xff]
        %v2178 = vld [vmem:[%s1269 + $0xf10] sm:$0xff]
        %v2179 = vld [vmem:[%s1269 + $0xf18] sm:$0xff]
        %v2180 = vld [vmem:[%s1269 + $0xf20] sm:$0xff]
        %v2181 = vld [vmem:[%s1269 + $0xf28] sm:$0xff]
        %v2182 = vld [vmem:[%s1269 + $0xf30] sm:$0xff]
        %v2183 = vld [vmem:[%s1269 + $0xf38] sm:$0xff]
        %v2184 = vld [vmem:[%s1269 + $0xf40] sm:$0xff]
        %v2185 = vld [vmem:[%s1269 + $0xf48] sm:$0xff]
        %v2186 = vld [vmem:[%s1269 + $0xf50] sm:$0xff]
        %v2187 = vld [vmem:[%s1269 + $0xf58] sm:$0xff]
        %v2188 = vld [vmem:[%s1269 + $0xf60] sm:$0xff]
        %v2189 = vld [vmem:[%s1269 + $0xf68] sm:$0xff]
        %v2190 = vld [vmem:[%s1269 + $0xf70] sm:$0xff]
        %v2191 = vld [vmem:[%s1269 + $0xf78] sm:$0xff]
        %v2192 = vld [vmem:[%s1269 + $0xf80] sm:$0xff]
        %v2193 = vld [vmem:[%s1269 + $0xf88] sm:$0xff]
        %v2194 = vld [vmem:[%s1269 + $0xf90] sm:$0xff]
        %v2195 = vld [vmem:[%s1269 + $0xf98] sm:$0xff]
        %v2196 = vld [vmem:[%s1269 + $0xfa0] sm:$0xff]
        %v2197 = vld [vmem:[%s1269 + $0xfa8] sm:$0xff]
        %v2198 = vld [vmem:[%s1269 + $0xfb0] sm:$0xff]
        %v2199 = vld [vmem:[%s1269 + $0xfb8] sm:$0xff]
        %v2200 = vld [vmem:[%s1269 + $0xfc0] sm:$0xff]
        %v2201 = vld [vmem:[%s1269 + $0xfc8] sm:$0xff]
        %v2202 = vld [vmem:[%s1269 + $0xfd0] sm:$0xff]
        %v2203 = vld [vmem:[%s1269 + $0xfd8] sm:$0xff]
        %v2204 = vld [vmem:[%s1269 + $0xfe0] sm:$0xff]
        %v2205 = vld [vmem:[%s1269 + $0xfe8] sm:$0xff]
        %v2206 = vld [vmem:[%s1269 + $0xff0] sm:$0xff]
        %v2207 = vld [vmem:[%s1269 + $0xff8] sm:$0xff]
        %v2212 = vunpack.c.l.b16 %v1692
        %v2213 = vunpack.c.h.b16 %v1692
        %v2214 = vunpack.c.l.b16 %v1693
        %v2215 = vunpack.c.h.b16 %v1693
        %v2216 = vunpack.c.l.b16 %v1694
        %v2217 = vunpack.c.h.b16 %v1694
        %v2218 = vunpack.c.l.b16 %v1695
        %v2219 = vunpack.c.h.b16 %v1695
        %v2220 = vpack.c.b16 %v2212, %v2212
        %v2221 = vpack.c.b16 %v2213, %v2213
        %v2222 = vpack.c.b16 %v2214, %v2214
        %v2223 = vpack.c.b16 %v2215, %v2215
        %v2224 = vpack.c.b16 %v2216, %v2216
        %v2225 = vpack.c.b16 %v2217, %v2217
        %v2226 = vpack.c.b16 %v2218, %v2218
        %v2227 = vpack.c.b16 %v2219, %v2219
        %v2748 = vunpack.c.l.b16 %v1696
        %v2749 = vunpack.c.h.b16 %v1696
        %v2750 = vunpack.c.l.b16 %v1697
        %v2751 = vunpack.c.h.b16 %v1697
        %v2752 = vunpack.c.l.b16 %v1698
        %v2753 = vunpack.c.h.b16 %v1698
        %v2754 = vunpack.c.l.b16 %v1699
        %v2755 = vunpack.c.h.b16 %v1699
        %v2756 = vunpack.c.l.b16 %v1700
        %v2757 = vunpack.c.h.b16 %v1700
        %v2758 = vunpack.c.l.b16 %v1701
        %v2759 = vunpack.c.h.b16 %v1701
        %v2760 = vunpack.c.l.b16 %v1702
        %v2761 = vunpack.c.h.b16 %v1702
        %v2762 = vunpack.c.l.b16 %v1703
        %v2763 = vunpack.c.h.b16 %v1703
        %v2764 = vunpack.c.l.b16 %v1704
        %v2765 = vunpack.c.h.b16 %v1704
        %v2766 = vunpack.c.l.b16 %v1705
        %v2767 = vunpack.c.h.b16 %v1705
        %v2768 = vunpack.c.l.b16 %v1706
        %v2769 = vunpack.c.h.b16 %v1706
        %v2770 = vunpack.c.l.b16 %v1707
        %v2771 = vunpack.c.h.b16 %v1707
        %v2772 = vunpack.c.l.b16 %v1708
        %v2773 = vunpack.c.h.b16 %v1708
        %v2774 = vunpack.c.l.b16 %v1709
        %v2775 = vunpack.c.h.b16 %v1709
        %v2776 = vunpack.c.l.b16 %v1710
        %v2777 = vunpack.c.h.b16 %v1710
        %v2778 = vunpack.c.l.b16 %v1711
        %v2779 = vunpack.c.h.b16 %v1711
        %v2780 = vunpack.c.l.b16 %v1712
        %v2781 = vunpack.c.h.b16 %v1712
        %v2782 = vunpack.c.l.b16 %v1713
        %v2783 = vunpack.c.h.b16 %v1713
        %v2784 = vunpack.c.l.b16 %v1714
        %v2785 = vunpack.c.h.b16 %v1714
        %v2786 = vunpack.c.l.b16 %v1715
        %v2787 = vunpack.c.h.b16 %v1715
        %v2788 = vunpack.c.l.b16 %v1716
        %v2789 = vunpack.c.h.b16 %v1716
        %v2790 = vunpack.c.l.b16 %v1717
        %v2791 = vunpack.c.h.b16 %v1717
        %v2792 = vunpack.c.l.b16 %v1718
        %v2793 = vunpack.c.h.b16 %v1718
        %v2794 = vunpack.c.l.b16 %v1719
        %v2795 = vunpack.c.h.b16 %v1719
        %v2796 = vunpack.c.l.b16 %v1720
        %v2797 = vunpack.c.h.b16 %v1720
        %v2798 = vunpack.c.l.b16 %v1721
        %v2799 = vunpack.c.h.b16 %v1721
        %v2800 = vunpack.c.l.b16 %v1722
        %v2801 = vunpack.c.h.b16 %v1722
        %v2802 = vunpack.c.l.b16 %v1723
        %v2803 = vunpack.c.h.b16 %v1723
        %v2804 = vunpack.c.l.b16 %v1724
        %v2805 = vunpack.c.h.b16 %v1724
        %v2806 = vunpack.c.l.b16 %v1725
        %v2807 = vunpack.c.h.b16 %v1725
        %v2808 = vunpack.c.l.b16 %v1726
        %v2809 = vunpack.c.h.b16 %v1726
        %v2810 = vunpack.c.l.b16 %v1727
        %v2811 = vunpack.c.h.b16 %v1727
        %v2812 = vunpack.c.l.b16 %v1728
        %v2813 = vunpack.c.h.b16 %v1728
        %v2814 = vunpack.c.l.b16 %v1729
        %v2815 = vunpack.c.h.b16 %v1729
        %v2816 = vunpack.c.l.b16 %v1730
        %v2817 = vunpack.c.h.b16 %v1730
        %v2818 = vunpack.c.l.b16 %v1731
        %v2819 = vunpack.c.h.b16 %v1731
        %v2820 = vunpack.c.l.b16 %v1732
        %v2821 = vunpack.c.h.b16 %v1732
        %v2822 = vunpack.c.l.b16 %v1733
        %v2823 = vunpack.c.h.b16 %v1733
        %v2824 = vunpack.c.l.b16 %v1734
        %v2825 = vunpack.c.h.b16 %v1734
        %v2826 = vunpack.c.l.b16 %v1735
        %v2827 = vunpack.c.h.b16 %v1735
        %v2828 = vunpack.c.l.b16 %v1736
        %v2829 = vunpack.c.h.b16 %v1736
        %v2830 = vunpack.c.l.b16 %v1737
        %v2831 = vunpack.c.h.b16 %v1737
        %v2832 = vunpack.c.l.b16 %v1738
        %v2833 = vunpack.c.h.b16 %v1738
        %v2834 = vunpack.c.l.b16 %v1739
        %v2835 = vunpack.c.h.b16 %v1739
        %v2836 = vunpack.c.l.b16 %v1740
        %v2837 = vunpack.c.h.b16 %v1740
        %v2838 = vunpack.c.l.b16 %v1741
        %v2839 = vunpack.c.h.b16 %v1741
        %v2840 = vunpack.c.l.b16 %v1742
        %v2841 = vunpack.c.h.b16 %v1742
        %v2842 = vunpack.c.l.b16 %v1743
        %v2843 = vunpack.c.h.b16 %v1743
        %v2844 = vunpack.c.l.b16 %v1744
        %v2845 = vunpack.c.h.b16 %v1744
        %v2846 = vunpack.c.l.b16 %v1745
        %v2847 = vunpack.c.h.b16 %v1745
        %v2848 = vunpack.c.l.b16 %v1746
        %v2849 = vunpack.c.h.b16 %v1746
        %v2850 = vunpack.c.l.b16 %v1747
        %v2851 = vunpack.c.h.b16 %v1747
        %v2852 = vunpack.c.l.b16 %v1748
        %v2853 = vunpack.c.h.b16 %v1748
        %v2854 = vunpack.c.l.b16 %v1749
        %v2855 = vunpack.c.h.b16 %v1749
        %v2856 = vunpack.c.l.b16 %v1750
        %v2857 = vunpack.c.h.b16 %v1750
        %v2858 = vunpack.c.l.b16 %v1751
        %v2859 = vunpack.c.h.b16 %v1751
        %v2860 = vunpack.c.l.b16 %v1752
        %v2861 = vunpack.c.h.b16 %v1752
        %v2862 = vunpack.c.l.b16 %v1753
        %v2863 = vunpack.c.h.b16 %v1753
        %v2864 = vunpack.c.l.b16 %v1754
        %v2865 = vunpack.c.h.b16 %v1754
        %v2866 = vunpack.c.l.b16 %v1755
        %v2867 = vunpack.c.h.b16 %v1755
        %v2868 = vunpack.c.l.b16 %v1756
        %v2869 = vunpack.c.h.b16 %v1756
        %v2870 = vunpack.c.l.b16 %v1757
        %v2871 = vunpack.c.h.b16 %v1757
        %v2872 = vunpack.c.l.b16 %v1758
        %v2873 = vunpack.c.h.b16 %v1758
        %v2874 = vunpack.c.l.b16 %v1759
        %v2875 = vunpack.c.h.b16 %v1759
        %v2876 = vunpack.c.l.b16 %v1760
        %v2877 = vunpack.c.h.b16 %v1760
        %v2878 = vunpack.c.l.b16 %v1761
        %v2879 = vunpack.c.h.b16 %v1761
        %v2880 = vunpack.c.l.b16 %v1762
        %v2881 = vunpack.c.h.b16 %v1762
        %v2882 = vunpack.c.l.b16 %v1763
        %v2883 = vunpack.c.h.b16 %v1763
        %v2884 = vunpack.c.l.b16 %v1764
        %v2885 = vunpack.c.h.b16 %v1764
        %v2886 = vunpack.c.l.b16 %v1765
        %v2887 = vunpack.c.h.b16 %v1765
        %v2888 = vunpack.c.l.b16 %v1766
        %v2889 = vunpack.c.h.b16 %v1766
        %v2890 = vunpack.c.l.b16 %v1767
        %v2891 = vunpack.c.h.b16 %v1767
        %v2892 = vunpack.c.l.b16 %v1768
        %v2893 = vunpack.c.h.b16 %v1768
        %v2894 = vunpack.c.l.b16 %v1769
        %v2895 = vunpack.c.h.b16 %v1769
        %v2896 = vunpack.c.l.b16 %v1770
        %v2897 = vunpack.c.h.b16 %v1770
        %v2898 = vunpack.c.l.b16 %v1771
        %v2899 = vunpack.c.h.b16 %v1771
        %v2900 = vunpack.c.l.b16 %v1772
        %v2901 = vunpack.c.h.b16 %v1772
        %v2902 = vunpack.c.l.b16 %v1773
        %v2903 = vunpack.c.h.b16 %v1773
        %v2904 = vunpack.c.l.b16 %v1774
        %v2905 = vunpack.c.h.b16 %v1774
        %v2906 = vunpack.c.l.b16 %v1775
        %v2907 = vunpack.c.h.b16 %v1775
        %v2908 = vunpack.c.l.b16 %v1776
        %v2909 = vunpack.c.h.b16 %v1776
        %v2910 = vunpack.c.l.b16 %v1777
        %v2911 = vunpack.c.h.b16 %v1777
        %v2912 = vunpack.c.l.b16 %v1778
        %v2913 = vunpack.c.h.b16 %v1778
        %v2914 = vunpack.c.l.b16 %v1779
        %v2915 = vunpack.c.h.b16 %v1779
        %v2916 = vunpack.c.l.b16 %v1780
        %v2917 = vunpack.c.h.b16 %v1780
        %v2918 = vunpack.c.l.b16 %v1781
        %v2919 = vunpack.c.h.b16 %v1781
        %v2920 = vunpack.c.l.b16 %v1782
        %v2921 = vunpack.c.h.b16 %v1782
        %v2922 = vunpack.c.l.b16 %v1783
        %v2923 = vunpack.c.h.b16 %v1783
        %v2924 = vunpack.c.l.b16 %v1784
        %v2925 = vunpack.c.h.b16 %v1784
        %v2926 = vunpack.c.l.b16 %v1785
        %v2927 = vunpack.c.h.b16 %v1785
        %v2928 = vunpack.c.l.b16 %v1786
        %v2929 = vunpack.c.h.b16 %v1786
        %v2930 = vunpack.c.l.b16 %v1787
        %v2931 = vunpack.c.h.b16 %v1787
        %v2932 = vunpack.c.l.b16 %v1788
        %v2933 = vunpack.c.h.b16 %v1788
        %v2934 = vunpack.c.l.b16 %v1789
        %v2935 = vunpack.c.h.b16 %v1789
        %v2936 = vunpack.c.l.b16 %v1790
        %v2937 = vunpack.c.h.b16 %v1790
        %v2938 = vunpack.c.l.b16 %v1791
        %v2939 = vunpack.c.h.b16 %v1791
        %v2940 = vunpack.c.l.b16 %v1792
        %v2941 = vunpack.c.h.b16 %v1792
        %v2942 = vunpack.c.l.b16 %v1793
        %v2943 = vunpack.c.h.b16 %v1793
        %v2944 = vunpack.c.l.b16 %v1794
        %v2945 = vunpack.c.h.b16 %v1794
        %v2946 = vunpack.c.l.b16 %v1795
        %v2947 = vunpack.c.h.b16 %v1795
        %v2948 = vunpack.c.l.b16 %v1796
        %v2949 = vunpack.c.h.b16 %v1796
        %v2950 = vunpack.c.l.b16 %v1797
        %v2951 = vunpack.c.h.b16 %v1797
        %v2952 = vunpack.c.l.b16 %v1798
        %v2953 = vunpack.c.h.b16 %v1798
        %v2954 = vunpack.c.l.b16 %v1799
        %v2955 = vunpack.c.h.b16 %v1799
        %v2956 = vunpack.c.l.b16 %v1800
        %v2957 = vunpack.c.h.b16 %v1800
        %v2958 = vunpack.c.l.b16 %v1801
        %v2959 = vunpack.c.h.b16 %v1801
        %v2960 = vunpack.c.l.b16 %v1802
        %v2961 = vunpack.c.h.b16 %v1802
        %v2962 = vunpack.c.l.b16 %v1803
        %v2963 = vunpack.c.h.b16 %v1803
        %v2964 = vunpack.c.l.b16 %v1804
        %v2965 = vunpack.c.h.b16 %v1804
        %v2966 = vunpack.c.l.b16 %v1805
        %v2967 = vunpack.c.h.b16 %v1805
        %v2968 = vunpack.c.l.b16 %v1806
        %v2969 = vunpack.c.h.b16 %v1806
        %v2970 = vunpack.c.l.b16 %v1807
        %v2971 = vunpack.c.h.b16 %v1807
        %v2972 = vunpack.c.l.b16 %v1808
        %v2973 = vunpack.c.h.b16 %v1808
        %v2974 = vunpack.c.l.b16 %v1809
        %v2975 = vunpack.c.h.b16 %v1809
        %v2976 = vunpack.c.l.b16 %v1810
        %v2977 = vunpack.c.h.b16 %v1810
        %v2978 = vunpack.c.l.b16 %v1811
        %v2979 = vunpack.c.h.b16 %v1811
        %v2980 = vunpack.c.l.b16 %v1812
        %v2981 = vunpack.c.h.b16 %v1812
        %v2982 = vunpack.c.l.b16 %v1813
        %v2983 = vunpack.c.h.b16 %v1813
        %v2984 = vunpack.c.l.b16 %v1814
        %v2985 = vunpack.c.h.b16 %v1814
        %v2986 = vunpack.c.l.b16 %v1815
        %v2987 = vunpack.c.h.b16 %v1815
        %v2988 = vunpack.c.l.b16 %v1816
        %v2989 = vunpack.c.h.b16 %v1816
        %v2990 = vunpack.c.l.b16 %v1817
        %v2991 = vunpack.c.h.b16 %v1817
        %v2992 = vunpack.c.l.b16 %v1818
        %v2993 = vunpack.c.h.b16 %v1818
        %v2994 = vunpack.c.l.b16 %v1819
        %v2995 = vunpack.c.h.b16 %v1819
        %v2996 = vunpack.c.l.b16 %v1820
        %v2997 = vunpack.c.h.b16 %v1820
        %v2998 = vunpack.c.l.b16 %v1821
        %v2999 = vunpack.c.h.b16 %v1821
        %v3000 = vunpack.c.l.b16 %v1822
        %v3001 = vunpack.c.h.b16 %v1822
        %v3002 = vunpack.c.l.b16 %v1823
        %v3003 = vunpack.c.h.b16 %v1823
        %v3004 = vunpack.c.l.b16 %v1824
        %v3005 = vunpack.c.h.b16 %v1824
        %v3006 = vunpack.c.l.b16 %v1825
        %v3007 = vunpack.c.h.b16 %v1825
        %v3008 = vunpack.c.l.b16 %v1826
        %v3009 = vunpack.c.h.b16 %v1826
        %v3010 = vunpack.c.l.b16 %v1827
        %v3011 = vunpack.c.h.b16 %v1827
        %v3012 = vunpack.c.l.b16 %v1828
        %v3013 = vunpack.c.h.b16 %v1828
        %v3014 = vunpack.c.l.b16 %v1829
        %v3015 = vunpack.c.h.b16 %v1829
        %v3016 = vunpack.c.l.b16 %v1830
        %v3017 = vunpack.c.h.b16 %v1830
        %v3018 = vunpack.c.l.b16 %v1831
        %v3019 = vunpack.c.h.b16 %v1831
        %v3020 = vunpack.c.l.b16 %v1832
        %v3021 = vunpack.c.h.b16 %v1832
        %v3022 = vunpack.c.l.b16 %v1833
        %v3023 = vunpack.c.h.b16 %v1833
        %v3024 = vunpack.c.l.b16 %v1834
        %v3025 = vunpack.c.h.b16 %v1834
        %v3026 = vunpack.c.l.b16 %v1835
        %v3027 = vunpack.c.h.b16 %v1835
        %v3028 = vunpack.c.l.b16 %v1836
        %v3029 = vunpack.c.h.b16 %v1836
        %v3030 = vunpack.c.l.b16 %v1837
        %v3031 = vunpack.c.h.b16 %v1837
        %v3032 = vunpack.c.l.b16 %v1838
        %v3033 = vunpack.c.h.b16 %v1838
        %v3034 = vunpack.c.l.b16 %v1839
        %v3035 = vunpack.c.h.b16 %v1839
        %v3036 = vunpack.c.l.b16 %v1840
        %v3037 = vunpack.c.h.b16 %v1840
        %v3038 = vunpack.c.l.b16 %v1841
        %v3039 = vunpack.c.h.b16 %v1841
        %v3040 = vunpack.c.l.b16 %v1842
        %v3041 = vunpack.c.h.b16 %v1842
        %v3042 = vunpack.c.l.b16 %v1843
        %v3043 = vunpack.c.h.b16 %v1843
        %v3044 = vunpack.c.l.b16 %v1844
        %v3045 = vunpack.c.h.b16 %v1844
        %v3046 = vunpack.c.l.b16 %v1845
        %v3047 = vunpack.c.h.b16 %v1845
        %v3048 = vunpack.c.l.b16 %v1846
        %v3049 = vunpack.c.h.b16 %v1846
        %v3050 = vunpack.c.l.b16 %v1847
        %v3051 = vunpack.c.h.b16 %v1847
        %v3052 = vunpack.c.l.b16 %v1848
        %v3053 = vunpack.c.h.b16 %v1848
        %v3054 = vunpack.c.l.b16 %v1849
        %v3055 = vunpack.c.h.b16 %v1849
        %v3056 = vunpack.c.l.b16 %v1850
        %v3057 = vunpack.c.h.b16 %v1850
        %v3058 = vunpack.c.l.b16 %v1851
        %v3059 = vunpack.c.h.b16 %v1851
        %v3060 = vunpack.c.l.b16 %v1852
        %v3061 = vunpack.c.h.b16 %v1852
        %v3062 = vunpack.c.l.b16 %v1853
        %v3063 = vunpack.c.h.b16 %v1853
        %v3064 = vunpack.c.l.b16 %v1854
        %v3065 = vunpack.c.h.b16 %v1854
        %v3066 = vunpack.c.l.b16 %v1855
        %v3067 = vunpack.c.h.b16 %v1855
        %v3068 = vunpack.c.l.b16 %v1856
        %v3069 = vunpack.c.h.b16 %v1856
        %v3070 = vunpack.c.l.b16 %v1857
        %v3071 = vunpack.c.h.b16 %v1857
        %v3072 = vunpack.c.l.b16 %v1858
        %v3073 = vunpack.c.h.b16 %v1858
        %v3074 = vunpack.c.l.b16 %v1859
        %v3075 = vunpack.c.h.b16 %v1859
        %v3076 = vunpack.c.l.b16 %v1860
        %v3077 = vunpack.c.h.b16 %v1860
        %v3078 = vunpack.c.l.b16 %v1861
        %v3079 = vunpack.c.h.b16 %v1861
        %v3080 = vunpack.c.l.b16 %v1862
        %v3081 = vunpack.c.h.b16 %v1862
        %v3082 = vunpack.c.l.b16 %v1863
        %v3083 = vunpack.c.h.b16 %v1863
        %v3084 = vunpack.c.l.b16 %v1864
        %v3085 = vunpack.c.h.b16 %v1864
        %v3086 = vunpack.c.l.b16 %v1865
        %v3087 = vunpack.c.h.b16 %v1865
        %v3088 = vunpack.c.l.b16 %v1866
        %v3089 = vunpack.c.h.b16 %v1866
        %v3090 = vunpack.c.l.b16 %v1867
        %v3091 = vunpack.c.h.b16 %v1867
        %v3092 = vunpack.c.l.b16 %v1868
        %v3093 = vunpack.c.h.b16 %v1868
        %v3094 = vunpack.c.l.b16 %v1869
        %v3095 = vunpack.c.h.b16 %v1869
        %v3096 = vunpack.c.l.b16 %v1870
        %v3097 = vunpack.c.h.b16 %v1870
        %v3098 = vunpack.c.l.b16 %v1871
        %v3099 = vunpack.c.h.b16 %v1871
        %v3100 = vunpack.c.l.b16 %v1872
        %v3101 = vunpack.c.h.b16 %v1872
        %v3102 = vunpack.c.l.b16 %v1873
        %v3103 = vunpack.c.h.b16 %v1873
        %v3104 = vunpack.c.l.b16 %v1874
        %v3105 = vunpack.c.h.b16 %v1874
        %v3106 = vunpack.c.l.b16 %v1875
        %v3107 = vunpack.c.h.b16 %v1875
        %v3108 = vunpack.c.l.b16 %v1876
        %v3109 = vunpack.c.h.b16 %v1876
        %v3110 = vunpack.c.l.b16 %v1877
        %v3111 = vunpack.c.h.b16 %v1877
        %v3112 = vunpack.c.l.b16 %v1878
        %v3113 = vunpack.c.h.b16 %v1878
        %v3114 = vunpack.c.l.b16 %v1879
        %v3115 = vunpack.c.h.b16 %v1879
        %v3116 = vunpack.c.l.b16 %v1880
        %v3117 = vunpack.c.h.b16 %v1880
        %v3118 = vunpack.c.l.b16 %v1881
        %v3119 = vunpack.c.h.b16 %v1881
        %v3120 = vunpack.c.l.b16 %v1882
        %v3121 = vunpack.c.h.b16 %v1882
        %v3122 = vunpack.c.l.b16 %v1883
        %v3123 = vunpack.c.h.b16 %v1883
        %v3124 = vunpack.c.l.b16 %v1884
        %v3125 = vunpack.c.h.b16 %v1884
        %v3126 = vunpack.c.l.b16 %v1885
        %v3127 = vunpack.c.h.b16 %v1885
        %v3128 = vunpack.c.l.b16 %v1886
        %v3129 = vunpack.c.h.b16 %v1886
        %v3130 = vunpack.c.l.b16 %v1887
        %v3131 = vunpack.c.h.b16 %v1887
        %v3132 = vunpack.c.l.b16 %v1888
        %v3133 = vunpack.c.h.b16 %v1888
        %v3134 = vunpack.c.l.b16 %v1889
        %v3135 = vunpack.c.h.b16 %v1889
        %v3136 = vunpack.c.l.b16 %v1890
        %v3137 = vunpack.c.h.b16 %v1890
        %v3138 = vunpack.c.l.b16 %v1891
        %v3139 = vunpack.c.h.b16 %v1891
        %v3140 = vunpack.c.l.b16 %v1892
        %v3141 = vunpack.c.h.b16 %v1892
        %v3142 = vunpack.c.l.b16 %v1893
        %v3143 = vunpack.c.h.b16 %v1893
        %v3144 = vunpack.c.l.b16 %v1894
        %v3145 = vunpack.c.h.b16 %v1894
        %v3146 = vunpack.c.l.b16 %v1895
        %v3147 = vunpack.c.h.b16 %v1895
        %v3148 = vunpack.c.l.b16 %v1896
        %v3149 = vunpack.c.h.b16 %v1896
        %v3150 = vunpack.c.l.b16 %v1897
        %v3151 = vunpack.c.h.b16 %v1897
        %v3152 = vunpack.c.l.b16 %v1898
        %v3153 = vunpack.c.h.b16 %v1898
        %v3154 = vunpack.c.l.b16 %v1899
        %v3155 = vunpack.c.h.b16 %v1899
        %v3156 = vunpack.c.l.b16 %v1900
        %v3157 = vunpack.c.h.b16 %v1900
        %v3158 = vunpack.c.l.b16 %v1901
        %v3159 = vunpack.c.h.b16 %v1901
        %v3160 = vunpack.c.l.b16 %v1902
        %v3161 = vunpack.c.h.b16 %v1902
        %v3162 = vunpack.c.l.b16 %v1903
        %v3163 = vunpack.c.h.b16 %v1903
        %v3164 = vunpack.c.l.b16 %v1904
        %v3165 = vunpack.c.h.b16 %v1904
        %v3166 = vunpack.c.l.b16 %v1905
        %v3167 = vunpack.c.h.b16 %v1905
        %v3168 = vunpack.c.l.b16 %v1906
        %v3169 = vunpack.c.h.b16 %v1906
        %v3170 = vunpack.c.l.b16 %v1907
        %v3171 = vunpack.c.h.b16 %v1907
        %v3172 = vunpack.c.l.b16 %v1908
        %v3173 = vunpack.c.h.b16 %v1908
        %v3174 = vunpack.c.l.b16 %v1909
        %v3175 = vunpack.c.h.b16 %v1909
        %v3176 = vunpack.c.l.b16 %v1910
        %v3177 = vunpack.c.h.b16 %v1910
        %v3178 = vunpack.c.l.b16 %v1911
        %v3179 = vunpack.c.h.b16 %v1911
        %v3180 = vunpack.c.l.b16 %v1912
        %v3181 = vunpack.c.h.b16 %v1912
        %v3182 = vunpack.c.l.b16 %v1913
        %v3183 = vunpack.c.h.b16 %v1913
        %v3184 = vunpack.c.l.b16 %v1914
        %v3185 = vunpack.c.h.b16 %v1914
        %v3186 = vunpack.c.l.b16 %v1915
        %v3187 = vunpack.c.h.b16 %v1915
        %v3188 = vunpack.c.l.b16 %v1916
        %v3189 = vunpack.c.h.b16 %v1916
        %v3190 = vunpack.c.l.b16 %v1917
        %v3191 = vunpack.c.h.b16 %v1917
        %v3192 = vunpack.c.l.b16 %v1918
        %v3193 = vunpack.c.h.b16 %v1918
        %v3194 = vunpack.c.l.b16 %v1919
        %v3195 = vunpack.c.h.b16 %v1919
        %v3196 = vunpack.c.l.b16 %v1920
        %v3197 = vunpack.c.h.b16 %v1920
        %v3198 = vunpack.c.l.b16 %v1921
        %v3199 = vunpack.c.h.b16 %v1921
        %v3200 = vunpack.c.l.b16 %v1922
        %v3201 = vunpack.c.h.b16 %v1922
        %v3202 = vunpack.c.l.b16 %v1923
        %v3203 = vunpack.c.h.b16 %v1923
        %v3204 = vunpack.c.l.b16 %v1924
        %v3205 = vunpack.c.h.b16 %v1924
        %v3206 = vunpack.c.l.b16 %v1925
        %v3207 = vunpack.c.h.b16 %v1925
        %v3208 = vunpack.c.l.b16 %v1926
        %v3209 = vunpack.c.h.b16 %v1926
        %v3210 = vunpack.c.l.b16 %v1927
        %v3211 = vunpack.c.h.b16 %v1927
        %v3212 = vunpack.c.l.b16 %v1928
        %v3213 = vunpack.c.h.b16 %v1928
        %v3214 = vunpack.c.l.b16 %v1929
        %v3215 = vunpack.c.h.b16 %v1929
        %v3216 = vunpack.c.l.b16 %v1930
        %v3217 = vunpack.c.h.b16 %v1930
        %v3218 = vunpack.c.l.b16 %v1931
        %v3219 = vunpack.c.h.b16 %v1931
        %v3220 = vunpack.c.l.b16 %v1932
        %v3221 = vunpack.c.h.b16 %v1932
        %v3222 = vunpack.c.l.b16 %v1933
        %v3223 = vunpack.c.h.b16 %v1933
        %v3224 = vunpack.c.l.b16 %v1934
        %v3225 = vunpack.c.h.b16 %v1934
        %v3226 = vunpack.c.l.b16 %v1935
        %v3227 = vunpack.c.h.b16 %v1935
        %v3228 = vunpack.c.l.b16 %v1936
        %v3229 = vunpack.c.h.b16 %v1936
        %v3230 = vunpack.c.l.b16 %v1937
        %v3231 = vunpack.c.h.b16 %v1937
        %v3232 = vunpack.c.l.b16 %v1938
        %v3233 = vunpack.c.h.b16 %v1938
        %v3234 = vunpack.c.l.b16 %v1939
        %v3235 = vunpack.c.h.b16 %v1939
        %v3236 = vunpack.c.l.b16 %v1940
        %v3237 = vunpack.c.h.b16 %v1940
        %v3238 = vunpack.c.l.b16 %v1941
        %v3239 = vunpack.c.h.b16 %v1941
        %v3240 = vunpack.c.l.b16 %v1942
        %v3241 = vunpack.c.h.b16 %v1942
        %v3242 = vunpack.c.l.b16 %v1943
        %v3243 = vunpack.c.h.b16 %v1943
        %v3244 = vunpack.c.l.b16 %v1944
        %v3245 = vunpack.c.h.b16 %v1944
        %v3246 = vunpack.c.l.b16 %v1945
        %v3247 = vunpack.c.h.b16 %v1945
        %v3248 = vunpack.c.l.b16 %v1946
        %v3249 = vunpack.c.h.b16 %v1946
        %v3250 = vunpack.c.l.b16 %v1947
        %v3251 = vunpack.c.h.b16 %v1947
        %v3252 = vunpack.c.l.b16 %v1948
        %v3253 = vunpack.c.h.b16 %v1948
        %v3254 = vunpack.c.l.b16 %v1949
        %v3255 = vunpack.c.h.b16 %v1949
        %v3256 = vunpack.c.l.b16 %v1950
        %v3257 = vunpack.c.h.b16 %v1950
        %v3258 = vunpack.c.l.b16 %v1951
        %v3259 = vunpack.c.h.b16 %v1951
        %v3260 = vunpack.c.l.b16 %v1952
        %v3261 = vunpack.c.h.b16 %v1952
        %v3262 = vunpack.c.l.b16 %v1953
        %v3263 = vunpack.c.h.b16 %v1953
        %v3264 = vunpack.c.l.b16 %v1954
        %v3265 = vunpack.c.h.b16 %v1954
        %v3266 = vunpack.c.l.b16 %v1955
        %v3267 = vunpack.c.h.b16 %v1955
        %v3268 = vunpack.c.l.b16 %v1956
        %v3269 = vunpack.c.h.b16 %v1956
        %v3270 = vunpack.c.l.b16 %v1957
        %v3271 = vunpack.c.h.b16 %v1957
        %v3272 = vunpack.c.l.b16 %v1958
        %v3273 = vunpack.c.h.b16 %v1958
        %v3274 = vunpack.c.l.b16 %v1959
        %v3275 = vunpack.c.h.b16 %v1959
        %v3276 = vunpack.c.l.b16 %v1960
        %v3277 = vunpack.c.h.b16 %v1960
        %v3278 = vunpack.c.l.b16 %v1961
        %v3279 = vunpack.c.h.b16 %v1961
        %v3280 = vunpack.c.l.b16 %v1962
        %v3281 = vunpack.c.h.b16 %v1962
        %v3282 = vunpack.c.l.b16 %v1963
        %v3283 = vunpack.c.h.b16 %v1963
        %v3284 = vunpack.c.l.b16 %v1964
        %v3285 = vunpack.c.h.b16 %v1964
        %v3286 = vunpack.c.l.b16 %v1965
        %v3287 = vunpack.c.h.b16 %v1965
        %v3288 = vunpack.c.l.b16 %v1966
        %v3289 = vunpack.c.h.b16 %v1966
        %v3290 = vunpack.c.l.b16 %v1967
        %v3291 = vunpack.c.h.b16 %v1967
        %v3292 = vunpack.c.l.b16 %v1968
        %v3293 = vunpack.c.h.b16 %v1968
        %v3294 = vunpack.c.l.b16 %v1969
        %v3295 = vunpack.c.h.b16 %v1969
        %v3296 = vunpack.c.l.b16 %v1970
        %v3297 = vunpack.c.h.b16 %v1970
        %v3298 = vunpack.c.l.b16 %v1971
        %v3299 = vunpack.c.h.b16 %v1971
        %v3300 = vunpack.c.l.b16 %v1972
        %v3301 = vunpack.c.h.b16 %v1972
        %v3302 = vunpack.c.l.b16 %v1973
        %v3303 = vunpack.c.h.b16 %v1973
        %v3304 = vunpack.c.l.b16 %v1974
        %v3305 = vunpack.c.h.b16 %v1974
        %v3306 = vunpack.c.l.b16 %v1975
        %v3307 = vunpack.c.h.b16 %v1975
        %v3308 = vunpack.c.l.b16 %v1976
        %v3309 = vunpack.c.h.b16 %v1976
        %v3310 = vunpack.c.l.b16 %v1977
        %v3311 = vunpack.c.h.b16 %v1977
        %v3312 = vunpack.c.l.b16 %v1978
        %v3313 = vunpack.c.h.b16 %v1978
        %v3314 = vunpack.c.l.b16 %v1979
        %v3315 = vunpack.c.h.b16 %v1979
        %v3316 = vunpack.c.l.b16 %v1980
        %v3317 = vunpack.c.h.b16 %v1980
        %v3318 = vunpack.c.l.b16 %v1981
        %v3319 = vunpack.c.h.b16 %v1981
        %v3320 = vunpack.c.l.b16 %v1982
        %v3321 = vunpack.c.h.b16 %v1982
        %v3322 = vunpack.c.l.b16 %v1983
        %v3323 = vunpack.c.h.b16 %v1983
        %v3324 = vunpack.c.l.b16 %v1984
        %v3325 = vunpack.c.h.b16 %v1984
        %v3326 = vunpack.c.l.b16 %v1985
        %v3327 = vunpack.c.h.b16 %v1985
        %v3328 = vunpack.c.l.b16 %v1986
        %v3329 = vunpack.c.h.b16 %v1986
        %v3330 = vunpack.c.l.b16 %v1987
        %v3331 = vunpack.c.h.b16 %v1987
        %v3332 = vunpack.c.l.b16 %v1988
        %v3333 = vunpack.c.h.b16 %v1988
        %v3334 = vunpack.c.l.b16 %v1989
        %v3335 = vunpack.c.h.b16 %v1989
        %v3336 = vunpack.c.l.b16 %v1990
        %v3337 = vunpack.c.h.b16 %v1990
        %v3338 = vunpack.c.l.b16 %v1991
        %v3339 = vunpack.c.h.b16 %v1991
        %v3340 = vunpack.c.l.b16 %v1992
        %v3341 = vunpack.c.h.b16 %v1992
        %v3342 = vunpack.c.l.b16 %v1993
        %v3343 = vunpack.c.h.b16 %v1993
        %v3344 = vunpack.c.l.b16 %v1994
        %v3345 = vunpack.c.h.b16 %v1994
        %v3346 = vunpack.c.l.b16 %v1995
        %v3347 = vunpack.c.h.b16 %v1995
        %v3348 = vunpack.c.l.b16 %v1996
        %v3349 = vunpack.c.h.b16 %v1996
        %v3350 = vunpack.c.l.b16 %v1997
        %v3351 = vunpack.c.h.b16 %v1997
        %v3352 = vunpack.c.l.b16 %v1998
        %v3353 = vunpack.c.h.b16 %v1998
        %v3354 = vunpack.c.l.b16 %v1999
        %v3355 = vunpack.c.h.b16 %v1999
        %v3356 = vunpack.c.l.b16 %v2000
        %v3357 = vunpack.c.h.b16 %v2000
        %v3358 = vunpack.c.l.b16 %v2001
        %v3359 = vunpack.c.h.b16 %v2001
        %v3360 = vunpack.c.l.b16 %v2002
        %v3361 = vunpack.c.h.b16 %v2002
        %v3362 = vunpack.c.l.b16 %v2003
        %v3363 = vunpack.c.h.b16 %v2003
        %v3364 = vunpack.c.l.b16 %v2004
        %v3365 = vunpack.c.h.b16 %v2004
        %v3366 = vunpack.c.l.b16 %v2005
        %v3367 = vunpack.c.h.b16 %v2005
        %v3368 = vunpack.c.l.b16 %v2006
        %v3369 = vunpack.c.h.b16 %v2006
        %v3370 = vunpack.c.l.b16 %v2007
        %v3371 = vunpack.c.h.b16 %v2007
        %v3372 = vunpack.c.l.b16 %v2008
        %v3373 = vunpack.c.h.b16 %v2008
        %v3374 = vunpack.c.l.b16 %v2009
        %v3375 = vunpack.c.h.b16 %v2009
        %v3376 = vunpack.c.l.b16 %v2010
        %v3377 = vunpack.c.h.b16 %v2010
        %v3378 = vunpack.c.l.b16 %v2011
        %v3379 = vunpack.c.h.b16 %v2011
        %v3380 = vunpack.c.l.b16 %v2012
        %v3381 = vunpack.c.h.b16 %v2012
        %v3382 = vunpack.c.l.b16 %v2013
        %v3383 = vunpack.c.h.b16 %v2013
        %v3384 = vunpack.c.l.b16 %v2014
        %v3385 = vunpack.c.h.b16 %v2014
        %v3386 = vunpack.c.l.b16 %v2015
        %v3387 = vunpack.c.h.b16 %v2015
        %v3388 = vunpack.c.l.b16 %v2016
        %v3389 = vunpack.c.h.b16 %v2016
        %v3390 = vunpack.c.l.b16 %v2017
        %v3391 = vunpack.c.h.b16 %v2017
        %v3392 = vunpack.c.l.b16 %v2018
        %v3393 = vunpack.c.h.b16 %v2018
        %v3394 = vunpack.c.l.b16 %v2019
        %v3395 = vunpack.c.h.b16 %v2019
        %v3396 = vunpack.c.l.b16 %v2020
        %v3397 = vunpack.c.h.b16 %v2020
        %v3398 = vunpack.c.l.b16 %v2021
        %v3399 = vunpack.c.h.b16 %v2021
        %v3400 = vunpack.c.l.b16 %v2022
        %v3401 = vunpack.c.h.b16 %v2022
        %v3402 = vunpack.c.l.b16 %v2023
        %v3403 = vunpack.c.h.b16 %v2023
        %v3404 = vunpack.c.l.b16 %v2024
        %v3405 = vunpack.c.h.b16 %v2024
        %v3406 = vunpack.c.l.b16 %v2025
        %v3407 = vunpack.c.h.b16 %v2025
        %v3408 = vunpack.c.l.b16 %v2026
        %v3409 = vunpack.c.h.b16 %v2026
        %v3410 = vunpack.c.l.b16 %v2027
        %v3411 = vunpack.c.h.b16 %v2027
        %v3412 = vunpack.c.l.b16 %v2028
        %v3413 = vunpack.c.h.b16 %v2028
        %v3414 = vunpack.c.l.b16 %v2029
        %v3415 = vunpack.c.h.b16 %v2029
        %v3416 = vunpack.c.l.b16 %v2030
        %v3417 = vunpack.c.h.b16 %v2030
        %v3418 = vunpack.c.l.b16 %v2031
        %v3419 = vunpack.c.h.b16 %v2031
        %v3420 = vunpack.c.l.b16 %v2032
        %v3421 = vunpack.c.h.b16 %v2032
        %v3422 = vunpack.c.l.b16 %v2033
        %v3423 = vunpack.c.h.b16 %v2033
        %v3424 = vunpack.c.l.b16 %v2034
        %v3425 = vunpack.c.h.b16 %v2034
        %v3426 = vunpack.c.l.b16 %v2035
        %v3427 = vunpack.c.h.b16 %v2035
        %v3428 = vunpack.c.l.b16 %v2036
        %v3429 = vunpack.c.h.b16 %v2036
        %v3430 = vunpack.c.l.b16 %v2037
        %v3431 = vunpack.c.h.b16 %v2037
        %v3432 = vunpack.c.l.b16 %v2038
        %v3433 = vunpack.c.h.b16 %v2038
        %v3434 = vunpack.c.l.b16 %v2039
        %v3435 = vunpack.c.h.b16 %v2039
        %v3436 = vunpack.c.l.b16 %v2040
        %v3437 = vunpack.c.h.b16 %v2040
        %v3438 = vunpack.c.l.b16 %v2041
        %v3439 = vunpack.c.h.b16 %v2041
        %v3440 = vunpack.c.l.b16 %v2042
        %v3441 = vunpack.c.h.b16 %v2042
        %v3442 = vunpack.c.l.b16 %v2043
        %v3443 = vunpack.c.h.b16 %v2043
        %v3444 = vunpack.c.l.b16 %v2044
        %v3445 = vunpack.c.h.b16 %v2044
        %v3446 = vunpack.c.l.b16 %v2045
        %v3447 = vunpack.c.h.b16 %v2045
        %v3448 = vunpack.c.l.b16 %v2046
        %v3449 = vunpack.c.h.b16 %v2046
        %v3450 = vunpack.c.l.b16 %v2047
        %v3451 = vunpack.c.h.b16 %v2047
        %v3452 = vunpack.c.l.b16 %v2048
        %v3453 = vunpack.c.h.b16 %v2048
        %v3454 = vunpack.c.l.b16 %v2049
        %v3455 = vunpack.c.h.b16 %v2049
        %v3456 = vunpack.c.l.b16 %v2050
        %v3457 = vunpack.c.h.b16 %v2050
        %v3458 = vunpack.c.l.b16 %v2051
        %v3459 = vunpack.c.h.b16 %v2051
        %v3460 = vunpack.c.l.b16 %v2052
        %v3461 = vunpack.c.h.b16 %v2052
        %v3462 = vunpack.c.l.b16 %v2053
        %v3463 = vunpack.c.h.b16 %v2053
        %v3464 = vunpack.c.l.b16 %v2054
        %v3465 = vunpack.c.h.b16 %v2054
        %v3466 = vunpack.c.l.b16 %v2055
        %v3467 = vunpack.c.h.b16 %v2055
        %v3468 = vunpack.c.l.b16 %v2056
        %v3469 = vunpack.c.h.b16 %v2056
        %v3470 = vunpack.c.l.b16 %v2057
        %v3471 = vunpack.c.h.b16 %v2057
        %v3472 = vunpack.c.l.b16 %v2058
        %v3473 = vunpack.c.h.b16 %v2058
        %v3474 = vunpack.c.l.b16 %v2059
        %v3475 = vunpack.c.h.b16 %v2059
        %v3476 = vunpack.c.l.b16 %v2060
        %v3477 = vunpack.c.h.b16 %v2060
        %v3478 = vunpack.c.l.b16 %v2061
        %v3479 = vunpack.c.h.b16 %v2061
        %v3480 = vunpack.c.l.b16 %v2062
        %v3481 = vunpack.c.h.b16 %v2062
        %v3482 = vunpack.c.l.b16 %v2063
        %v3483 = vunpack.c.h.b16 %v2063
        %v3484 = vunpack.c.l.b16 %v2064
        %v3485 = vunpack.c.h.b16 %v2064
        %v3486 = vunpack.c.l.b16 %v2065
        %v3487 = vunpack.c.h.b16 %v2065
        %v3488 = vunpack.c.l.b16 %v2066
        %v3489 = vunpack.c.h.b16 %v2066
        %v3490 = vunpack.c.l.b16 %v2067
        %v3491 = vunpack.c.h.b16 %v2067
        %v3492 = vunpack.c.l.b16 %v2068
        %v3493 = vunpack.c.h.b16 %v2068
        %v3494 = vunpack.c.l.b16 %v2069
        %v3495 = vunpack.c.h.b16 %v2069
        %v3496 = vunpack.c.l.b16 %v2070
        %v3497 = vunpack.c.h.b16 %v2070
        %v3498 = vunpack.c.l.b16 %v2071
        %v3499 = vunpack.c.h.b16 %v2071
        %v3500 = vunpack.c.l.b16 %v2072
        %v3501 = vunpack.c.h.b16 %v2072
        %v3502 = vunpack.c.l.b16 %v2073
        %v3503 = vunpack.c.h.b16 %v2073
        %v3504 = vunpack.c.l.b16 %v2074
        %v3505 = vunpack.c.h.b16 %v2074
        %v3506 = vunpack.c.l.b16 %v2075
        %v3507 = vunpack.c.h.b16 %v2075
        %v3508 = vunpack.c.l.b16 %v2076
        %v3509 = vunpack.c.h.b16 %v2076
        %v3510 = vunpack.c.l.b16 %v2077
        %v3511 = vunpack.c.h.b16 %v2077
        %v3512 = vunpack.c.l.b16 %v2078
        %v3513 = vunpack.c.h.b16 %v2078
        %v3514 = vunpack.c.l.b16 %v2079
        %v3515 = vunpack.c.h.b16 %v2079
        %v3516 = vunpack.c.l.b16 %v2080
        %v3517 = vunpack.c.h.b16 %v2080
        %v3518 = vunpack.c.l.b16 %v2081
        %v3519 = vunpack.c.h.b16 %v2081
        %v3520 = vunpack.c.l.b16 %v2082
        %v3521 = vunpack.c.h.b16 %v2082
        %v3522 = vunpack.c.l.b16 %v2083
        %v3523 = vunpack.c.h.b16 %v2083
        %v3524 = vunpack.c.l.b16 %v2084
        %v3525 = vunpack.c.h.b16 %v2084
        %v3526 = vunpack.c.l.b16 %v2085
        %v3527 = vunpack.c.h.b16 %v2085
        %v3528 = vunpack.c.l.b16 %v2086
        %v3529 = vunpack.c.h.b16 %v2086
        %v3530 = vunpack.c.l.b16 %v2087
        %v3531 = vunpack.c.h.b16 %v2087
        %v3532 = vunpack.c.l.b16 %v2088
        %v3533 = vunpack.c.h.b16 %v2088
        %v3534 = vunpack.c.l.b16 %v2089
        %v3535 = vunpack.c.h.b16 %v2089
        %v3536 = vunpack.c.l.b16 %v2090
        %v3537 = vunpack.c.h.b16 %v2090
        %v3538 = vunpack.c.l.b16 %v2091
        %v3539 = vunpack.c.h.b16 %v2091
        %v3540 = vunpack.c.l.b16 %v2092
        %v3541 = vunpack.c.h.b16 %v2092
        %v3542 = vunpack.c.l.b16 %v2093
        %v3543 = vunpack.c.h.b16 %v2093
        %v3544 = vunpack.c.l.b16 %v2094
        %v3545 = vunpack.c.h.b16 %v2094
        %v3546 = vunpack.c.l.b16 %v2095
        %v3547 = vunpack.c.h.b16 %v2095
        %v3548 = vunpack.c.l.b16 %v2096
        %v3549 = vunpack.c.h.b16 %v2096
        %v3550 = vunpack.c.l.b16 %v2097
        %v3551 = vunpack.c.h.b16 %v2097
        %v3552 = vunpack.c.l.b16 %v2098
        %v3553 = vunpack.c.h.b16 %v2098
        %v3554 = vunpack.c.l.b16 %v2099
        %v3555 = vunpack.c.h.b16 %v2099
        %v3556 = vunpack.c.l.b16 %v2100
        %v3557 = vunpack.c.h.b16 %v2100
        %v3558 = vunpack.c.l.b16 %v2101
        %v3559 = vunpack.c.h.b16 %v2101
        %v3560 = vunpack.c.l.b16 %v2102
        %v3561 = vunpack.c.h.b16 %v2102
        %v3562 = vunpack.c.l.b16 %v2103
        %v3563 = vunpack.c.h.b16 %v2103
        %v3564 = vunpack.c.l.b16 %v2104
        %v3565 = vunpack.c.h.b16 %v2104
        %v3566 = vunpack.c.l.b16 %v2105
        %v3567 = vunpack.c.h.b16 %v2105
        %v3568 = vunpack.c.l.b16 %v2106
        %v3569 = vunpack.c.h.b16 %v2106
        %v3570 = vunpack.c.l.b16 %v2107
        %v3571 = vunpack.c.h.b16 %v2107
        %v3572 = vunpack.c.l.b16 %v2108
        %v3573 = vunpack.c.h.b16 %v2108
        %v3574 = vunpack.c.l.b16 %v2109
        %v3575 = vunpack.c.h.b16 %v2109
        %v3576 = vunpack.c.l.b16 %v2110
        %v3577 = vunpack.c.h.b16 %v2110
        %v3578 = vunpack.c.l.b16 %v2111
        %v3579 = vunpack.c.h.b16 %v2111
        %v3580 = vunpack.c.l.b16 %v2112
        %v3581 = vunpack.c.h.b16 %v2112
        %v3582 = vunpack.c.l.b16 %v2113
        %v3583 = vunpack.c.h.b16 %v2113
        %v3584 = vunpack.c.l.b16 %v2114
        %v3585 = vunpack.c.h.b16 %v2114
        %v3586 = vunpack.c.l.b16 %v2115
        %v3587 = vunpack.c.h.b16 %v2115
        %v3588 = vunpack.c.l.b16 %v2116
        %v3589 = vunpack.c.h.b16 %v2116
        %v3590 = vunpack.c.l.b16 %v2117
        %v3591 = vunpack.c.h.b16 %v2117
        %v3592 = vunpack.c.l.b16 %v2118
        %v3593 = vunpack.c.h.b16 %v2118
        %v3594 = vunpack.c.l.b16 %v2119
        %v3595 = vunpack.c.h.b16 %v2119
        %v3596 = vunpack.c.l.b16 %v2120
        %v3597 = vunpack.c.h.b16 %v2120
        %v3598 = vunpack.c.l.b16 %v2121
        %v3599 = vunpack.c.h.b16 %v2121
        %v3600 = vunpack.c.l.b16 %v2122
        %v3601 = vunpack.c.h.b16 %v2122
        %v3602 = vunpack.c.l.b16 %v2123
        %v3603 = vunpack.c.h.b16 %v2123
        %v3604 = vunpack.c.l.b16 %v2124
        %v3605 = vunpack.c.h.b16 %v2124
        %v3606 = vunpack.c.l.b16 %v2125
        %v3607 = vunpack.c.h.b16 %v2125
        %v3608 = vunpack.c.l.b16 %v2126
        %v3609 = vunpack.c.h.b16 %v2126
        %v3610 = vunpack.c.l.b16 %v2127
        %v3611 = vunpack.c.h.b16 %v2127
        %v3612 = vunpack.c.l.b16 %v2128
        %v3613 = vunpack.c.h.b16 %v2128
        %v3614 = vunpack.c.l.b16 %v2129
        %v3615 = vunpack.c.h.b16 %v2129
        %v3616 = vunpack.c.l.b16 %v2130
        %v3617 = vunpack.c.h.b16 %v2130
        %v3618 = vunpack.c.l.b16 %v2131
        %v3619 = vunpack.c.h.b16 %v2131
        %v3620 = vunpack.c.l.b16 %v2132
        %v3621 = vunpack.c.h.b16 %v2132
        %v3622 = vunpack.c.l.b16 %v2133
        %v3623 = vunpack.c.h.b16 %v2133
        %v3624 = vunpack.c.l.b16 %v2134
        %v3625 = vunpack.c.h.b16 %v2134
        %v3626 = vunpack.c.l.b16 %v2135
        %v3627 = vunpack.c.h.b16 %v2135
        %v3628 = vunpack.c.l.b16 %v2136
        %v3629 = vunpack.c.h.b16 %v2136
        %v3630 = vunpack.c.l.b16 %v2137
        %v3631 = vunpack.c.h.b16 %v2137
        %v3632 = vunpack.c.l.b16 %v2138
        %v3633 = vunpack.c.h.b16 %v2138
        %v3634 = vunpack.c.l.b16 %v2139
        %v3635 = vunpack.c.h.b16 %v2139
        %v3636 = vunpack.c.l.b16 %v2140
        %v3637 = vunpack.c.h.b16 %v2140
        %v3638 = vunpack.c.l.b16 %v2141
        %v3639 = vunpack.c.h.b16 %v2141
        %v3640 = vunpack.c.l.b16 %v2142
        %v3641 = vunpack.c.h.b16 %v2142
        %v3642 = vunpack.c.l.b16 %v2143
        %v3643 = vunpack.c.h.b16 %v2143
        %v3644 = vunpack.c.l.b16 %v2144
        %v3645 = vunpack.c.h.b16 %v2144
        %v3646 = vunpack.c.l.b16 %v2145
        %v3647 = vunpack.c.h.b16 %v2145
        %v3648 = vunpack.c.l.b16 %v2146
        %v3649 = vunpack.c.h.b16 %v2146
        %v3650 = vunpack.c.l.b16 %v2147
        %v3651 = vunpack.c.h.b16 %v2147
        %v3652 = vunpack.c.l.b16 %v2148
        %v3653 = vunpack.c.h.b16 %v2148
        %v3654 = vunpack.c.l.b16 %v2149
        %v3655 = vunpack.c.h.b16 %v2149
        %v3656 = vunpack.c.l.b16 %v2150
        %v3657 = vunpack.c.h.b16 %v2150
        %v3658 = vunpack.c.l.b16 %v2151
        %v3659 = vunpack.c.h.b16 %v2151
        %v3660 = vunpack.c.l.b16 %v2152
        %v3661 = vunpack.c.h.b16 %v2152
        %v3662 = vunpack.c.l.b16 %v2153
        %v3663 = vunpack.c.h.b16 %v2153
        %v3664 = vunpack.c.l.b16 %v2154
        %v3665 = vunpack.c.h.b16 %v2154
        %v3666 = vunpack.c.l.b16 %v2155
        %v3667 = vunpack.c.h.b16 %v2155
        %v3668 = vunpack.c.l.b16 %v2156
        %v3669 = vunpack.c.h.b16 %v2156
        %v3670 = vunpack.c.l.b16 %v2157
        %v3671 = vunpack.c.h.b16 %v2157
        %v3672 = vunpack.c.l.b16 %v2158
        %v3673 = vunpack.c.h.b16 %v2158
        %v3674 = vunpack.c.l.b16 %v2159
        %v3675 = vunpack.c.h.b16 %v2159
        %v3676 = vunpack.c.l.b16 %v2160
        %v3677 = vunpack.c.h.b16 %v2160
        %v3678 = vunpack.c.l.b16 %v2161
        %v3679 = vunpack.c.h.b16 %v2161
        %v3680 = vunpack.c.l.b16 %v2162
        %v3681 = vunpack.c.h.b16 %v2162
        %v3682 = vunpack.c.l.b16 %v2163
        %v3683 = vunpack.c.h.b16 %v2163
        %v3684 = vunpack.c.l.b16 %v2164
        %v3685 = vunpack.c.h.b16 %v2164
        %v3686 = vunpack.c.l.b16 %v2165
        %v3687 = vunpack.c.h.b16 %v2165
        %v3688 = vunpack.c.l.b16 %v2166
        %v3689 = vunpack.c.h.b16 %v2166
        %v3690 = vunpack.c.l.b16 %v2167
        %v3691 = vunpack.c.h.b16 %v2167
        %v3692 = vunpack.c.l.b16 %v2168
        %v3693 = vunpack.c.h.b16 %v2168
        %v3694 = vunpack.c.l.b16 %v2169
        %v3695 = vunpack.c.h.b16 %v2169
        %v3696 = vunpack.c.l.b16 %v2170
        %v3697 = vunpack.c.h.b16 %v2170
        %v3698 = vunpack.c.l.b16 %v2171
        %v3699 = vunpack.c.h.b16 %v2171
        %v3700 = vunpack.c.l.b16 %v2172
        %v3701 = vunpack.c.h.b16 %v2172
        %v3702 = vunpack.c.l.b16 %v2173
        %v3703 = vunpack.c.h.b16 %v2173
        %v3704 = vunpack.c.l.b16 %v2174
        %v3705 = vunpack.c.h.b16 %v2174
        %v3706 = vunpack.c.l.b16 %v2175
        %v3707 = vunpack.c.h.b16 %v2175
        %v3708 = vunpack.c.l.b16 %v2176
        %v3709 = vunpack.c.h.b16 %v2176
        %v3710 = vunpack.c.l.b16 %v2177
        %v3711 = vunpack.c.h.b16 %v2177
        %v3712 = vunpack.c.l.b16 %v2178
        %v3713 = vunpack.c.h.b16 %v2178
        %v3714 = vunpack.c.l.b16 %v2179
        %v3715 = vunpack.c.h.b16 %v2179
        %v3716 = vunpack.c.l.b16 %v2180
        %v3717 = vunpack.c.h.b16 %v2180
        %v3718 = vunpack.c.l.b16 %v2181
        %v3719 = vunpack.c.h.b16 %v2181
        %v3720 = vunpack.c.l.b16 %v2182
        %v3721 = vunpack.c.h.b16 %v2182
        %v3722 = vunpack.c.l.b16 %v2183
        %v3723 = vunpack.c.h.b16 %v2183
        %v3724 = vunpack.c.l.b16 %v2184
        %v3725 = vunpack.c.h.b16 %v2184
        %v3726 = vunpack.c.l.b16 %v2185
        %v3727 = vunpack.c.h.b16 %v2185
        %v3728 = vunpack.c.l.b16 %v2186
        %v3729 = vunpack.c.h.b16 %v2186
        %v3730 = vunpack.c.l.b16 %v2187
        %v3731 = vunpack.c.h.b16 %v2187
        %v3732 = vunpack.c.l.b16 %v2188
        %v3733 = vunpack.c.h.b16 %v2188
        %v3734 = vunpack.c.l.b16 %v2189
        %v3735 = vunpack.c.h.b16 %v2189
        %v3736 = vunpack.c.l.b16 %v2190
        %v3737 = vunpack.c.h.b16 %v2190
        %v3738 = vunpack.c.l.b16 %v2191
        %v3739 = vunpack.c.h.b16 %v2191
        %v3740 = vunpack.c.l.b16 %v2192
        %v3741 = vunpack.c.h.b16 %v2192
        %v3742 = vunpack.c.l.b16 %v2193
        %v3743 = vunpack.c.h.b16 %v2193
        %v3744 = vunpack.c.l.b16 %v2194
        %v3745 = vunpack.c.h.b16 %v2194
        %v3746 = vunpack.c.l.b16 %v2195
        %v3747 = vunpack.c.h.b16 %v2195
        %v3748 = vunpack.c.l.b16 %v2196
        %v3749 = vunpack.c.h.b16 %v2196
        %v3750 = vunpack.c.l.b16 %v2197
        %v3751 = vunpack.c.h.b16 %v2197
        %v3752 = vunpack.c.l.b16 %v2198
        %v3753 = vunpack.c.h.b16 %v2198
        %v3754 = vunpack.c.l.b16 %v2199
        %v3755 = vunpack.c.h.b16 %v2199
        %v3756 = vunpack.c.l.b16 %v2200
        %v3757 = vunpack.c.h.b16 %v2200
        %v3758 = vunpack.c.l.b16 %v2201
        %v3759 = vunpack.c.h.b16 %v2201
        %v3760 = vunpack.c.l.b16 %v2202
        %v3761 = vunpack.c.h.b16 %v2202
        %v3762 = vunpack.c.l.b16 %v2203
        %v3763 = vunpack.c.h.b16 %v2203
        %v3764 = vunpack.c.l.b16 %v2204
        %v3765 = vunpack.c.h.b16 %v2204
        %v3766 = vunpack.c.l.b16 %v2205
        %v3767 = vunpack.c.h.b16 %v2205
        %v3768 = vunpack.c.l.b16 %v2206
        %v3769 = vunpack.c.h.b16 %v2206
        %v3770 = vunpack.c.l.b16 %v2207
        %v3771 = vunpack.c.h.b16 %v2207
        %v3772 = vpack.c.b16 %v2756, %v2748
        %v3773 = vpack.c.b16 %v2757, %v2749
        %v3774 = vpack.c.b16 %v2758, %v2750
        %v3775 = vpack.c.b16 %v2759, %v2751
        %v3776 = vpack.c.b16 %v2760, %v2752
        %v3777 = vpack.c.b16 %v2761, %v2753
        %v3778 = vpack.c.b16 %v2762, %v2754
        %v3779 = vpack.c.b16 %v2763, %v2755
        %v3780 = vpack.c.b16 %v2772, %v2764
        %v3781 = vpack.c.b16 %v2773, %v2765
        %v3782 = vpack.c.b16 %v2774, %v2766
        %v3783 = vpack.c.b16 %v2775, %v2767
        %v3784 = vpack.c.b16 %v2776, %v2768
        %v3785 = vpack.c.b16 %v2777, %v2769
        %v3786 = vpack.c.b16 %v2778, %v2770
        %v3787 = vpack.c.b16 %v2779, %v2771
        %v3788 = vpack.c.b16 %v2788, %v2780
        %v3789 = vpack.c.b16 %v2789, %v2781
        %v3790 = vpack.c.b16 %v2790, %v2782
        %v3791 = vpack.c.b16 %v2791, %v2783
        %v3792 = vpack.c.b16 %v2792, %v2784
        %v3793 = vpack.c.b16 %v2793, %v2785
        %v3794 = vpack.c.b16 %v2794, %v2786
        %v3795 = vpack.c.b16 %v2795, %v2787
        %v3796 = vpack.c.b16 %v2804, %v2796
        %v3797 = vpack.c.b16 %v2805, %v2797
        %v3798 = vpack.c.b16 %v2806, %v2798
        %v3799 = vpack.c.b16 %v2807, %v2799
        %v3800 = vpack.c.b16 %v2808, %v2800
        %v3801 = vpack.c.b16 %v2809, %v2801
        %v3802 = vpack.c.b16 %v2810, %v2802
        %v3803 = vpack.c.b16 %v2811, %v2803
        %v3804 = vpack.c.b16 %v2820, %v2812
        %v3805 = vpack.c.b16 %v2821, %v2813
        %v3806 = vpack.c.b16 %v2822, %v2814
        %v3807 = vpack.c.b16 %v2823, %v2815
        %v3808 = vpack.c.b16 %v2824, %v2816
        %v3809 = vpack.c.b16 %v2825, %v2817
        %v3810 = vpack.c.b16 %v2826, %v2818
        %v3811 = vpack.c.b16 %v2827, %v2819
        %v3812 = vpack.c.b16 %v2836, %v2828
        %v3813 = vpack.c.b16 %v2837, %v2829
        %v3814 = vpack.c.b16 %v2838, %v2830
        %v3815 = vpack.c.b16 %v2839, %v2831
        %v3816 = vpack.c.b16 %v2840, %v2832
        %v3817 = vpack.c.b16 %v2841, %v2833
        %v3818 = vpack.c.b16 %v2842, %v2834
        %v3819 = vpack.c.b16 %v2843, %v2835
        %v3820 = vpack.c.b16 %v2852, %v2844
        %v3821 = vpack.c.b16 %v2853, %v2845
        %v3822 = vpack.c.b16 %v2854, %v2846
        %v3823 = vpack.c.b16 %v2855, %v2847
        %v3824 = vpack.c.b16 %v2856, %v2848
        %v3825 = vpack.c.b16 %v2857, %v2849
        %v3826 = vpack.c.b16 %v2858, %v2850
        %v3827 = vpack.c.b16 %v2859, %v2851
        %v3828 = vpack.c.b16 %v2868, %v2860
        %v3829 = vpack.c.b16 %v2869, %v2861
        %v3830 = vpack.c.b16 %v2870, %v2862
        %v3831 = vpack.c.b16 %v2871, %v2863
        %v3832 = vpack.c.b16 %v2872, %v2864
        %v3833 = vpack.c.b16 %v2873, %v2865
        %v3834 = vpack.c.b16 %v2874, %v2866
        %v3835 = vpack.c.b16 %v2875, %v2867
        %v3836 = vpack.c.b16 %v2884, %v2876
        %v3837 = vpack.c.b16 %v2885, %v2877
        %v3838 = vpack.c.b16 %v2886, %v2878
        %v3839 = vpack.c.b16 %v2887, %v2879
        %v3840 = vpack.c.b16 %v2888, %v2880
        %v3841 = vpack.c.b16 %v2889, %v2881
        %v3842 = vpack.c.b16 %v2890, %v2882
        %v3843 = vpack.c.b16 %v2891, %v2883
        %v3844 = vpack.c.b16 %v2900, %v2892
        %v3845 = vpack.c.b16 %v2901, %v2893
        %v3846 = vpack.c.b16 %v2902, %v2894
        %v3847 = vpack.c.b16 %v2903, %v2895
        %v3848 = vpack.c.b16 %v2904, %v2896
        %v3849 = vpack.c.b16 %v2905, %v2897
        %v3850 = vpack.c.b16 %v2906, %v2898
        %v3851 = vpack.c.b16 %v2907, %v2899
        %v3852 = vpack.c.b16 %v2916, %v2908
        %v3853 = vpack.c.b16 %v2917, %v2909
        %v3854 = vpack.c.b16 %v2918, %v2910
        %v3855 = vpack.c.b16 %v2919, %v2911
        %v3856 = vpack.c.b16 %v2920, %v2912
        %v3857 = vpack.c.b16 %v2921, %v2913
        %v3858 = vpack.c.b16 %v2922, %v2914
        %v3859 = vpack.c.b16 %v2923, %v2915
        %v3860 = vpack.c.b16 %v2932, %v2924
        %v3861 = vpack.c.b16 %v2933, %v2925
        %v3862 = vpack.c.b16 %v2934, %v2926
        %v3863 = vpack.c.b16 %v2935, %v2927
        %v3864 = vpack.c.b16 %v2936, %v2928
        %v3865 = vpack.c.b16 %v2937, %v2929
        %v3866 = vpack.c.b16 %v2938, %v2930
        %v3867 = vpack.c.b16 %v2939, %v2931
        %v3868 = vpack.c.b16 %v2948, %v2940
        %v3869 = vpack.c.b16 %v2949, %v2941
        %v3870 = vpack.c.b16 %v2950, %v2942
        %v3871 = vpack.c.b16 %v2951, %v2943
        %v3872 = vpack.c.b16 %v2952, %v2944
        %v3873 = vpack.c.b16 %v2953, %v2945
        %v3874 = vpack.c.b16 %v2954, %v2946
        %v3875 = vpack.c.b16 %v2955, %v2947
        %v3876 = vpack.c.b16 %v2964, %v2956
        %v3877 = vpack.c.b16 %v2965, %v2957
        %v3878 = vpack.c.b16 %v2966, %v2958
        %v3879 = vpack.c.b16 %v2967, %v2959
        %v3880 = vpack.c.b16 %v2968, %v2960
        %v3881 = vpack.c.b16 %v2969, %v2961
        %v3882 = vpack.c.b16 %v2970, %v2962
        %v3883 = vpack.c.b16 %v2971, %v2963
        %v3884 = vpack.c.b16 %v2980, %v2972
        %v3885 = vpack.c.b16 %v2981, %v2973
        %v3886 = vpack.c.b16 %v2982, %v2974
        %v3887 = vpack.c.b16 %v2983, %v2975
        %v3888 = vpack.c.b16 %v2984, %v2976
        %v3889 = vpack.c.b16 %v2985, %v2977
        %v3890 = vpack.c.b16 %v2986, %v2978
        %v3891 = vpack.c.b16 %v2987, %v2979
        %v3892 = vpack.c.b16 %v2996, %v2988
        %v3893 = vpack.c.b16 %v2997, %v2989
        %v3894 = vpack.c.b16 %v2998, %v2990
        %v3895 = vpack.c.b16 %v2999, %v2991
        %v3896 = vpack.c.b16 %v3000, %v2992
        %v3897 = vpack.c.b16 %v3001, %v2993
        %v3898 = vpack.c.b16 %v3002, %v2994
        %v3899 = vpack.c.b16 %v3003, %v2995
        %v3900 = vpack.c.b16 %v3012, %v3004
        %v3901 = vpack.c.b16 %v3013, %v3005
        %v3902 = vpack.c.b16 %v3014, %v3006
        %v3903 = vpack.c.b16 %v3015, %v3007
        %v3904 = vpack.c.b16 %v3016, %v3008
        %v3905 = vpack.c.b16 %v3017, %v3009
        %v3906 = vpack.c.b16 %v3018, %v3010
        %v3907 = vpack.c.b16 %v3019, %v3011
        %v3908 = vpack.c.b16 %v3028, %v3020
        %v3909 = vpack.c.b16 %v3029, %v3021
        %v3910 = vpack.c.b16 %v3030, %v3022
        %v3911 = vpack.c.b16 %v3031, %v3023
        %v3912 = vpack.c.b16 %v3032, %v3024
        %v3913 = vpack.c.b16 %v3033, %v3025
        %v3914 = vpack.c.b16 %v3034, %v3026
        %v3915 = vpack.c.b16 %v3035, %v3027
        %v3916 = vpack.c.b16 %v3044, %v3036
        %v3917 = vpack.c.b16 %v3045, %v3037
        %v3918 = vpack.c.b16 %v3046, %v3038
        %v3919 = vpack.c.b16 %v3047, %v3039
        %v3920 = vpack.c.b16 %v3048, %v3040
        %v3921 = vpack.c.b16 %v3049, %v3041
        %v3922 = vpack.c.b16 %v3050, %v3042
        %v3923 = vpack.c.b16 %v3051, %v3043
        %v3924 = vpack.c.b16 %v3060, %v3052
        %v3925 = vpack.c.b16 %v3061, %v3053
        %v3926 = vpack.c.b16 %v3062, %v3054
        %v3927 = vpack.c.b16 %v3063, %v3055
        %v3928 = vpack.c.b16 %v3064, %v3056
        %v3929 = vpack.c.b16 %v3065, %v3057
        %v3930 = vpack.c.b16 %v3066, %v3058
        %v3931 = vpack.c.b16 %v3067, %v3059
        %v3932 = vpack.c.b16 %v3076, %v3068
        %v3933 = vpack.c.b16 %v3077, %v3069
        %v3934 = vpack.c.b16 %v3078, %v3070
        %v3935 = vpack.c.b16 %v3079, %v3071
        %v3936 = vpack.c.b16 %v3080, %v3072
        %v3937 = vpack.c.b16 %v3081, %v3073
        %v3938 = vpack.c.b16 %v3082, %v3074
        %v3939 = vpack.c.b16 %v3083, %v3075
        %v3940 = vpack.c.b16 %v3092, %v3084
        %v3941 = vpack.c.b16 %v3093, %v3085
        %v3942 = vpack.c.b16 %v3094, %v3086
        %v3943 = vpack.c.b16 %v3095, %v3087
        %v3944 = vpack.c.b16 %v3096, %v3088
        %v3945 = vpack.c.b16 %v3097, %v3089
        %v3946 = vpack.c.b16 %v3098, %v3090
        %v3947 = vpack.c.b16 %v3099, %v3091
        %v3948 = vpack.c.b16 %v3108, %v3100
        %v3949 = vpack.c.b16 %v3109, %v3101
        %v3950 = vpack.c.b16 %v3110, %v3102
        %v3951 = vpack.c.b16 %v3111, %v3103
        %v3952 = vpack.c.b16 %v3112, %v3104
        %v3953 = vpack.c.b16 %v3113, %v3105
        %v3954 = vpack.c.b16 %v3114, %v3106
        %v3955 = vpack.c.b16 %v3115, %v3107
        %v3956 = vpack.c.b16 %v3124, %v3116
        %v3957 = vpack.c.b16 %v3125, %v3117
        %v3958 = vpack.c.b16 %v3126, %v3118
        %v3959 = vpack.c.b16 %v3127, %v3119
        %v3960 = vpack.c.b16 %v3128, %v3120
        %v3961 = vpack.c.b16 %v3129, %v3121
        %v3962 = vpack.c.b16 %v3130, %v3122
        %v3963 = vpack.c.b16 %v3131, %v3123
        %v3964 = vpack.c.b16 %v3140, %v3132
        %v3965 = vpack.c.b16 %v3141, %v3133
        %v3966 = vpack.c.b16 %v3142, %v3134
        %v3967 = vpack.c.b16 %v3143, %v3135
        %v3968 = vpack.c.b16 %v3144, %v3136
        %v3969 = vpack.c.b16 %v3145, %v3137
        %v3970 = vpack.c.b16 %v3146, %v3138
        %v3971 = vpack.c.b16 %v3147, %v3139
        %v3972 = vpack.c.b16 %v3156, %v3148
        %v3973 = vpack.c.b16 %v3157, %v3149
        %v3974 = vpack.c.b16 %v3158, %v3150
        %v3975 = vpack.c.b16 %v3159, %v3151
        %v3976 = vpack.c.b16 %v3160, %v3152
        %v3977 = vpack.c.b16 %v3161, %v3153
        %v3978 = vpack.c.b16 %v3162, %v3154
        %v3979 = vpack.c.b16 %v3163, %v3155
        %v3980 = vpack.c.b16 %v3172, %v3164
        %v3981 = vpack.c.b16 %v3173, %v3165
        %v3982 = vpack.c.b16 %v3174, %v3166
        %v3983 = vpack.c.b16 %v3175, %v3167
        %v3984 = vpack.c.b16 %v3176, %v3168
        %v3985 = vpack.c.b16 %v3177, %v3169
        %v3986 = vpack.c.b16 %v3178, %v3170
        %v3987 = vpack.c.b16 %v3179, %v3171
        %v3988 = vpack.c.b16 %v3188, %v3180
        %v3989 = vpack.c.b16 %v3189, %v3181
        %v3990 = vpack.c.b16 %v3190, %v3182
        %v3991 = vpack.c.b16 %v3191, %v3183
        %v3992 = vpack.c.b16 %v3192, %v3184
        %v3993 = vpack.c.b16 %v3193, %v3185
        %v3994 = vpack.c.b16 %v3194, %v3186
        %v3995 = vpack.c.b16 %v3195, %v3187
        %v3996 = vpack.c.b16 %v3204, %v3196
        %v3997 = vpack.c.b16 %v3205, %v3197
        %v3998 = vpack.c.b16 %v3206, %v3198
        %v3999 = vpack.c.b16 %v3207, %v3199
        %v4000 = vpack.c.b16 %v3208, %v3200
        %v4001 = vpack.c.b16 %v3209, %v3201
        %v4002 = vpack.c.b16 %v3210, %v3202
        %v4003 = vpack.c.b16 %v3211, %v3203
        %v4004 = vpack.c.b16 %v3220, %v3212
        %v4005 = vpack.c.b16 %v3221, %v3213
        %v4006 = vpack.c.b16 %v3222, %v3214
        %v4007 = vpack.c.b16 %v3223, %v3215
        %v4008 = vpack.c.b16 %v3224, %v3216
        %v4009 = vpack.c.b16 %v3225, %v3217
        %v4010 = vpack.c.b16 %v3226, %v3218
        %v4011 = vpack.c.b16 %v3227, %v3219
        %v4012 = vpack.c.b16 %v3236, %v3228
        %v4013 = vpack.c.b16 %v3237, %v3229
        %v4014 = vpack.c.b16 %v3238, %v3230
        %v4015 = vpack.c.b16 %v3239, %v3231
        %v4016 = vpack.c.b16 %v3240, %v3232
        %v4017 = vpack.c.b16 %v3241, %v3233
        %v4018 = vpack.c.b16 %v3242, %v3234
        %v4019 = vpack.c.b16 %v3243, %v3235
        %v4020 = vpack.c.b16 %v3252, %v3244
        %v4021 = vpack.c.b16 %v3253, %v3245
        %v4022 = vpack.c.b16 %v3254, %v3246
        %v4023 = vpack.c.b16 %v3255, %v3247
        %v4024 = vpack.c.b16 %v3256, %v3248
        %v4025 = vpack.c.b16 %v3257, %v3249
        %v4026 = vpack.c.b16 %v3258, %v3250
        %v4027 = vpack.c.b16 %v3259, %v3251
        %v4028 = vpack.c.b16 %v3268, %v3260
        %v4029 = vpack.c.b16 %v3269, %v3261
        %v4030 = vpack.c.b16 %v3270, %v3262
        %v4031 = vpack.c.b16 %v3271, %v3263
        %v4032 = vpack.c.b16 %v3272, %v3264
        %v4033 = vpack.c.b16 %v3273, %v3265
        %v4034 = vpack.c.b16 %v3274, %v3266
        %v4035 = vpack.c.b16 %v3275, %v3267
        %v4036 = vpack.c.b16 %v3284, %v3276
        %v4037 = vpack.c.b16 %v3285, %v3277
        %v4038 = vpack.c.b16 %v3286, %v3278
        %v4039 = vpack.c.b16 %v3287, %v3279
        %v4040 = vpack.c.b16 %v3288, %v3280
        %v4041 = vpack.c.b16 %v3289, %v3281
        %v4042 = vpack.c.b16 %v3290, %v3282
        %v4043 = vpack.c.b16 %v3291, %v3283
        %v4044 = vpack.c.b16 %v3300, %v3292
        %v4045 = vpack.c.b16 %v3301, %v3293
        %v4046 = vpack.c.b16 %v3302, %v3294
        %v4047 = vpack.c.b16 %v3303, %v3295
        %v4048 = vpack.c.b16 %v3304, %v3296
        %v4049 = vpack.c.b16 %v3305, %v3297
        %v4050 = vpack.c.b16 %v3306, %v3298
        %v4051 = vpack.c.b16 %v3307, %v3299
        %v4052 = vpack.c.b16 %v3316, %v3308
        %v4053 = vpack.c.b16 %v3317, %v3309
        %v4054 = vpack.c.b16 %v3318, %v3310
        %v4055 = vpack.c.b16 %v3319, %v3311
        %v4056 = vpack.c.b16 %v3320, %v3312
        %v4057 = vpack.c.b16 %v3321, %v3313
        %v4058 = vpack.c.b16 %v3322, %v3314
        %v4059 = vpack.c.b16 %v3323, %v3315
        %v4060 = vpack.c.b16 %v3332, %v3324
        %v4061 = vpack.c.b16 %v3333, %v3325
        %v4062 = vpack.c.b16 %v3334, %v3326
        %v4063 = vpack.c.b16 %v3335, %v3327
        %v4064 = vpack.c.b16 %v3336, %v3328
        %v4065 = vpack.c.b16 %v3337, %v3329
        %v4066 = vpack.c.b16 %v3338, %v3330
        %v4067 = vpack.c.b16 %v3339, %v3331
        %v4068 = vpack.c.b16 %v3348, %v3340
        %v4069 = vpack.c.b16 %v3349, %v3341
        %v4070 = vpack.c.b16 %v3350, %v3342
        %v4071 = vpack.c.b16 %v3351, %v3343
        %v4072 = vpack.c.b16 %v3352, %v3344
        %v4073 = vpack.c.b16 %v3353, %v3345
        %v4074 = vpack.c.b16 %v3354, %v3346
        %v4075 = vpack.c.b16 %v3355, %v3347
        %v4076 = vpack.c.b16 %v3364, %v3356
        %v4077 = vpack.c.b16 %v3365, %v3357
        %v4078 = vpack.c.b16 %v3366, %v3358
        %v4079 = vpack.c.b16 %v3367, %v3359
        %v4080 = vpack.c.b16 %v3368, %v3360
        %v4081 = vpack.c.b16 %v3369, %v3361
        %v4082 = vpack.c.b16 %v3370, %v3362
        %v4083 = vpack.c.b16 %v3371, %v3363
        %v4084 = vpack.c.b16 %v3380, %v3372
        %v4085 = vpack.c.b16 %v3381, %v3373
        %v4086 = vpack.c.b16 %v3382, %v3374
        %v4087 = vpack.c.b16 %v3383, %v3375
        %v4088 = vpack.c.b16 %v3384, %v3376
        %v4089 = vpack.c.b16 %v3385, %v3377
        %v4090 = vpack.c.b16 %v3386, %v3378
        %v4091 = vpack.c.b16 %v3387, %v3379
        %v4092 = vpack.c.b16 %v3396, %v3388
        %v4093 = vpack.c.b16 %v3397, %v3389
        %v4094 = vpack.c.b16 %v3398, %v3390
        %v4095 = vpack.c.b16 %v3399, %v3391
        %v4096 = vpack.c.b16 %v3400, %v3392
        %v4097 = vpack.c.b16 %v3401, %v3393
        %v4098 = vpack.c.b16 %v3402, %v3394
        %v4099 = vpack.c.b16 %v3403, %v3395
        %v4100 = vpack.c.b16 %v3412, %v3404
        %v4101 = vpack.c.b16 %v3413, %v3405
        %v4102 = vpack.c.b16 %v3414, %v3406
        %v4103 = vpack.c.b16 %v3415, %v3407
        %v4104 = vpack.c.b16 %v3416, %v3408
        %v4105 = vpack.c.b16 %v3417, %v3409
        %v4106 = vpack.c.b16 %v3418, %v3410
        %v4107 = vpack.c.b16 %v3419, %v3411
        %v4108 = vpack.c.b16 %v3428, %v3420
        %v4109 = vpack.c.b16 %v3429, %v3421
        %v4110 = vpack.c.b16 %v3430, %v3422
        %v4111 = vpack.c.b16 %v3431, %v3423
        %v4112 = vpack.c.b16 %v3432, %v3424
        %v4113 = vpack.c.b16 %v3433, %v3425
        %v4114 = vpack.c.b16 %v3434, %v3426
        %v4115 = vpack.c.b16 %v3435, %v3427
        %v4116 = vpack.c.b16 %v3444, %v3436
        %v4117 = vpack.c.b16 %v3445, %v3437
        %v4118 = vpack.c.b16 %v3446, %v3438
        %v4119 = vpack.c.b16 %v3447, %v3439
        %v4120 = vpack.c.b16 %v3448, %v3440
        %v4121 = vpack.c.b16 %v3449, %v3441
        %v4122 = vpack.c.b16 %v3450, %v3442
        %v4123 = vpack.c.b16 %v3451, %v3443
        %v4124 = vpack.c.b16 %v3460, %v3452
        %v4125 = vpack.c.b16 %v3461, %v3453
        %v4126 = vpack.c.b16 %v3462, %v3454
        %v4127 = vpack.c.b16 %v3463, %v3455
        %v4128 = vpack.c.b16 %v3464, %v3456
        %v4129 = vpack.c.b16 %v3465, %v3457
        %v4130 = vpack.c.b16 %v3466, %v3458
        %v4131 = vpack.c.b16 %v3467, %v3459
        %v4132 = vpack.c.b16 %v3476, %v3468
        %v4133 = vpack.c.b16 %v3477, %v3469
        %v4134 = vpack.c.b16 %v3478, %v3470
        %v4135 = vpack.c.b16 %v3479, %v3471
        %v4136 = vpack.c.b16 %v3480, %v3472
        %v4137 = vpack.c.b16 %v3481, %v3473
        %v4138 = vpack.c.b16 %v3482, %v3474
        %v4139 = vpack.c.b16 %v3483, %v3475
        %v4140 = vpack.c.b16 %v3492, %v3484
        %v4141 = vpack.c.b16 %v3493, %v3485
        %v4142 = vpack.c.b16 %v3494, %v3486
        %v4143 = vpack.c.b16 %v3495, %v3487
        %v4144 = vpack.c.b16 %v3496, %v3488
        %v4145 = vpack.c.b16 %v3497, %v3489
        %v4146 = vpack.c.b16 %v3498, %v3490
        %v4147 = vpack.c.b16 %v3499, %v3491
        %v4148 = vpack.c.b16 %v3508, %v3500
        %v4149 = vpack.c.b16 %v3509, %v3501
        %v4150 = vpack.c.b16 %v3510, %v3502
        %v4151 = vpack.c.b16 %v3511, %v3503
        %v4152 = vpack.c.b16 %v3512, %v3504
        %v4153 = vpack.c.b16 %v3513, %v3505
        %v4154 = vpack.c.b16 %v3514, %v3506
        %v4155 = vpack.c.b16 %v3515, %v3507
        %v4156 = vpack.c.b16 %v3524, %v3516
        %v4157 = vpack.c.b16 %v3525, %v3517
        %v4158 = vpack.c.b16 %v3526, %v3518
        %v4159 = vpack.c.b16 %v3527, %v3519
        %v4160 = vpack.c.b16 %v3528, %v3520
        %v4161 = vpack.c.b16 %v3529, %v3521
        %v4162 = vpack.c.b16 %v3530, %v3522
        %v4163 = vpack.c.b16 %v3531, %v3523
        %v4164 = vpack.c.b16 %v3540, %v3532
        %v4165 = vpack.c.b16 %v3541, %v3533
        %v4166 = vpack.c.b16 %v3542, %v3534
        %v4167 = vpack.c.b16 %v3543, %v3535
        %v4168 = vpack.c.b16 %v3544, %v3536
        %v4169 = vpack.c.b16 %v3545, %v3537
        %v4170 = vpack.c.b16 %v3546, %v3538
        %v4171 = vpack.c.b16 %v3547, %v3539
        %v4172 = vpack.c.b16 %v3556, %v3548
        %v4173 = vpack.c.b16 %v3557, %v3549
        %v4174 = vpack.c.b16 %v3558, %v3550
        %v4175 = vpack.c.b16 %v3559, %v3551
        %v4176 = vpack.c.b16 %v3560, %v3552
        %v4177 = vpack.c.b16 %v3561, %v3553
        %v4178 = vpack.c.b16 %v3562, %v3554
        %v4179 = vpack.c.b16 %v3563, %v3555
        %v4180 = vpack.c.b16 %v3572, %v3564
        %v4181 = vpack.c.b16 %v3573, %v3565
        %v4182 = vpack.c.b16 %v3574, %v3566
        %v4183 = vpack.c.b16 %v3575, %v3567
        %v4184 = vpack.c.b16 %v3576, %v3568
        %v4185 = vpack.c.b16 %v3577, %v3569
        %v4186 = vpack.c.b16 %v3578, %v3570
        %v4187 = vpack.c.b16 %v3579, %v3571
        %v4188 = vpack.c.b16 %v3588, %v3580
        %v4189 = vpack.c.b16 %v3589, %v3581
        %v4190 = vpack.c.b16 %v3590, %v3582
        %v4191 = vpack.c.b16 %v3591, %v3583
        %v4192 = vpack.c.b16 %v3592, %v3584
        %v4193 = vpack.c.b16 %v3593, %v3585
        %v4194 = vpack.c.b16 %v3594, %v3586
        %v4195 = vpack.c.b16 %v3595, %v3587
        %v4196 = vpack.c.b16 %v3604, %v3596
        %v4197 = vpack.c.b16 %v3605, %v3597
        %v4198 = vpack.c.b16 %v3606, %v3598
        %v4199 = vpack.c.b16 %v3607, %v3599
        %v4200 = vpack.c.b16 %v3608, %v3600
        %v4201 = vpack.c.b16 %v3609, %v3601
        %v4202 = vpack.c.b16 %v3610, %v3602
        %v4203 = vpack.c.b16 %v3611, %v3603
        %v4204 = vpack.c.b16 %v3620, %v3612
        %v4205 = vpack.c.b16 %v3621, %v3613
        %v4206 = vpack.c.b16 %v3622, %v3614
        %v4207 = vpack.c.b16 %v3623, %v3615
        %v4208 = vpack.c.b16 %v3624, %v3616
        %v4209 = vpack.c.b16 %v3625, %v3617
        %v4210 = vpack.c.b16 %v3626, %v3618
        %v4211 = vpack.c.b16 %v3627, %v3619
        %v4212 = vpack.c.b16 %v3636, %v3628
        %v4213 = vpack.c.b16 %v3637, %v3629
        %v4214 = vpack.c.b16 %v3638, %v3630
        %v4215 = vpack.c.b16 %v3639, %v3631
        %v4216 = vpack.c.b16 %v3640, %v3632
        %v4217 = vpack.c.b16 %v3641, %v3633
        %v4218 = vpack.c.b16 %v3642, %v3634
        %v4219 = vpack.c.b16 %v3643, %v3635
        %v4220 = vpack.c.b16 %v3652, %v3644
        %v4221 = vpack.c.b16 %v3653, %v3645
        %v4222 = vpack.c.b16 %v3654, %v3646
        %v4223 = vpack.c.b16 %v3655, %v3647
        %v4224 = vpack.c.b16 %v3656, %v3648
        %v4225 = vpack.c.b16 %v3657, %v3649
        %v4226 = vpack.c.b16 %v3658, %v3650
        %v4227 = vpack.c.b16 %v3659, %v3651
        %v4228 = vpack.c.b16 %v3668, %v3660
        %v4229 = vpack.c.b16 %v3669, %v3661
        %v4230 = vpack.c.b16 %v3670, %v3662
        %v4231 = vpack.c.b16 %v3671, %v3663
        %v4232 = vpack.c.b16 %v3672, %v3664
        %v4233 = vpack.c.b16 %v3673, %v3665
        %v4234 = vpack.c.b16 %v3674, %v3666
        %v4235 = vpack.c.b16 %v3675, %v3667
        %v4236 = vpack.c.b16 %v3684, %v3676
        %v4237 = vpack.c.b16 %v3685, %v3677
        %v4238 = vpack.c.b16 %v3686, %v3678
        %v4239 = vpack.c.b16 %v3687, %v3679
        %v4240 = vpack.c.b16 %v3688, %v3680
        %v4241 = vpack.c.b16 %v3689, %v3681
        %v4242 = vpack.c.b16 %v3690, %v3682
        %v4243 = vpack.c.b16 %v3691, %v3683
        %v4244 = vpack.c.b16 %v3700, %v3692
        %v4245 = vpack.c.b16 %v3701, %v3693
        %v4246 = vpack.c.b16 %v3702, %v3694
        %v4247 = vpack.c.b16 %v3703, %v3695
        %v4248 = vpack.c.b16 %v3704, %v3696
        %v4249 = vpack.c.b16 %v3705, %v3697
        %v4250 = vpack.c.b16 %v3706, %v3698
        %v4251 = vpack.c.b16 %v3707, %v3699
        %v4252 = vpack.c.b16 %v3716, %v3708
        %v4253 = vpack.c.b16 %v3717, %v3709
        %v4254 = vpack.c.b16 %v3718, %v3710
        %v4255 = vpack.c.b16 %v3719, %v3711
        %v4256 = vpack.c.b16 %v3720, %v3712
        %v4257 = vpack.c.b16 %v3721, %v3713
        %v4258 = vpack.c.b16 %v3722, %v3714
        %v4259 = vpack.c.b16 %v3723, %v3715
        %v4260 = vpack.c.b16 %v3732, %v3724
        %v4261 = vpack.c.b16 %v3733, %v3725
        %v4262 = vpack.c.b16 %v3734, %v3726
        %v4263 = vpack.c.b16 %v3735, %v3727
        %v4264 = vpack.c.b16 %v3736, %v3728
        %v4265 = vpack.c.b16 %v3737, %v3729
        %v4266 = vpack.c.b16 %v3738, %v3730
        %v4267 = vpack.c.b16 %v3739, %v3731
        %v4268 = vpack.c.b16 %v3748, %v3740
        %v4269 = vpack.c.b16 %v3749, %v3741
        %v4270 = vpack.c.b16 %v3750, %v3742
        %v4271 = vpack.c.b16 %v3751, %v3743
        %v4272 = vpack.c.b16 %v3752, %v3744
        %v4273 = vpack.c.b16 %v3753, %v3745
        %v4274 = vpack.c.b16 %v3754, %v3746
        %v4275 = vpack.c.b16 %v3755, %v3747
        %v4276 = vpack.c.b16 %v3764, %v3756
        %v4277 = vpack.c.b16 %v3765, %v3757
        %v4278 = vpack.c.b16 %v3766, %v3758
        %v4279 = vpack.c.b16 %v3767, %v3759
        %v4280 = vpack.c.b16 %v3768, %v3760
        %v4281 = vpack.c.b16 %v3769, %v3761
        %v4282 = vpack.c.b16 %v3770, %v3762
        %v4283 = vpack.c.b16 %v3771, %v3763
        %4796 = vmatprep.subr.bf16.mxu0 %v3829
        %4797 = vmatpush1.bf16.msra.mxu0 %v3828
        %4798 = vmatprep.subr.bf16.mxu0 %v3821
        %4799 = vmatpush1.bf16.msra.mxu0 %v3820
        %4800 = vmatprep.subr.bf16.mxu0 %v3813
        %4801 = vmatpush1.bf16.msra.mxu0 %v3812
        %4802 = vmatprep.subr.bf16.mxu0 %v3805
        %4803 = vmatpush1.bf16.msra.mxu0 %v3804
        %4804 = vmatprep.subr.bf16.mxu0 %v3797
        %4805 = vmatpush1.bf16.msra.mxu0 %v3796
        %4806 = vmatprep.subr.bf16.mxu0 %v3789
        %4807 = vmatpush1.bf16.msra.mxu0 %v3788
        %4808 = vmatprep.subr.bf16.mxu0 %v3781
        %4809 = vmatpush1.bf16.msra.mxu0 %v3780
        %4810 = vmatprep.subr.bf16.mxu0 %v3773
        %4811 = vmatpush1.bf16.msra.mxu0 %v3772
        %4812 = vmatprep.subr.bf16.mxu0 %v3893
        %4813 = vmatpush2.bf16.msra.mxu0 %v3892
        %4814 = vmatprep.subr.bf16.mxu0 %v3885
        %4815 = vmatpush2.bf16.msra.mxu0 %v3884
        %4816 = vmatprep.subr.bf16.mxu0 %v3877
        %4817 = vmatpush2.bf16.msra.mxu0 %v3876
        %4818 = vmatprep.subr.bf16.mxu0 %v3869
        %4819 = vmatpush2.bf16.msra.mxu0 %v3868
        %4820 = vmatprep.subr.bf16.mxu0 %v3861
        %4821 = vmatpush2.bf16.msra.mxu0 %v3860
        %4822 = vmatprep.subr.bf16.mxu0 %v3853
        %4823 = vmatpush2.bf16.msra.mxu0 %v3852
        %4824 = vmatprep.subr.bf16.mxu0 %v3845
        %4825 = vmatpush2.bf16.msra.mxu0 %v3844
        %4826 = vmatprep.subr.bf16.mxu0 %v3837
        %4827 = vmatpush2.bf16.msra.mxu0 %v3836
        %4828 = vmatprep.mubr.bf16.mxu0 %v2221
        %4829 = vmatmul.mubr.bf16.gmra.mxu0 %v2220
        %v4830 = vpop.f32.mrf.mxu0
        %v4831 = vadd.f32 0.0, %v4830
        %v4832 = vpop.f32.mrf.mxu0
        %v4833 = vadd.f32 0.0, %v4832
        %v4834 = vpop.f32.mrf.mxu0
        %v4835 = vpop.f32.mrf.mxu0
        %4836 = vdwg.mxu0
        %4837 = vmatprep.subr.bf16.mxu0 %v3957
        %4838 = vmatpush1.bf16.msra.mxu0 %v3956
        %4839 = vmatprep.subr.bf16.mxu0 %v3949
        %4840 = vmatpush1.bf16.msra.mxu0 %v3948
        %4841 = vmatprep.subr.bf16.mxu0 %v3941
        %4842 = vmatpush1.bf16.msra.mxu0 %v3940
        %4843 = vmatprep.subr.bf16.mxu0 %v3933
        %4844 = vmatpush1.bf16.msra.mxu0 %v3932
        %4845 = vmatprep.subr.bf16.mxu0 %v3925
        %4846 = vmatpush1.bf16.msra.mxu0 %v3924
        %4847 = vmatprep.subr.bf16.mxu0 %v3917
        %4848 = vmatpush1.bf16.msra.mxu0 %v3916
        %4849 = vmatprep.subr.bf16.mxu0 %v3909
        %4850 = vmatpush1.bf16.msra.mxu0 %v3908
        %4851 = vmatprep.subr.bf16.mxu0 %v3901
        %4852 = vmatpush1.bf16.msra.mxu0 %v3900
        %4853 = vmatprep.subr.bf16.mxu0 %v4021
        %4854 = vmatpush2.bf16.msra.mxu0 %v4020
        %4855 = vmatprep.subr.bf16.mxu0 %v4013
        %4856 = vmatpush2.bf16.msra.mxu0 %v4012
        %4857 = vmatprep.subr.bf16.mxu0 %v4005
        %4858 = vmatpush2.bf16.msra.mxu0 %v4004
        %4859 = vmatprep.subr.bf16.mxu0 %v3997
        %4860 = vmatpush2.bf16.msra.mxu0 %v3996
        %4861 = vmatprep.subr.bf16.mxu0 %v3989
        %4862 = vmatpush2.bf16.msra.mxu0 %v3988
        %4863 = vmatprep.subr.bf16.mxu0 %v3981
        %4864 = vmatpush2.bf16.msra.mxu0 %v3980
        %4865 = vmatprep.subr.bf16.mxu0 %v3973
        %4866 = vmatpush2.bf16.msra.mxu0 %v3972
        %4867 = vmatprep.subr.bf16.mxu0 %v3965
        %4868 = vmatpush2.bf16.msra.mxu0 %v3964
        %4869 = vmatprep.mubr.bf16.mxu0 %v2223
        %4870 = vmatmul.mubr.bf16.gmra.mxu0 %v2222
        %v4871 = vpop.f32.mrf.mxu0
        %v4872 = vadd.f32 %v4831, %v4871
        %v4873 = vpop.f32.mrf.mxu0
        %v4874 = vadd.f32 %v4833, %v4873
        %v4875 = vpop.f32.mrf.mxu0
        %v4876 = vpop.f32.mrf.mxu0
        %4877 = vdwg.mxu0
        %4878 = vmatprep.subr.bf16.mxu0 %v4085
        %4879 = vmatpush1.bf16.msra.mxu0 %v4084
        %4880 = vmatprep.subr.bf16.mxu0 %v4077
        %4881 = vmatpush1.bf16.msra.mxu0 %v4076
        %4882 = vmatprep.subr.bf16.mxu0 %v4069
        %4883 = vmatpush1.bf16.msra.mxu0 %v4068
        %4884 = vmatprep.subr.bf16.mxu0 %v4061
        %4885 = vmatpush1.bf16.msra.mxu0 %v4060
        %4886 = vmatprep.subr.bf16.mxu0 %v4053
        %4887 = vmatpush1.bf16.msra.mxu0 %v4052
        %4888 = vmatprep.subr.bf16.mxu0 %v4045
        %4889 = vmatpush1.bf16.msra.mxu0 %v4044
        %4890 = vmatprep.subr.bf16.mxu0 %v4037
        %4891 = vmatpush1.bf16.msra.mxu0 %v4036
        %4892 = vmatprep.subr.bf16.mxu0 %v4029
        %4893 = vmatpush1.bf16.msra.mxu0 %v4028
        %4894 = vmatprep.subr.bf16.mxu0 %v4149
        %4895 = vmatpush2.bf16.msra.mxu0 %v4148
        %4896 = vmatprep.subr.bf16.mxu0 %v4141
        %4897 = vmatpush2.bf16.msra.mxu0 %v4140
        %4898 = vmatprep.subr.bf16.mxu0 %v4133
        %4899 = vmatpush2.bf16.msra.mxu0 %v4132
        %4900 = vmatprep.subr.bf16.mxu0 %v4125
        %4901 = vmatpush2.bf16.msra.mxu0 %v4124
        %4902 = vmatprep.subr.bf16.mxu0 %v4117
        %4903 = vmatpush2.bf16.msra.mxu0 %v4116
        %4904 = vmatprep.subr.bf16.mxu0 %v4109
        %4905 = vmatpush2.bf16.msra.mxu0 %v4108
        %4906 = vmatprep.subr.bf16.mxu0 %v4101
        %4907 = vmatpush2.bf16.msra.mxu0 %v4100
        %4908 = vmatprep.subr.bf16.mxu0 %v4093
        %4909 = vmatpush2.bf16.msra.mxu0 %v4092
        %4910 = vmatprep.mubr.bf16.mxu0 %v2225
        %4911 = vmatmul.mubr.bf16.gmra.mxu0 %v2224
        %v4912 = vpop.f32.mrf.mxu0
        %v4913 = vadd.f32 %v4872, %v4912
        %v4914 = vpop.f32.mrf.mxu0
        %v4915 = vadd.f32 %v4874, %v4914
        %v4916 = vpop.f32.mrf.mxu0
        %v4917 = vpop.f32.mrf.mxu0
        %4918 = vdwg.mxu0
        %4919 = vmatprep.subr.bf16.mxu0 %v4213
        %4920 = vmatpush1.bf16.msra.mxu0 %v4212
        %4921 = vmatprep.subr.bf16.mxu0 %v4205
        %4922 = vmatpush1.bf16.msra.mxu0 %v4204
        %4923 = vmatprep.subr.bf16.mxu0 %v4197
        %4924 = vmatpush1.bf16.msra.mxu0 %v4196
        %4925 = vmatprep.subr.bf16.mxu0 %v4189
        %4926 = vmatpush1.bf16.msra.mxu0 %v4188
        %4927 = vmatprep.subr.bf16.mxu0 %v4181
        %4928 = vmatpush1.bf16.msra.mxu0 %v4180
        %4929 = vmatprep.subr.bf16.mxu0 %v4173
        %4930 = vmatpush1.bf16.msra.mxu0 %v4172
        %4931 = vmatprep.subr.bf16.mxu0 %v4165
        %4932 = vmatpush1.bf16.msra.mxu0 %v4164
        %4933 = vmatprep.subr.bf16.mxu0 %v4157
        %4934 = vmatpush1.bf16.msra.mxu0 %v4156
        %4935 = vmatprep.subr.bf16.mxu0 %v4277
        %4936 = vmatpush2.bf16.msra.mxu0 %v4276
        %4937 = vmatprep.subr.bf16.mxu0 %v4269
        %4938 = vmatpush2.bf16.msra.mxu0 %v4268
        %4939 = vmatprep.subr.bf16.mxu0 %v4261
        %4940 = vmatpush2.bf16.msra.mxu0 %v4260
        %4941 = vmatprep.subr.bf16.mxu0 %v4253
        %4942 = vmatpush2.bf16.msra.mxu0 %v4252
        %4943 = vmatprep.subr.bf16.mxu0 %v4245
        %4944 = vmatpush2.bf16.msra.mxu0 %v4244
        %4945 = vmatprep.subr.bf16.mxu0 %v4237
        %4946 = vmatpush2.bf16.msra.mxu0 %v4236
        %4947 = vmatprep.subr.bf16.mxu0 %v4229
        %4948 = vmatpush2.bf16.msra.mxu0 %v4228
        %4949 = vmatprep.subr.bf16.mxu0 %v4221
        %4950 = vmatpush2.bf16.msra.mxu0 %v4220
        %4951 = vmatprep.mubr.bf16.mxu0 %v2227
        %4952 = vmatmul.mubr.bf16.gmra.mxu0 %v2226
        %v4953 = vpop.f32.mrf.mxu0
        %v4954 = vadd.f32 %v4913, %v4953
        %v4955 = vpop.f32.mrf.mxu0
        %v4956 = vadd.f32 %v4915, %v4955
        %v4957 = vpop.f32.mrf.mxu0
        %v4958 = vpop.f32.mrf.mxu0
        %4959 = vdwg.mxu0
        %4960 = vmatprep.subr.bf16.mxu0 %v3831
        %4961 = vmatpush1.bf16.msra.mxu0 %v3830
        %4962 = vmatprep.subr.bf16.mxu0 %v3823
        %4963 = vmatpush1.bf16.msra.mxu0 %v3822
        %4964 = vmatprep.subr.bf16.mxu0 %v3815
        %4965 = vmatpush1.bf16.msra.mxu0 %v3814
        %4966 = vmatprep.subr.bf16.mxu0 %v3807
        %4967 = vmatpush1.bf16.msra.mxu0 %v3806
        %4968 = vmatprep.subr.bf16.mxu0 %v3799
        %4969 = vmatpush1.bf16.msra.mxu0 %v3798
        %4970 = vmatprep.subr.bf16.mxu0 %v3791
        %4971 = vmatpush1.bf16.msra.mxu0 %v3790
        %4972 = vmatprep.subr.bf16.mxu0 %v3783
        %4973 = vmatpush1.bf16.msra.mxu0 %v3782
        %4974 = vmatprep.subr.bf16.mxu0 %v3775
        %4975 = vmatpush1.bf16.msra.mxu0 %v3774
        %4976 = vmatprep.subr.bf16.mxu0 %v3895
        %4977 = vmatpush2.bf16.msra.mxu0 %v3894
        %4978 = vmatprep.subr.bf16.mxu0 %v3887
        %4979 = vmatpush2.bf16.msra.mxu0 %v3886
        %4980 = vmatprep.subr.bf16.mxu0 %v3879
        %4981 = vmatpush2.bf16.msra.mxu0 %v3878
        %4982 = vmatprep.subr.bf16.mxu0 %v3871
        %4983 = vmatpush2.bf16.msra.mxu0 %v3870
        %4984 = vmatprep.subr.bf16.mxu0 %v3863
        %4985 = vmatpush2.bf16.msra.mxu0 %v3862
        %4986 = vmatprep.subr.bf16.mxu0 %v3855
        %4987 = vmatpush2.bf16.msra.mxu0 %v3854
        %4988 = vmatprep.subr.bf16.mxu0 %v3847
        %4989 = vmatpush2.bf16.msra.mxu0 %v3846
        %4990 = vmatprep.subr.bf16.mxu0 %v3839
        %4991 = vmatpush2.bf16.msra.mxu0 %v3838
        %4992 = vmatprep.mubr.bf16.mxu0 %v2221
        %4993 = vmatmul.mubr.bf16.gmra.mxu0 %v2220
        %v4994 = vpop.f32.mrf.mxu0
        %v4995 = vadd.f32 0.0, %v4994
        %v4996 = vpop.f32.mrf.mxu0
        %v4997 = vadd.f32 0.0, %v4996
        %v4998 = vpop.f32.mrf.mxu0
        %v4999 = vpop.f32.mrf.mxu0
        %5000 = vdwg.mxu0
        %5001 = vmatprep.subr.bf16.mxu0 %v3959
        %5002 = vmatpush1.bf16.msra.mxu0 %v3958
        %5003 = vmatprep.subr.bf16.mxu0 %v3951
        %5004 = vmatpush1.bf16.msra.mxu0 %v3950
        %5005 = vmatprep.subr.bf16.mxu0 %v3943
        %5006 = vmatpush1.bf16.msra.mxu0 %v3942
        %5007 = vmatprep.subr.bf16.mxu0 %v3935
        %5008 = vmatpush1.bf16.msra.mxu0 %v3934
        %5009 = vmatprep.subr.bf16.mxu0 %v3927
        %5010 = vmatpush1.bf16.msra.mxu0 %v3926
        %5011 = vmatprep.subr.bf16.mxu0 %v3919
        %5012 = vmatpush1.bf16.msra.mxu0 %v3918
        %5013 = vmatprep.subr.bf16.mxu0 %v3911
        %5014 = vmatpush1.bf16.msra.mxu0 %v3910
        %5015 = vmatprep.subr.bf16.mxu0 %v3903
        %5016 = vmatpush1.bf16.msra.mxu0 %v3902
        %5017 = vmatprep.subr.bf16.mxu0 %v4023
        %5018 = vmatpush2.bf16.msra.mxu0 %v4022
        %5019 = vmatprep.subr.bf16.mxu0 %v4015
        %5020 = vmatpush2.bf16.msra.mxu0 %v4014
        %5021 = vmatprep.subr.bf16.mxu0 %v4007
        %5022 = vmatpush2.bf16.msra.mxu0 %v4006
        %5023 = vmatprep.subr.bf16.mxu0 %v3999
        %5024 = vmatpush2.bf16.msra.mxu0 %v3998
        %5025 = vmatprep.subr.bf16.mxu0 %v3991
        %5026 = vmatpush2.bf16.msra.mxu0 %v3990
        %5027 = vmatprep.subr.bf16.mxu0 %v3983
        %5028 = vmatpush2.bf16.msra.mxu0 %v3982
        %5029 = vmatprep.subr.bf16.mxu0 %v3975
        %5030 = vmatpush2.bf16.msra.mxu0 %v3974
        %5031 = vmatprep.subr.bf16.mxu0 %v3967
        %5032 = vmatpush2.bf16.msra.mxu0 %v3966
        %5033 = vmatprep.mubr.bf16.mxu0 %v2223
        %5034 = vmatmul.mubr.bf16.gmra.mxu0 %v2222
        %v5035 = vpop.f32.mrf.mxu0
        %v5036 = vadd.f32 %v4995, %v5035
        %v5037 = vpop.f32.mrf.mxu0
        %v5038 = vadd.f32 %v4997, %v5037
        %v5039 = vpop.f32.mrf.mxu0
        %v5040 = vpop.f32.mrf.mxu0
        %5041 = vdwg.mxu0
        %5042 = vmatprep.subr.bf16.mxu0 %v4087
        %5043 = vmatpush1.bf16.msra.mxu0 %v4086
        %5044 = vmatprep.subr.bf16.mxu0 %v4079
        %5045 = vmatpush1.bf16.msra.mxu0 %v4078
        %5046 = vmatprep.subr.bf16.mxu0 %v4071
        %5047 = vmatpush1.bf16.msra.mxu0 %v4070
        %5048 = vmatprep.subr.bf16.mxu0 %v4063
        %5049 = vmatpush1.bf16.msra.mxu0 %v4062
        %5050 = vmatprep.subr.bf16.mxu0 %v4055
        %5051 = vmatpush1.bf16.msra.mxu0 %v4054
        %5052 = vmatprep.subr.bf16.mxu0 %v4047
        %5053 = vmatpush1.bf16.msra.mxu0 %v4046
        %5054 = vmatprep.subr.bf16.mxu0 %v4039
        %5055 = vmatpush1.bf16.msra.mxu0 %v4038
        %5056 = vmatprep.subr.bf16.mxu0 %v4031
        %5057 = vmatpush1.bf16.msra.mxu0 %v4030
        %5058 = vmatprep.subr.bf16.mxu0 %v4151
        %5059 = vmatpush2.bf16.msra.mxu0 %v4150
        %5060 = vmatprep.subr.bf16.mxu0 %v4143
        %5061 = vmatpush2.bf16.msra.mxu0 %v4142
        %5062 = vmatprep.subr.bf16.mxu0 %v4135
        %5063 = vmatpush2.bf16.msra.mxu0 %v4134
        %5064 = vmatprep.subr.bf16.mxu0 %v4127
        %5065 = vmatpush2.bf16.msra.mxu0 %v4126
        %5066 = vmatprep.subr.bf16.mxu0 %v4119
        %5067 = vmatpush2.bf16.msra.mxu0 %v4118
        %5068 = vmatprep.subr.bf16.mxu0 %v4111
        %5069 = vmatpush2.bf16.msra.mxu0 %v4110
        %5070 = vmatprep.subr.bf16.mxu0 %v4103
        %5071 = vmatpush2.bf16.msra.mxu0 %v4102
        %5072 = vmatprep.subr.bf16.mxu0 %v4095
        %5073 = vmatpush2.bf16.msra.mxu0 %v4094
        %5074 = vmatprep.mubr.bf16.mxu0 %v2225
        %5075 = vmatmul.mubr.bf16.gmra.mxu0 %v2224
        %v5076 = vpop.f32.mrf.mxu0
        %v5077 = vadd.f32 %v5036, %v5076
        %v5078 = vpop.f32.mrf.mxu0
        %v5079 = vadd.f32 %v5038, %v5078
        %v5080 = vpop.f32.mrf.mxu0
        %v5081 = vpop.f32.mrf.mxu0
        %5082 = vdwg.mxu0
        %5083 = vmatprep.subr.bf16.mxu0 %v4215
        %5084 = vmatpush1.bf16.msra.mxu0 %v4214
        %5085 = vmatprep.subr.bf16.mxu0 %v4207
        %5086 = vmatpush1.bf16.msra.mxu0 %v4206
        %5087 = vmatprep.subr.bf16.mxu0 %v4199
        %5088 = vmatpush1.bf16.msra.mxu0 %v4198
        %5089 = vmatprep.subr.bf16.mxu0 %v4191
        %5090 = vmatpush1.bf16.msra.mxu0 %v4190
        %5091 = vmatprep.subr.bf16.mxu0 %v4183
        %5092 = vmatpush1.bf16.msra.mxu0 %v4182
        %5093 = vmatprep.subr.bf16.mxu0 %v4175
        %5094 = vmatpush1.bf16.msra.mxu0 %v4174
        %5095 = vmatprep.subr.bf16.mxu0 %v4167
        %5096 = vmatpush1.bf16.msra.mxu0 %v4166
        %5097 = vmatprep.subr.bf16.mxu0 %v4159
        %5098 = vmatpush1.bf16.msra.mxu0 %v4158
        %5099 = vmatprep.subr.bf16.mxu0 %v4279
        %5100 = vmatpush2.bf16.msra.mxu0 %v4278
        %5101 = vmatprep.subr.bf16.mxu0 %v4271
        %5102 = vmatpush2.bf16.msra.mxu0 %v4270
        %5103 = vmatprep.subr.bf16.mxu0 %v4263
        %5104 = vmatpush2.bf16.msra.mxu0 %v4262
        %5105 = vmatprep.subr.bf16.mxu0 %v4255
        %5106 = vmatpush2.bf16.msra.mxu0 %v4254
        %5107 = vmatprep.subr.bf16.mxu0 %v4247
        %5108 = vmatpush2.bf16.msra.mxu0 %v4246
        %5109 = vmatprep.subr.bf16.mxu0 %v4239
        %5110 = vmatpush2.bf16.msra.mxu0 %v4238
        %5111 = vmatprep.subr.bf16.mxu0 %v4231
        %5112 = vmatpush2.bf16.msra.mxu0 %v4230
        %5113 = vmatprep.subr.bf16.mxu0 %v4223
        %5114 = vmatpush2.bf16.msra.mxu0 %v4222
        %5115 = vmatprep.mubr.bf16.mxu0 %v2227
        %5116 = vmatmul.mubr.bf16.gmra.mxu0 %v2226
        %v5117 = vpop.f32.mrf.mxu0
        %v5118 = vadd.f32 %v5077, %v5117
        %v5119 = vpop.f32.mrf.mxu0
        %v5120 = vadd.f32 %v5079, %v5119
        %v5121 = vpop.f32.mrf.mxu0
        %v5122 = vpop.f32.mrf.mxu0
        %5123 = vdwg.mxu0
        %5124 = vmatprep.subr.bf16.mxu0 %v3833
        %5125 = vmatpush1.bf16.msra.mxu0 %v3832
        %5126 = vmatprep.subr.bf16.mxu0 %v3825
        %5127 = vmatpush1.bf16.msra.mxu0 %v3824
        %5128 = vmatprep.subr.bf16.mxu0 %v3817
        %5129 = vmatpush1.bf16.msra.mxu0 %v3816
        %5130 = vmatprep.subr.bf16.mxu0 %v3809
        %5131 = vmatpush1.bf16.msra.mxu0 %v3808
        %5132 = vmatprep.subr.bf16.mxu0 %v3801
        %5133 = vmatpush1.bf16.msra.mxu0 %v3800
        %5134 = vmatprep.subr.bf16.mxu0 %v3793
        %5135 = vmatpush1.bf16.msra.mxu0 %v3792
        %5136 = vmatprep.subr.bf16.mxu0 %v3785
        %5137 = vmatpush1.bf16.msra.mxu0 %v3784
        %5138 = vmatprep.subr.bf16.mxu0 %v3777
        %5139 = vmatpush1.bf16.msra.mxu0 %v3776
        %5140 = vmatprep.subr.bf16.mxu0 %v3897
        %5141 = vmatpush2.bf16.msra.mxu0 %v3896
        %5142 = vmatprep.subr.bf16.mxu0 %v3889
        %5143 = vmatpush2.bf16.msra.mxu0 %v3888
        %5144 = vmatprep.subr.bf16.mxu0 %v3881
        %5145 = vmatpush2.bf16.msra.mxu0 %v3880
        %5146 = vmatprep.subr.bf16.mxu0 %v3873
        %5147 = vmatpush2.bf16.msra.mxu0 %v3872
        %5148 = vmatprep.subr.bf16.mxu0 %v3865
        %5149 = vmatpush2.bf16.msra.mxu0 %v3864
        %5150 = vmatprep.subr.bf16.mxu0 %v3857
        %5151 = vmatpush2.bf16.msra.mxu0 %v3856
        %5152 = vmatprep.subr.bf16.mxu0 %v3849
        %5153 = vmatpush2.bf16.msra.mxu0 %v3848
        %5154 = vmatprep.subr.bf16.mxu0 %v3841
        %5155 = vmatpush2.bf16.msra.mxu0 %v3840
        %5156 = vmatprep.mubr.bf16.mxu0 %v2221
        %5157 = vmatmul.mubr.bf16.gmra.mxu0 %v2220
        %v5158 = vpop.f32.mrf.mxu0
        %v5159 = vadd.f32 0.0, %v5158
        %v5160 = vpop.f32.mrf.mxu0
        %v5161 = vadd.f32 0.0, %v5160
        %v5162 = vpop.f32.mrf.mxu0
        %v5163 = vpop.f32.mrf.mxu0
        %5164 = vdwg.mxu0
        %5165 = vmatprep.subr.bf16.mxu0 %v3961
        %5166 = vmatpush1.bf16.msra.mxu0 %v3960
        %5167 = vmatprep.subr.bf16.mxu0 %v3953
        %5168 = vmatpush1.bf16.msra.mxu0 %v3952
        %5169 = vmatprep.subr.bf16.mxu0 %v3945
        %5170 = vmatpush1.bf16.msra.mxu0 %v3944
        %5171 = vmatprep.subr.bf16.mxu0 %v3937
        %5172 = vmatpush1.bf16.msra.mxu0 %v3936
        %5173 = vmatprep.subr.bf16.mxu0 %v3929
        %5174 = vmatpush1.bf16.msra.mxu0 %v3928
        %5175 = vmatprep.subr.bf16.mxu0 %v3921
        %5176 = vmatpush1.bf16.msra.mxu0 %v3920
        %5177 = vmatprep.subr.bf16.mxu0 %v3913
        %5178 = vmatpush1.bf16.msra.mxu0 %v3912
        %5179 = vmatprep.subr.bf16.mxu0 %v3905
        %5180 = vmatpush1.bf16.msra.mxu0 %v3904
        %5181 = vmatprep.subr.bf16.mxu0 %v4025
        %5182 = vmatpush2.bf16.msra.mxu0 %v4024
        %5183 = vmatprep.subr.bf16.mxu0 %v4017
        %5184 = vmatpush2.bf16.msra.mxu0 %v4016
        %5185 = vmatprep.subr.bf16.mxu0 %v4009
        %5186 = vmatpush2.bf16.msra.mxu0 %v4008
        %5187 = vmatprep.subr.bf16.mxu0 %v4001
        %5188 = vmatpush2.bf16.msra.mxu0 %v4000
        %5189 = vmatprep.subr.bf16.mxu0 %v3993
        %5190 = vmatpush2.bf16.msra.mxu0 %v3992
        %5191 = vmatprep.subr.bf16.mxu0 %v3985
        %5192 = vmatpush2.bf16.msra.mxu0 %v3984
        %5193 = vmatprep.subr.bf16.mxu0 %v3977
        %5194 = vmatpush2.bf16.msra.mxu0 %v3976
        %5195 = vmatprep.subr.bf16.mxu0 %v3969
        %5196 = vmatpush2.bf16.msra.mxu0 %v3968
        %5197 = vmatprep.mubr.bf16.mxu0 %v2223
        %5198 = vmatmul.mubr.bf16.gmra.mxu0 %v2222
        %v5199 = vpop.f32.mrf.mxu0
        %v5200 = vadd.f32 %v5159, %v5199
        %v5201 = vpop.f32.mrf.mxu0
        %v5202 = vadd.f32 %v5161, %v5201
        %v5203 = vpop.f32.mrf.mxu0
        %v5204 = vpop.f32.mrf.mxu0
        %5205 = vdwg.mxu0
        %5206 = vmatprep.subr.bf16.mxu0 %v4089
        %5207 = vmatpush1.bf16.msra.mxu0 %v4088
        %5208 = vmatprep.subr.bf16.mxu0 %v4081
        %5209 = vmatpush1.bf16.msra.mxu0 %v4080
        %5210 = vmatprep.subr.bf16.mxu0 %v4073
        %5211 = vmatpush1.bf16.msra.mxu0 %v4072
        %5212 = vmatprep.subr.bf16.mxu0 %v4065
        %5213 = vmatpush1.bf16.msra.mxu0 %v4064
        %5214 = vmatprep.subr.bf16.mxu0 %v4057
        %5215 = vmatpush1.bf16.msra.mxu0 %v4056
        %5216 = vmatprep.subr.bf16.mxu0 %v4049
        %5217 = vmatpush1.bf16.msra.mxu0 %v4048
        %5218 = vmatprep.subr.bf16.mxu0 %v4041
        %5219 = vmatpush1.bf16.msra.mxu0 %v4040
        %5220 = vmatprep.subr.bf16.mxu0 %v4033
        %5221 = vmatpush1.bf16.msra.mxu0 %v4032
        %5222 = vmatprep.subr.bf16.mxu0 %v4153
        %5223 = vmatpush2.bf16.msra.mxu0 %v4152
        %5224 = vmatprep.subr.bf16.mxu0 %v4145
        %5225 = vmatpush2.bf16.msra.mxu0 %v4144
        %5226 = vmatprep.subr.bf16.mxu0 %v4137
        %5227 = vmatpush2.bf16.msra.mxu0 %v4136
        %5228 = vmatprep.subr.bf16.mxu0 %v4129
        %5229 = vmatpush2.bf16.msra.mxu0 %v4128
        %5230 = vmatprep.subr.bf16.mxu0 %v4121
        %5231 = vmatpush2.bf16.msra.mxu0 %v4120
        %5232 = vmatprep.subr.bf16.mxu0 %v4113
        %5233 = vmatpush2.bf16.msra.mxu0 %v4112
        %5234 = vmatprep.subr.bf16.mxu0 %v4105
        %5235 = vmatpush2.bf16.msra.mxu0 %v4104
        %5236 = vmatprep.subr.bf16.mxu0 %v4097
        %5237 = vmatpush2.bf16.msra.mxu0 %v4096
        %5238 = vmatprep.mubr.bf16.mxu0 %v2225
        %5239 = vmatmul.mubr.bf16.gmra.mxu0 %v2224
        %v5240 = vpop.f32.mrf.mxu0
        %v5241 = vadd.f32 %v5200, %v5240
        %v5242 = vpop.f32.mrf.mxu0
        %v5243 = vadd.f32 %v5202, %v5242
        %v5244 = vpop.f32.mrf.mxu0
        %v5245 = vpop.f32.mrf.mxu0
        %5246 = vdwg.mxu0
        %5247 = vmatprep.subr.bf16.mxu0 %v4217
        %5248 = vmatpush1.bf16.msra.mxu0 %v4216
        %5249 = vmatprep.subr.bf16.mxu0 %v4209
        %5250 = vmatpush1.bf16.msra.mxu0 %v4208
        %5251 = vmatprep.subr.bf16.mxu0 %v4201
        %5252 = vmatpush1.bf16.msra.mxu0 %v4200
        %5253 = vmatprep.subr.bf16.mxu0 %v4193
        %5254 = vmatpush1.bf16.msra.mxu0 %v4192
        %5255 = vmatprep.subr.bf16.mxu0 %v4185
        %5256 = vmatpush1.bf16.msra.mxu0 %v4184
        %5257 = vmatprep.subr.bf16.mxu0 %v4177
        %5258 = vmatpush1.bf16.msra.mxu0 %v4176
        %5259 = vmatprep.subr.bf16.mxu0 %v4169
        %5260 = vmatpush1.bf16.msra.mxu0 %v4168
        %5261 = vmatprep.subr.bf16.mxu0 %v4161
        %5262 = vmatpush1.bf16.msra.mxu0 %v4160
        %5263 = vmatprep.subr.bf16.mxu0 %v4281
        %5264 = vmatpush2.bf16.msra.mxu0 %v4280
        %5265 = vmatprep.subr.bf16.mxu0 %v4273
        %5266 = vmatpush2.bf16.msra.mxu0 %v4272
        %5267 = vmatprep.subr.bf16.mxu0 %v4265
        %5268 = vmatpush2.bf16.msra.mxu0 %v4264
        %5269 = vmatprep.subr.bf16.mxu0 %v4257
        %5270 = vmatpush2.bf16.msra.mxu0 %v4256
        %5271 = vmatprep.subr.bf16.mxu0 %v4249
        %5272 = vmatpush2.bf16.msra.mxu0 %v4248
        %5273 = vmatprep.subr.bf16.mxu0 %v4241
        %5274 = vmatpush2.bf16.msra.mxu0 %v4240
        %5275 = vmatprep.subr.bf16.mxu0 %v4233
        %5276 = vmatpush2.bf16.msra.mxu0 %v4232
        %5277 = vmatprep.subr.bf16.mxu0 %v4225
        %5278 = vmatpush2.bf16.msra.mxu0 %v4224
        %5279 = vmatprep.mubr.bf16.mxu0 %v2227
        %5280 = vmatmul.mubr.bf16.gmra.mxu0 %v2226
        %v5281 = vpop.f32.mrf.mxu0
        %v5282 = vadd.f32 %v5241, %v5281
        %v5283 = vpop.f32.mrf.mxu0
        %v5284 = vadd.f32 %v5243, %v5283
        %v5285 = vpop.f32.mrf.mxu0
        %v5286 = vpop.f32.mrf.mxu0
        %5287 = vdwg.mxu0
        %5288 = vmatprep.subr.bf16.mxu0 %v3835
        %5289 = vmatpush1.bf16.msra.mxu0 %v3834
        %5290 = vmatprep.subr.bf16.mxu0 %v3827
        %5291 = vmatpush1.bf16.msra.mxu0 %v3826
        %5292 = vmatprep.subr.bf16.mxu0 %v3819
        %5293 = vmatpush1.bf16.msra.mxu0 %v3818
        %5294 = vmatprep.subr.bf16.mxu0 %v3811
        %5295 = vmatpush1.bf16.msra.mxu0 %v3810
        %5296 = vmatprep.subr.bf16.mxu0 %v3803
        %5297 = vmatpush1.bf16.msra.mxu0 %v3802
        %5298 = vmatprep.subr.bf16.mxu0 %v3795
        %5299 = vmatpush1.bf16.msra.mxu0 %v3794
        %5300 = vmatprep.subr.bf16.mxu0 %v3787
        %5301 = vmatpush1.bf16.msra.mxu0 %v3786
        %5302 = vmatprep.subr.bf16.mxu0 %v3779
        %5303 = vmatpush1.bf16.msra.mxu0 %v3778
        %5304 = vmatprep.subr.bf16.mxu0 %v3899
        %5305 = vmatpush2.bf16.msra.mxu0 %v3898
        %5306 = vmatprep.subr.bf16.mxu0 %v3891
        %5307 = vmatpush2.bf16.msra.mxu0 %v3890
        %5308 = vmatprep.subr.bf16.mxu0 %v3883
        %5309 = vmatpush2.bf16.msra.mxu0 %v3882
        %5310 = vmatprep.subr.bf16.mxu0 %v3875
        %5311 = vmatpush2.bf16.msra.mxu0 %v3874
        %5312 = vmatprep.subr.bf16.mxu0 %v3867
        %5313 = vmatpush2.bf16.msra.mxu0 %v3866
        %5314 = vmatprep.subr.bf16.mxu0 %v3859
        %5315 = vmatpush2.bf16.msra.mxu0 %v3858
        %5316 = vmatprep.subr.bf16.mxu0 %v3851
        %5317 = vmatpush2.bf16.msra.mxu0 %v3850
        %5318 = vmatprep.subr.bf16.mxu0 %v3843
        %5319 = vmatpush2.bf16.msra.mxu0 %v3842
        %5320 = vmatprep.mubr.bf16.mxu0 %v2221
        %5321 = vmatmul.mubr.bf16.gmra.mxu0 %v2220
        %v5322 = vpop.f32.mrf.mxu0
        %v5323 = vadd.f32 0.0, %v5322
        %v5324 = vpop.f32.mrf.mxu0
        %v5325 = vadd.f32 0.0, %v5324
        %v5326 = vpop.f32.mrf.mxu0
        %v5327 = vpop.f32.mrf.mxu0
        %5328 = vdwg.mxu0
        %5329 = vmatprep.subr.bf16.mxu0 %v3963
        %5330 = vmatpush1.bf16.msra.mxu0 %v3962
        %5331 = vmatprep.subr.bf16.mxu0 %v3955
        %5332 = vmatpush1.bf16.msra.mxu0 %v3954
        %5333 = vmatprep.subr.bf16.mxu0 %v3947
        %5334 = vmatpush1.bf16.msra.mxu0 %v3946
        %5335 = vmatprep.subr.bf16.mxu0 %v3939
        %5336 = vmatpush1.bf16.msra.mxu0 %v3938
        %5337 = vmatprep.subr.bf16.mxu0 %v3931
        %5338 = vmatpush1.bf16.msra.mxu0 %v3930
        %5339 = vmatprep.subr.bf16.mxu0 %v3923
        %5340 = vmatpush1.bf16.msra.mxu0 %v3922
        %5341 = vmatprep.subr.bf16.mxu0 %v3915
        %5342 = vmatpush1.bf16.msra.mxu0 %v3914
        %5343 = vmatprep.subr.bf16.mxu0 %v3907
        %5344 = vmatpush1.bf16.msra.mxu0 %v3906
        %5345 = vmatprep.subr.bf16.mxu0 %v4027
        %5346 = vmatpush2.bf16.msra.mxu0 %v4026
        %5347 = vmatprep.subr.bf16.mxu0 %v4019
        %5348 = vmatpush2.bf16.msra.mxu0 %v4018
        %5349 = vmatprep.subr.bf16.mxu0 %v4011
        %5350 = vmatpush2.bf16.msra.mxu0 %v4010
        %5351 = vmatprep.subr.bf16.mxu0 %v4003
        %5352 = vmatpush2.bf16.msra.mxu0 %v4002
        %5353 = vmatprep.subr.bf16.mxu0 %v3995
        %5354 = vmatpush2.bf16.msra.mxu0 %v3994
        %5355 = vmatprep.subr.bf16.mxu0 %v3987
        %5356 = vmatpush2.bf16.msra.mxu0 %v3986
        %5357 = vmatprep.subr.bf16.mxu0 %v3979
        %5358 = vmatpush2.bf16.msra.mxu0 %v3978
        %5359 = vmatprep.subr.bf16.mxu0 %v3971
        %5360 = vmatpush2.bf16.msra.mxu0 %v3970
        %5361 = vmatprep.mubr.bf16.mxu0 %v2223
        %5362 = vmatmul.mubr.bf16.gmra.mxu0 %v2222
        %v5363 = vpop.f32.mrf.mxu0
        %v5364 = vadd.f32 %v5323, %v5363
        %v5365 = vpop.f32.mrf.mxu0
        %v5366 = vadd.f32 %v5325, %v5365
        %v5367 = vpop.f32.mrf.mxu0
        %v5368 = vpop.f32.mrf.mxu0
        %5369 = vdwg.mxu0
        %5370 = vmatprep.subr.bf16.mxu0 %v4091
        %5371 = vmatpush1.bf16.msra.mxu0 %v4090
        %5372 = vmatprep.subr.bf16.mxu0 %v4083
        %5373 = vmatpush1.bf16.msra.mxu0 %v4082
        %5374 = vmatprep.subr.bf16.mxu0 %v4075
        %5375 = vmatpush1.bf16.msra.mxu0 %v4074
        %5376 = vmatprep.subr.bf16.mxu0 %v4067
        %5377 = vmatpush1.bf16.msra.mxu0 %v4066
        %5378 = vmatprep.subr.bf16.mxu0 %v4059
        %5379 = vmatpush1.bf16.msra.mxu0 %v4058
        %5380 = vmatprep.subr.bf16.mxu0 %v4051
        %5381 = vmatpush1.bf16.msra.mxu0 %v4050
        %5382 = vmatprep.subr.bf16.mxu0 %v4043
        %5383 = vmatpush1.bf16.msra.mxu0 %v4042
        %5384 = vmatprep.subr.bf16.mxu0 %v4035
        %5385 = vmatpush1.bf16.msra.mxu0 %v4034
        %5386 = vmatprep.subr.bf16.mxu0 %v4155
        %5387 = vmatpush2.bf16.msra.mxu0 %v4154
        %5388 = vmatprep.subr.bf16.mxu0 %v4147
        %5389 = vmatpush2.bf16.msra.mxu0 %v4146
        %5390 = vmatprep.subr.bf16.mxu0 %v4139
        %5391 = vmatpush2.bf16.msra.mxu0 %v4138
        %5392 = vmatprep.subr.bf16.mxu0 %v4131
        %5393 = vmatpush2.bf16.msra.mxu0 %v4130
        %5394 = vmatprep.subr.bf16.mxu0 %v4123
        %5395 = vmatpush2.bf16.msra.mxu0 %v4122
        %5396 = vmatprep.subr.bf16.mxu0 %v4115
        %5397 = vmatpush2.bf16.msra.mxu0 %v4114
        %5398 = vmatprep.subr.bf16.mxu0 %v4107
        %5399 = vmatpush2.bf16.msra.mxu0 %v4106
        %5400 = vmatprep.subr.bf16.mxu0 %v4099
        %5401 = vmatpush2.bf16.msra.mxu0 %v4098
        %5402 = vmatprep.mubr.bf16.mxu0 %v2225
        %5403 = vmatmul.mubr.bf16.gmra.mxu0 %v2224
        %v5404 = vpop.f32.mrf.mxu0
        %v5405 = vadd.f32 %v5364, %v5404
        %v5406 = vpop.f32.mrf.mxu0
        %v5407 = vadd.f32 %v5366, %v5406
        %v5408 = vpop.f32.mrf.mxu0
        %v5409 = vpop.f32.mrf.mxu0
        %5410 = vdwg.mxu0
        %5411 = vmatprep.subr.bf16.mxu0 %v4219
        %5412 = vmatpush1.bf16.msra.mxu0 %v4218
        %5413 = vmatprep.subr.bf16.mxu0 %v4211
        %5414 = vmatpush1.bf16.msra.mxu0 %v4210
        %5415 = vmatprep.subr.bf16.mxu0 %v4203
        %5416 = vmatpush1.bf16.msra.mxu0 %v4202
        %5417 = vmatprep.subr.bf16.mxu0 %v4195
        %5418 = vmatpush1.bf16.msra.mxu0 %v4194
        %5419 = vmatprep.subr.bf16.mxu0 %v4187
        %5420 = vmatpush1.bf16.msra.mxu0 %v4186
        %5421 = vmatprep.subr.bf16.mxu0 %v4179
        %5422 = vmatpush1.bf16.msra.mxu0 %v4178
        %5423 = vmatprep.subr.bf16.mxu0 %v4171
        %5424 = vmatpush1.bf16.msra.mxu0 %v4170
        %5425 = vmatprep.subr.bf16.mxu0 %v4163
        %5426 = vmatpush1.bf16.msra.mxu0 %v4162
        %5427 = vmatprep.subr.bf16.mxu0 %v4283
        %5428 = vmatpush2.bf16.msra.mxu0 %v4282
        %5429 = vmatprep.subr.bf16.mxu0 %v4275
        %5430 = vmatpush2.bf16.msra.mxu0 %v4274
        %5431 = vmatprep.subr.bf16.mxu0 %v4267
        %5432 = vmatpush2.bf16.msra.mxu0 %v4266
        %5433 = vmatprep.subr.bf16.mxu0 %v4259
        %5434 = vmatpush2.bf16.msra.mxu0 %v4258
        %5435 = vmatprep.subr.bf16.mxu0 %v4251
        %5436 = vmatpush2.bf16.msra.mxu0 %v4250
        %5437 = vmatprep.subr.bf16.mxu0 %v4243
        %5438 = vmatpush2.bf16.msra.mxu0 %v4242
        %5439 = vmatprep.subr.bf16.mxu0 %v4235
        %5440 = vmatpush2.bf16.msra.mxu0 %v4234
        %5441 = vmatprep.subr.bf16.mxu0 %v4227
        %5442 = vmatpush2.bf16.msra.mxu0 %v4226
        %5443 = vmatprep.mubr.bf16.mxu0 %v2227
        %5444 = vmatmul.mubr.bf16.gmra.mxu0 %v2226
        %v5445 = vpop.f32.mrf.mxu0
        %v5446 = vadd.f32 %v5405, %v5445
        %v5447 = vpop.f32.mrf.mxu0
        %v5448 = vadd.f32 %v5407, %v5447
        %v5449 = vpop.f32.mrf.mxu0
        %v5450 = vpop.f32.mrf.mxu0
        %5451 = vdwg.mxu0
        %v5452 = vld [vmem:[#allocation3] sm:$0xff]
        %v5453 = vld [vmem:[%s1299] sm:$0xff]
        %v5455 = vlaneseq
        %v5456 = vshrl.u32 %v5455, 7
        %v5457 = vsub.s32 0, %v5456
        %v5458 = vrot.slane %v5453, %v5457
        %v5459 = vlaneseq
        %v5460 = vshrl.u32 %v5459, 7
        %v5461 = vsub.s32 1, %v5460
        %v5462 = vrot.slane %v5453, %v5461
        %v5463 = vlaneseq
        %v5464 = vshrl.u32 %v5463, 7
        %v5465 = vsub.s32 2, %v5464
        %v5466 = vrot.slane %v5453, %v5465
        %v5467 = vlaneseq
        %v5468 = vshrl.u32 %v5467, 7
        %v5469 = vsub.s32 3, %v5468
        %v5470 = vrot.slane %v5453, %v5469
        %v5471 = vlaneseq
        %v5472 = vshrl.u32 %v5471, 7
        %v5473 = vsub.s32 4, %v5472
        %v5474 = vrot.slane %v5453, %v5473
        %v5475 = vlaneseq
        %v5476 = vshrl.u32 %v5475, 7
        %v5477 = vsub.s32 5, %v5476
        %v5478 = vrot.slane %v5453, %v5477
        %v5479 = vlaneseq
        %v5480 = vshrl.u32 %v5479, 7
        %v5481 = vsub.s32 6, %v5480
        %v5482 = vrot.slane %v5453, %v5481
        %v5483 = vlaneseq
        %v5484 = vshrl.u32 %v5483, 7
        %v5485 = vsub.s32 7, %v5484
        %v5486 = vrot.slane %v5453, %v5485
        %v5495 = vmul.f32 %v4954, %v5458
        %v5496 = vmul.f32 %v4956, %v5462
        %v5497 = vmul.f32 %v5118, %v5466
        %v5498 = vmul.f32 %v5120, %v5470
        %v5499 = vmul.f32 %v5282, %v5474
        %v5500 = vmul.f32 %v5284, %v5478
        %v5501 = vmul.f32 %v5446, %v5482
        %v5502 = vmul.f32 %v5448, %v5486
        %v5503 = vadd.f32 %v5495, %v5496
        %v5504 = vadd.f32 %v5503, %v5497
        %v5505 = vadd.f32 %v5504, %v5498
        %v5506 = vadd.f32 %v5505, %v5499
        %v5507 = vadd.f32 %v5506, %v5500
        %v5508 = vadd.f32 %v5507, %v5501
        %v5509 = vadd.f32 %v5508, %v5502
        %5510 = vadd.xlane.f32.xlu0 %v5509
        %v5511 = vpop.xlane.xlu0 %5510
        %v5512 = vadd.f32 %v5452, %v5511
        %vm5513 = vcmask 7168
        %5514 = vst.msk [vmem:[#allocation3] sm:$0xff] %vm5513, %v5512
        %p5515 = scmp.eq.s32.totalorder %s19, 1
        // Predicated region
        $region72: #{critic_forward.1} parent=62 // pred_check
          %p5516 = pneg %p5515
        $region73: #{critic_forward.1} parent=62 // pred_check_branch
          %5518 = sbr.rel (%p5516) target = $region75
        $region74: #{critic_forward.1} parent=62 // pred_region
          %v5519 = vld [vmem:[#allocation3] sm:$0xff]
          %v5520 = vld [vmem:[#allocation4] sm:$0x1]
          %v5522 = vlaneseq
          %v5523 = vshrl.u32 %v5522, 7
          %v5524 = vsub.s32 0, %v5523
          %v5525 = vrot.slane %v5520, %v5524
          %v5527 = vadd.f32 %v5519, %v5525
          %5528 = vst.msk [vmem:[%s6] sm:$0xff] %vm5513, %v5527
        $region75: #{critic_forward.1} parent=62 // pred_fallthru
          _
        // Predicated region
        $region76: #{critic_forward.1} parent=62 // pred_check
          %p5529 = pneg %p168
        $region77: #{critic_forward.1} parent=62 // pred_check_branch
          %5531 = sbr.rel (%p5529) target = $region79
        $region78: #{critic_forward.1} parent=62 // pred_region
          _
        $region79: #{critic_forward.1} parent=62 // pred_fallthru
          _
        // Predicated region
        $region80: #{critic_forward.1} parent=62 // pred_check
          %p5532 = pneg %p168
        $region81: #{critic_forward.1} parent=62 // pred_check_branch
          %5534 = sbr.rel (%p5532) target = $region83
        $region82: #{critic_forward.1} parent=62 // pred_region
          _
        $region83: #{critic_forward.1} parent=62 // pred_fallthru
          _
      $region63: #{critic_forward.1} parent=5 // pred_fallthru
        _
      %p5535 = scmp.le.s32.totalorder 2, %s14
      // Predicated region
      $region84: #{critic_forward.1} parent=5 // pred_check
        %p5536 = pneg %p5535
      $region85: #{critic_forward.1} parent=5 // pred_check_branch
        %5538 = sbr.rel (%p5536) target = $region87
      $region86: #{critic_forward.1} parent=5 // pred_region
        %s5539 = ssub.s32 %s14, 2
      $region87: #{critic_forward.1} parent=5 // pred_fallthru
        _
    $region6: #{critic_forward.1} parent=1 // loop_footer
      %s18 = sadd.s32 1, %s14
    $region7: #{critic_forward.1} parent=1 // loop_footer_branch
      %13 = sbr.rel target = $region3
    $region8: #{critic_forward.1} parent=1 // loop_exit
      _

</llo_original>
